<compile_context>
chip_gen: v7x
topology: tpu7x:2x2x1
jax: 0.10.0
libtpu: 0.0.40
codegen_flags: <defaults>
</compile_context>

<pallas_src>
import functools

import jax
import jax.numpy as jnp
from jax.experimental import pallas as pl
from jax.experimental.pallas import tpu as pltpu


# ------------------------------------------------------------------- kernel --

def _tmha_kernel(x_ref, wqkv_ref, wo_ref, bo_ref, o_ref, qkv_ref, *,
                 heads, n_nodes, t_len, compute_dtype):
    """Fused temporal MHA for one batch element.

    x_ref    : (1, N*T, C)       input activations (row index = n*T + t)
    wqkv_ref : (C, 3C)           [W_Q * 1/sqrt(d_k) | W_K | W_V]   (VMEM-resident)
    wo_ref   : (heads, hd, C)    fc_out weight, head-major rows     (VMEM-resident)
    bo_ref   : (1, C)            fc_out bias                        (VMEM-resident)
    o_ref    : (1, N*T, C)       output
    qkv_ref  : (N, T, 3C)        VMEM scratch holding the fused QKV projection
    """
    c = wqkv_ref.shape[0]
    hd = c // heads
    nt = n_nodes * t_len

    x2 = x_ref[0]                                             # (NT, C)

    # Single fused QKV projection on the MXU (1/sqrt(d_k) already folded into W_Q).
    qkv = jnp.dot(x2.astype(compute_dtype),
                  wqkv_ref[...].astype(compute_dtype),
                  preferred_element_type=jnp.float32)         # (NT, 3C) f32
    qkv_ref[...] = qkv.reshape(n_nodes, t_len, 3 * c)         # leading-dim split only

    # fc_out bias folded into the accumulator init.
    acc = jnp.broadcast_to(bo_ref[...], (nt, c)).astype(jnp.float32)

    for h in range(heads):                                    # small head count, unrolled
        q = qkv_ref[:, :, h * hd:(h + 1) * hd]                # (N, T, hd)
        k = qkv_ref[:, :, c + h * hd: c + (h + 1) * hd]       # (N, T, hd)
        v = qkv_ref[:, :, 2 * c + h * hd: 2 * c + (h + 1) * hd]

        # scores[n, t, s] = sum_d Q[n,t,d] K[n,s,d]
        s = jnp.einsum("ntd,nsd->nts",
                       q.astype(compute_dtype), k.astype(compute_dtype),
                       preferred_element_type=jnp.float32)    # (N, T, T)
        s = s - jnp.max(s, axis=-1, keepdims=True)            # stable softmax
        e = jnp.exp(s)
        denom = jnp.sum(e, axis=-1, keepdims=True)
        attn = e * pl.reciprocal(denom, approx=True)          # EUP reciprocal (free slot)

        ctx = jnp.einsum("nts,nsd->ntd",
                         attn.astype(compute_dtype), v.astype(compute_dtype),
                         preferred_element_type=jnp.float32)  # (N, T, hd)

        # Output projection folded into the head loop:
        #   out = bias + sum_h ctx_h @ W_O[h*hd:(h+1)*hd, :]
        acc = acc + jnp.dot(ctx.reshape(nt, hd).astype(compute_dtype),
                            wo_ref[h].astype(compute_dtype),
                            preferred_element_type=jnp.float32)

    # Final (NT, C) store.  C=32 < 128 lanes -> masked store, but relaying out to a
    # (.., 128)-wide slab in-kernel would cost more than it saves at this size.
    o_ref[0] = acc.astype(o_ref.dtype)


# ------------------------------------------------------------------ wrapper --

def t_multihead_attention(x, wq, wk, wv, wo, bo, heads,
                          compute_dtype=jnp.float32):
    """TMultiHeadAttention.forward, self-attention case
    (input_Q = input_K = input_V = x, temporal_n_mask = None).

    Weights are stored in (in, out) layout: y = x @ W (+ b), i.e. torch Linear weight
    transposed.  Set compute_dtype=jnp.bfloat16 for bf16 MXU operands with f32
    accumulation (faster on v5e/v6e, slightly lower precision).
    """
    B, N, T, C = x.shape
    assert C % heads == 0
    hd = C // heads
    scale = 1.0 / float(hd) ** 0.5

    # Fold 1/sqrt(d_k) into W_Q and fuse the three projections into one (C, 3C) matmul.
    wqkv = jnp.concatenate([wq * scale, wk, wv], axis=1)      # (C, 3C)
    wo_h = wo.reshape(heads, hd, C)                           # row h*hd+d -> wo_h[h, d, :]
    x2 = x.reshape(B, N * T, C)

    kernel = functools.partial(_tmha_kernel, heads=heads, n_nodes=N, t_len=T,
                               compute_dtype=compute_dtype)

    out = pl.pallas_call(
        kernel,
        grid=(B,),
        in_specs=[
            pl.BlockSpec((1, N * T, C), lambda b: (b, 0, 0)),    # activations, per batch
            pl.BlockSpec((C, 3 * C), lambda b: (0, 0)),          # fused QKV weight: resident
            pl.BlockSpec((heads, hd, C), lambda b: (0, 0, 0)),   # fc_out weight: resident
            pl.BlockSpec((1, C), lambda b: (0, 0)),              # fc_out bias: resident
        ],
        out_specs=pl.BlockSpec((1, N * T, C), lambda b: (b, 0, 0)),
        out_shape=jax.ShapeDtypeStruct((B, N * T, C), jnp.float32),
        scratch_shapes=[pltpu.VMEM((N, T, 3 * C), jnp.float32)],
        compiler_params=pltpu.CompilerParams(
            dimension_semantics=("parallel",)),                  # v7x: batch over 2 TCs
    )(x2, wqkv, wo_h, bo.reshape(1, C))

    return out.reshape(B, N, T, C)


# ---------------------------------------------------------- pure-JAX reference --

def t_multihead_attention_ref(x, wq, wk, wv, wo, bo, heads):
    """Direct transcription of the PyTorch forward (mask=None) for validation."""
    B, N, T, C = x.shape
    hd = C // heads

    def proj(w):
        y = x.reshape(-1, C) @ w
        return y.reshape(B, N, T, heads, hd).transpose(0, 3, 1, 2, 4)  # (B,H,N,T,hd)

    Q, K, V = proj(wq), proj(wk), proj(wv)
    scores = jnp.einsum("bhntd,bhnsd->bhnts", Q, K) / jnp.sqrt(jnp.float32(hd))
    attn = jax.nn.softmax(scores, axis=-1)
    ctx = jnp.einsum("bhnts,bhnsd->bhntd", attn, V)
    ctx = ctx.transpose(0, 2, 3, 1, 4).reshape(B, N, T, C)             # (B,N,T,C)
    return ctx @ wo + bo


# --------------------------------------------------------------------- main --

if __name__ == "__main__":
    B, N, T, C = 2, 5, 8, 32          # (batch, nodes, time, embed)
    heads = 4

    key = jax.random.PRNGKey(0)
    kx, kq, kk, kv, ko, kb = jax.random.split(key, 6)
    x = jax.random.normal(kx, (B, N, T, C), jnp.float32)
    wq = 0.05 * jax.random.normal(kq, (C, C), jnp.float32)
    wk = 0.05 * jax.random.normal(kk, (C, C), jnp.float32)
    wv = 0.05 * jax.random.normal(kv, (C, C), jnp.float32)
    wo = 0.05 * jax.random.normal(ko, (C, C), jnp.float32)
    bo = 0.05 * jax.random.normal(kb, (C,), jnp.float32)

    fwd = jax.jit(functools.partial(t_multihead_attention, heads=heads))
    out = fwd(x, wq, wk, wv, wo, bo)
    jax.block_until_ready(out)

    ref = t_multihead_attention_ref(x, wq, wk, wv, wo, bo, heads)
    assert out.shape == (B, N, T, C)
    err = float(jnp.max(jnp.abs(out - ref)))
    assert jnp.allclose(out, ref, rtol=1e-2, atol=1e-2), f"max abs err = {err}"

    print("KERNEL_OK")
</pallas_src>

<mosaic_0001>
module attributes {stable_mosaic.version = 11 : i64} {
  func.func @_tmha_kernel(%arg0: i32, %arg1: memref<1x40x32xf32, #tpu.memory_space<vmem>>, %arg2: memref<32x96xf32, #tpu.memory_space<vmem>>, %arg3: memref<4x8x32xf32, #tpu.memory_space<vmem>>, %arg4: memref<1x32xf32, #tpu.memory_space<vmem>>, %arg5: memref<1x40x32xf32, #tpu.memory_space<vmem>>, %arg6: memref<5x8x96xf32, #tpu.memory_space<vmem>>) attributes {dimension_semantics = [#tpu.dimension_semantics<parallel>], iteration_bounds = array<i64: 2>, scalar_prefetch = 0 : i64, scratch_operands = 1 : i64, tpu.core_type = #tpu.core_type<tc>, window_params = [{transform_indices = @transform_0, window_bounds = array<i64: 1, 40, 32>}, {pipeline_mode = #tpu.pipeline_mode<synchronous>, transform_indices = @transform_1, window_bounds = array<i64: 32, 96>}, {pipeline_mode = #tpu.pipeline_mode<synchronous>, transform_indices = @transform_2, window_bounds = array<i64: 4, 8, 32>}, {pipeline_mode = #tpu.pipeline_mode<synchronous>, transform_indices = @transform_3, window_bounds = array<i64: 1, 32>}, {transform_indices = @transform_4, window_bounds = array<i64: 1, 40, 32>}]} {
    %c0 = arith.constant 0 : index
    %c0_0 = arith.constant 0 : index
    %c0_1 = arith.constant 0 : index
    %0 = vector.load %arg1[%c0, %c0_0, %c0_1] : memref<1x40x32xf32, #tpu.memory_space<vmem>>, vector<1x40x32xf32>
    %1 = vector.shape_cast %0 : vector<1x40x32xf32> to vector<40x32xf32>
    %c0_2 = arith.constant 0 : index
    %c0_3 = arith.constant 0 : index
    %2 = vector.load %arg2[%c0_2, %c0_3] : memref<32x96xf32, #tpu.memory_space<vmem>>, vector<32x96xf32>
    %cst = arith.constant dense<0.000000e+00> : vector<40x96xf32>
    %3 = tpu.matmul %1, %2, %cst {dimension_numbers = #tpu.dot_dimension_numbers<[1], [0], [0], [1], [0, 0, 1, 1], [], []>} : vector<40x32xf32>, vector<32x96xf32>, vector<40x96xf32> -> vector<40x96xf32>
    %4 = vector.shape_cast %3 : vector<40x96xf32> to vector<5x8x96xf32>
    %c0_4 = arith.constant 0 : index
    %c0_5 = arith.constant 0 : index
    %c0_6 = arith.constant 0 : index
    %5 = vector.load %arg6[%c0_4, %c0_5, %c0_6] : memref<5x8x96xf32, #tpu.memory_space<vmem>>, vector<5x8x96xf32>
    tpu.vector_store %arg6[%c0_4, %c0_5, %c0_6], %4 {strides = array<i32>} : memref<5x8x96xf32, #tpu.memory_space<vmem>>, vector<5x8x96xf32>,
    %c0_7 = arith.constant 0 : index
    %c0_8 = arith.constant 0 : index
    %6 = vector.load %arg4[%c0_7, %c0_8] : memref<1x32xf32, #tpu.memory_space<vmem>>, vector<1x32xf32>
    %7 = vector.shape_cast %6 : vector<1x32xf32> to vector<1x32xf32>
    %8 = vector.broadcast %7 : vector<1x32xf32> to vector<40x32xf32>
    %c0_9 = arith.constant 0 : index
    %c0_10 = arith.constant 0 : index
    %c0_11 = arith.constant 0 : index
    %9 = vector.load %arg6[%c0_9, %c0_10, %c0_11] : memref<5x8x96xf32, #tpu.memory_space<vmem>>, vector<5x8x8xf32>
    %c0_12 = arith.constant 0 : index
    %c0_13 = arith.constant 0 : index
    %c32 = arith.constant 32 : index
    %10 = vector.load %arg6[%c0_12, %c0_13, %c32] : memref<5x8x96xf32, #tpu.memory_space<vmem>>, vector<5x8x8xf32>
    %c0_14 = arith.constant 0 : index
    %c0_15 = arith.constant 0 : index
    %c64 = arith.constant 64 : index
    %11 = vector.load %arg6[%c0_14, %c0_15, %c64] : memref<5x8x96xf32, #tpu.memory_space<vmem>>, vector<5x8x8xf32>
    "tpu.trace_start"() <{level = 10 : i32, message = "ntd,nsd->nts"}> : () -> ()
    %cst_16 = arith.constant dense<0.000000e+00> : vector<5x8x8xf32>
    %12 = tpu.matmul %9, %10, %cst_16 {dimension_numbers = #tpu.dot_dimension_numbers<[2], [2], [1], [1], [0, 0, 0, 1, 1, 1], [0], [0]>} : vector<5x8x8xf32>, vector<5x8x8xf32>, vector<5x8x8xf32> -> vector<5x8x8xf32>
    "tpu.trace_stop"() : () -> ()
    %cst_17 = arith.constant dense<0xFF800000> : vector<5x8xf32>
    %13 = vector.multi_reduction <maximumf>, %12, %cst_17 [2] : vector<5x8x8xf32> to vector<5x8xf32>
    %14 = vector.shape_cast %13 : vector<5x8xf32> to vector<5x8x1xf32>
    %15 = vector.broadcast %14 : vector<5x8x1xf32> to vector<5x8x8xf32>
    %16 = arith.subf %12, %15 : vector<5x8x8xf32>
    %17 = math.exp %16 : vector<5x8x8xf32>
    %cst_18 = arith.constant dense<0.000000e+00> : vector<5x8xf32>
    %18 = vector.multi_reduction <add>, %17, %cst_18 [2] : vector<5x8x8xf32> to vector<5x8xf32>
    %19 = vector.shape_cast %18 : vector<5x8xf32> to vector<5x8x1xf32>
    %20 = tpu.reciprocal %19 {approx = true} : vector<5x8x1xf32> -> vector<5x8x1xf32>
    %21 = vector.broadcast %20 : vector<5x8x1xf32> to vector<5x8x8xf32>
    %22 = arith.mulf %17, %21 : vector<5x8x8xf32>
    "tpu.trace_start"() <{level = 10 : i32, message = "nts,nsd->ntd"}> : () -> ()
    %cst_19 = arith.constant dense<0.000000e+00> : vector<5x8x8xf32>
    %23 = tpu.matmul %22, %11, %cst_19 {dimension_numbers = #tpu.dot_dimension_numbers<[2], [1], [1], [2], [0, 0, 0, 1, 1, 2], [0], [0]>} : vector<5x8x8xf32>, vector<5x8x8xf32>, vector<5x8x8xf32> -> vector<5x8x8xf32>
    "tpu.trace_stop"() : () -> ()
    %24 = vector.shape_cast %23 : vector<5x8x8xf32> to vector<40x8xf32>
    %c0_20 = arith.constant 0 : index
    %c0_21 = arith.constant 0 : index
    %c0_22 = arith.constant 0 : index
    %25 = vector.load %arg3[%c0_20, %c0_21, %c0_22] : memref<4x8x32xf32, #tpu.memory_space<vmem>>, vector<1x8x32xf32>
    %26 = vector.shape_cast %25 : vector<1x8x32xf32> to vector<8x32xf32>
    %cst_23 = arith.constant dense<0.000000e+00> : vector<40x32xf32>
    %27 = tpu.matmul %24, %26, %cst_23 {dimension_numbers = #tpu.dot_dimension_numbers<[1], [0], [0], [1], [0, 0, 1, 1], [], []>} : vector<40x8xf32>, vector<8x32xf32>, vector<40x32xf32> -> vector<40x32xf32>
    %28 = arith.addf %8, %27 : vector<40x32xf32>
    %c0_24 = arith.constant 0 : index
    %c0_25 = arith.constant 0 : index
    %c8 = arith.constant 8 : index
    %29 = vector.load %arg6[%c0_24, %c0_25, %c8] : memref<5x8x96xf32, #tpu.memory_space<vmem>>, vector<5x8x8xf32>
    %c0_26 = arith.constant 0 : index
    %c0_27 = arith.constant 0 : index
    %c40 = arith.constant 40 : index
    %30 = vector.load %arg6[%c0_26, %c0_27, %c40] : memref<5x8x96xf32, #tpu.memory_space<vmem>>, vector<5x8x8xf32>
    %c0_28 = arith.constant 0 : index
    %c0_29 = arith.constant 0 : index
    %c72 = arith.constant 72 : index
    %31 = vector.load %arg6[%c0_28, %c0_29, %c72] : memref<5x8x96xf32, #tpu.memory_space<vmem>>, vector<5x8x8xf32>
    "tpu.trace_start"() <{level = 10 : i32, message = "ntd,nsd->nts"}> : () -> ()
    %cst_30 = arith.constant dense<0.000000e+00> : vector<5x8x8xf32>
    %32 = tpu.matmul %29, %30, %cst_30 {dimension_numbers = #tpu.dot_dimension_numbers<[2], [2], [1], [1], [0, 0, 0, 1, 1, 1], [0], [0]>} : vector<5x8x8xf32>, vector<5x8x8xf32>, vector<5x8x8xf32> -> vector<5x8x8xf32>
    "tpu.trace_stop"() : () -> ()
    %cst_31 = arith.constant dense<0xFF800000> : vector<5x8xf32>
    %33 = vector.multi_reduction <maximumf>, %32, %cst_31 [2] : vector<5x8x8xf32> to vector<5x8xf32>
    %34 = vector.shape_cast %33 : vector<5x8xf32> to vector<5x8x1xf32>
    %35 = vector.broadcast %34 : vector<5x8x1xf32> to vector<5x8x8xf32>
    %36 = arith.subf %32, %35 : vector<5x8x8xf32>
    %37 = math.exp %36 : vector<5x8x8xf32>
    %cst_32 = arith.constant dense<0.000000e+00> : vector<5x8xf32>
    %38 = vector.multi_reduction <add>, %37, %cst_32 [2] : vector<5x8x8xf32> to vector<5x8xf32>
    %39 = vector.shape_cast %38 : vector<5x8xf32> to vector<5x8x1xf32>
    %40 = tpu.reciprocal %39 {approx = true} : vector<5x8x1xf32> -> vector<5x8x1xf32>
    %41 = vector.broadcast %40 : vector<5x8x1xf32> to vector<5x8x8xf32>
    %42 = arith.mulf %37, %41 : vector<5x8x8xf32>
    "tpu.trace_start"() <{level = 10 : i32, message = "nts,nsd->ntd"}> : () -> ()
    %cst_33 = arith.constant dense<0.000000e+00> : vector<5x8x8xf32>
    %43 = tpu.matmul %42, %31, %cst_33 {dimension_numbers = #tpu.dot_dimension_numbers<[2], [1], [1], [2], [0, 0, 0, 1, 1, 2], [0], [0]>} : vector<5x8x8xf32>, vector<5x8x8xf32>, vector<5x8x8xf32> -> vector<5x8x8xf32>
    "tpu.trace_stop"() : () -> ()
    %44 = vector.shape_cast %43 : vector<5x8x8xf32> to vector<40x8xf32>
    %c1 = arith.constant 1 : index
    %c0_34 = arith.constant 0 : index
    %c0_35 = arith.constant 0 : index
    %45 = vector.load %arg3[%c1, %c0_34, %c0_35] : memref<4x8x32xf32, #tpu.memory_space<vmem>>, vector<1x8x32xf32>
    %46 = vector.shape_cast %45 : vector<1x8x32xf32> to vector<8x32xf32>
    %cst_36 = arith.constant dense<0.000000e+00> : vector<40x32xf32>
    %47 = tpu.matmul %44, %46, %cst_36 {dimension_numbers = #tpu.dot_dimension_numbers<[1], [0], [0], [1], [0, 0, 1, 1], [], []>} : vector<40x8xf32>, vector<8x32xf32>, vector<40x32xf32> -> vector<40x32xf32>
    %48 = arith.addf %28, %47 : vector<40x32xf32>
    %c0_37 = arith.constant 0 : index
    %c0_38 = arith.constant 0 : index
    %c16 = arith.constant 16 : index
    %49 = vector.load %arg6[%c0_37, %c0_38, %c16] : memref<5x8x96xf32, #tpu.memory_space<vmem>>, vector<5x8x8xf32>
    %c0_39 = arith.constant 0 : index
    %c0_40 = arith.constant 0 : index
    %c48 = arith.constant 48 : index
    %50 = vector.load %arg6[%c0_39, %c0_40, %c48] : memref<5x8x96xf32, #tpu.memory_space<vmem>>, vector<5x8x8xf32>
    %c0_41 = arith.constant 0 : index
    %c0_42 = arith.constant 0 : index
    %c80 = arith.constant 80 : index
    %51 = vector.load %arg6[%c0_41, %c0_42, %c80] : memref<5x8x96xf32, #tpu.memory_space<vmem>>, vector<5x8x8xf32>
    "tpu.trace_start"() <{level = 10 : i32, message = "ntd,nsd->nts"}> : () -> ()
    %cst_43 = arith.constant dense<0.000000e+00> : vector<5x8x8xf32>
    %52 = tpu.matmul %49, %50, %cst_43 {dimension_numbers = #tpu.dot_dimension_numbers<[2], [2], [1], [1], [0, 0, 0, 1, 1, 1], [0], [0]>} : vector<5x8x8xf32>, vector<5x8x8xf32>, vector<5x8x8xf32> -> vector<5x8x8xf32>
    "tpu.trace_stop"() : () -> ()
    %cst_44 = arith.constant dense<0xFF800000> : vector<5x8xf32>
    %53 = vector.multi_reduction <maximumf>, %52, %cst_44 [2] : vector<5x8x8xf32> to vector<5x8xf32>
    %54 = vector.shape_cast %53 : vector<5x8xf32> to vector<5x8x1xf32>
    %55 = vector.broadcast %54 : vector<5x8x1xf32> to vector<5x8x8xf32>
    %56 = arith.subf %52, %55 : vector<5x8x8xf32>
    %57 = math.exp %56 : vector<5x8x8xf32>
    %cst_45 = arith.constant dense<0.000000e+00> : vector<5x8xf32>
    %58 = vector.multi_reduction <add>, %57, %cst_45 [2] : vector<5x8x8xf32> to vector<5x8xf32>
    %59 = vector.shape_cast %58 : vector<5x8xf32> to vector<5x8x1xf32>
    %60 = tpu.reciprocal %59 {approx = true} : vector<5x8x1xf32> -> vector<5x8x1xf32>
    %61 = vector.broadcast %60 : vector<5x8x1xf32> to vector<5x8x8xf32>
    %62 = arith.mulf %57, %61 : vector<5x8x8xf32>
    "tpu.trace_start"() <{level = 10 : i32, message = "nts,nsd->ntd"}> : () -> ()
    %cst_46 = arith.constant dense<0.000000e+00> : vector<5x8x8xf32>
    %63 = tpu.matmul %62, %51, %cst_46 {dimension_numbers = #tpu.dot_dimension_numbers<[2], [1], [1], [2], [0, 0, 0, 1, 1, 2], [0], [0]>} : vector<5x8x8xf32>, vector<5x8x8xf32>, vector<5x8x8xf32> -> vector<5x8x8xf32>
    "tpu.trace_stop"() : () -> ()
    %64 = vector.shape_cast %63 : vector<5x8x8xf32> to vector<40x8xf32>
    %c2 = arith.constant 2 : index
    %c0_47 = arith.constant 0 : index
    %c0_48 = arith.constant 0 : index
    %65 = vector.load %arg3[%c2, %c0_47, %c0_48] : memref<4x8x32xf32, #tpu.memory_space<vmem>>, vector<1x8x32xf32>
    %66 = vector.shape_cast %65 : vector<1x8x32xf32> to vector<8x32xf32>
    %cst_49 = arith.constant dense<0.000000e+00> : vector<40x32xf32>
    %67 = tpu.matmul %64, %66, %cst_49 {dimension_numbers = #tpu.dot_dimension_numbers<[1], [0], [0], [1], [0, 0, 1, 1], [], []>} : vector<40x8xf32>, vector<8x32xf32>, vector<40x32xf32> -> vector<40x32xf32>
    %68 = arith.addf %48, %67 : vector<40x32xf32>
    %c0_50 = arith.constant 0 : index
    %c0_51 = arith.constant 0 : index
    %c24 = arith.constant 24 : index
    %69 = vector.load %arg6[%c0_50, %c0_51, %c24] : memref<5x8x96xf32, #tpu.memory_space<vmem>>, vector<5x8x8xf32>
    %c0_52 = arith.constant 0 : index
    %c0_53 = arith.constant 0 : index
    %c56 = arith.constant 56 : index
    %70 = vector.load %arg6[%c0_52, %c0_53, %c56] : memref<5x8x96xf32, #tpu.memory_space<vmem>>, vector<5x8x8xf32>
    %c0_54 = arith.constant 0 : index
    %c0_55 = arith.constant 0 : index
    %c88 = arith.constant 88 : index
    %71 = vector.load %arg6[%c0_54, %c0_55, %c88] : memref<5x8x96xf32, #tpu.memory_space<vmem>>, vector<5x8x8xf32>
    "tpu.trace_start"() <{level = 10 : i32, message = "ntd,nsd->nts"}> : () -> ()
    %cst_56 = arith.constant dense<0.000000e+00> : vector<5x8x8xf32>
    %72 = tpu.matmul %69, %70, %cst_56 {dimension_numbers = #tpu.dot_dimension_numbers<[2], [2], [1], [1], [0, 0, 0, 1, 1, 1], [0], [0]>} : vector<5x8x8xf32>, vector<5x8x8xf32>, vector<5x8x8xf32> -> vector<5x8x8xf32>
    "tpu.trace_stop"() : () -> ()
    %cst_57 = arith.constant dense<0xFF800000> : vector<5x8xf32>
    %73 = vector.multi_reduction <maximumf>, %72, %cst_57 [2] : vector<5x8x8xf32> to vector<5x8xf32>
    %74 = vector.shape_cast %73 : vector<5x8xf32> to vector<5x8x1xf32>
    %75 = vector.broadcast %74 : vector<5x8x1xf32> to vector<5x8x8xf32>
    %76 = arith.subf %72, %75 : vector<5x8x8xf32>
    %77 = math.exp %76 : vector<5x8x8xf32>
    %cst_58 = arith.constant dense<0.000000e+00> : vector<5x8xf32>
    %78 = vector.multi_reduction <add>, %77, %cst_58 [2] : vector<5x8x8xf32> to vector<5x8xf32>
    %79 = vector.shape_cast %78 : vector<5x8xf32> to vector<5x8x1xf32>
    %80 = tpu.reciprocal %79 {approx = true} : vector<5x8x1xf32> -> vector<5x8x1xf32>
    %81 = vector.broadcast %80 : vector<5x8x1xf32> to vector<5x8x8xf32>
    %82 = arith.mulf %77, %81 : vector<5x8x8xf32>
    "tpu.trace_start"() <{level = 10 : i32, message = "nts,nsd->ntd"}> : () -> ()
    %cst_59 = arith.constant dense<0.000000e+00> : vector<5x8x8xf32>
    %83 = tpu.matmul %82, %71, %cst_59 {dimension_numbers = #tpu.dot_dimension_numbers<[2], [1], [1], [2], [0, 0, 0, 1, 1, 2], [0], [0]>} : vector<5x8x8xf32>, vector<5x8x8xf32>, vector<5x8x8xf32> -> vector<5x8x8xf32>
    "tpu.trace_stop"() : () -> ()
    %84 = vector.shape_cast %83 : vector<5x8x8xf32> to vector<40x8xf32>
    %c3 = arith.constant 3 : index
    %c0_60 = arith.constant 0 : index
    %c0_61 = arith.constant 0 : index
    %85 = vector.load %arg3[%c3, %c0_60, %c0_61] : memref<4x8x32xf32, #tpu.memory_space<vmem>>, vector<1x8x32xf32>
    %86 = vector.shape_cast %85 : vector<1x8x32xf32> to vector<8x32xf32>
    %cst_62 = arith.constant dense<0.000000e+00> : vector<40x32xf32>
    %87 = tpu.matmul %84, %86, %cst_62 {dimension_numbers = #tpu.dot_dimension_numbers<[1], [0], [0], [1], [0, 0, 1, 1], [], []>} : vector<40x8xf32>, vector<8x32xf32>, vector<40x32xf32> -> vector<40x32xf32>
    %88 = arith.addf %68, %87 : vector<40x32xf32>
    %c0_63 = arith.constant 0 : index
    %c0_64 = arith.constant 0 : index
    %c0_65 = arith.constant 0 : index
    %89 = vector.load %arg5[%c0_63, %c0_64, %c0_65] : memref<1x40x32xf32, #tpu.memory_space<vmem>>, vector<1x40x32xf32>
    %90 = vector.shape_cast %89 : vector<1x40x32xf32> to vector<40x32xf32>
    %91 = vector.shape_cast %88 : vector<40x32xf32> to vector<1x40x32xf32>
    tpu.vector_store %arg5[%c0_63, %c0_64, %c0_65], %91 {strides = array<i32>} : memref<1x40x32xf32, #tpu.memory_space<vmem>>, vector<1x40x32xf32>,
    return
  }
  func.func @transform_0(%arg0: i32) -> (i32, i32, i32) {
    %c0_i32 = arith.constant 0 : i32
    %c0_i32_0 = arith.constant 0 : i32
    %c0_i32_1 = arith.constant 0 : i32
    return %arg0, %c0_i32, %c0_i32_0 : i32, i32, i32
  }
  func.func @transform_1(%arg0: i32) -> (i32, i32) {
    %c0_i32 = arith.constant 0 : i32
    %c0_i32_0 = arith.constant 0 : i32
    %c0_i32_1 = arith.constant 0 : i32
    return %c0_i32, %c0_i32_0 : i32, i32
  }
  func.func @transform_2(%arg0: i32) -> (i32, i32, i32) {
    %c0_i32 = arith.constant 0 : i32
    %c0_i32_0 = arith.constant 0 : i32
    %c0_i32_1 = arith.constant 0 : i32
    %c0_i32_2 = arith.constant 0 : i32
    return %c0_i32, %c0_i32_0, %c0_i32_1 : i32, i32, i32
  }
  func.func @transform_3(%arg0: i32) -> (i32, i32) {
    %c0_i32 = arith.constant 0 : i32
    %c0_i32_0 = arith.constant 0 : i32
    %c0_i32_1 = arith.constant 0 : i32
    return %c0_i32, %c0_i32_0 : i32, i32
  }
  func.func @transform_4(%arg0: i32) -> (i32, i32, i32) {
    %c0_i32 = arith.constant 0 : i32
    %c0_i32_0 = arith.constant 0 : i32
    %c0_i32_1 = arith.constant 0 : i32
    return %arg0, %c0_i32, %c0_i32_0 : i32, i32, i32
  }
}

</mosaic_0001>

<llo_original>
// kernel: t_multihead_attention.1
$region0: #{t_multihead_attention.1}
  #allocation0 [shape = 'u32[]', space=smem, size = 0x4, offset = 0x4, fixed_abs, tag = 'smem constant byte address 0x4 - core index']
  #allocation1 [shape = 'u32[144,128]{1,0:T(1,128)}', space=vmem, size = 0x12000, scoped, tag = 'internal scratch']
  #allocation2 [shape = 'f32[5,8,96]{2,1,0:T(8,128)}', space=vmem, size = 0x5000, scoped, tag = 'scratch operand']
  %s0 = inlined_call_operand.vmem [shape: f32[2,40,32], index: 0, kind: input, shape index: {}]
  %s1 = inlined_call_operand.vmem [shape: f32[32,96], index: 1, kind: input, shape index: {}]
  %s2 = inlined_call_operand.vmem [shape: f32[4,8,32], index: 2, kind: input, shape index: {}]
  %s3 = inlined_call_operand.vmem [shape: f32[1,32], index: 3, kind: input, shape index: {}]
  %s4 = inlined_call_operand.hbm [shape: f32[2,40,32], index: 4, kind: output, shape index: {}]
  %s5 = sld [smem:[#allocation0]]
  $region49: #{t_multihead_attention.1} parent=0
    _
  %s7 = ssub.s32 1, %s5
  %s8 = scalar_select 0, %s7, %s5
  $region1: #{t_multihead_attention.1} parent=0
    #allocation3 [shape = 'u8[40960]{0}', space=vmem, size = 0xa000, scoped, tag = 'output window, operand 0']
    #allocation4 [shape = 's32[2]{0}', space=sflag, size = 0x8, scoped, tag = 'scoped memory for t_multihead_attention.1']
    %9 = vsyncpa [#allocation4], 0
    %s10 = scalar_lea.sflag [#allocation4], 1
    %11 = vsyncpa %s10, 0
    loop: start=0, step=1, limit=4
    $region2: #{t_multihead_attention.1} parent=1 // loop_pre_header
      _
    $region3: #{t_multihead_attention.1} parent=1 // loop_header
      %s13 = sphi 0, %s17
      %p14 = scmp.ge.s32.totalorder %s13, 4
      %s23 = sphi 0, %s25
      %s26 = sphi 0, %s23
      %s27 = sphi 0, %s26
      %s43 = sphi 0, %s27
      %s47 = sphi 0, %s47
      %s49 = sphi 0, %s47
      %s50 = sphi 0, %s49
      %s64 = sphi 0, %s50
      %s68 = sphi 0, %s68
      %s70 = sphi 0, %s68
      %s71 = sphi 0, %s70
      %s85 = sphi 0, %s71
      %s89 = sphi 0, %s89
      %s91 = sphi 0, %s89
      %s92 = sphi 0, %s91
      %s106 = sphi 0, %s92
      %s112 = sphi 0, %s114
      %s115 = sphi 0, %s112
      %s116 = sphi 0, %s115
      %s132 = sphi 0, %s116
    $region4: #{t_multihead_attention.1} parent=1 // loop_header_branch
      %16 = sbr.rel (%p14) target = $region8
    $region5: #{t_multihead_attention.1} parent=1 // loop_body
      %s18 = ssub.s32 %s13, 1
      %s19 = ssub.s32 %s13, 2
      %s20 = sadd.s32 %s13, 1
      %s21 = ssub.s32 %s13, %s20
      %p22 = scmp.eq.s32.totalorder %s21, 0
      %s24 = sadd.s32 %s23, 1
      %s25 = scalar_select %p22, %s23, %s24
      %p28 = pneg %p22
      %p29 = scmp.eq.s32.totalorder %s13, 1
      %p30 = por %p28, %p29
      %p31 = scmp.ne.s32.totalorder %s23, %s26
      %p32 = scmp.eq.s32.totalorder %s13, 0
      %p33 = por %p31, %p32
      %p34 = scmp.ne.s32.totalorder %s23, %s26
      %p35 = scmp.eq.s32.totalorder %s18, 1
      %p36 = por %p34, %p35
      %p37 = scmp.ne.s32.totalorder %s26, %s27
      %p38 = scmp.eq.s32.totalorder %s18, 0
      %p39 = por %p37, %p38
      %p40 = scmp.ne.s32.totalorder %s26, %s27
      %p41 = scmp.eq.s32.totalorder %s19, 1
      %p42 = por %p40, %p41
      %p44 = scmp.ne.s32.totalorder %s27, %s43
      %p45 = scmp.eq.s32.totalorder %s19, 0
      %p46 = por %p44, %p45
      %s48 = sadd.s32 %s47, 1
      %p51 = scmp.eq.s32.totalorder %s13, 1
      %p52 = scmp.ne.s32.totalorder %s47, %s49
      %p53 = scmp.eq.s32.totalorder %s13, 0
      %p54 = por %p52, %p53
      %p55 = scmp.ne.s32.totalorder %s47, %s49
      %p56 = scmp.eq.s32.totalorder %s18, 1
      %p57 = por %p55, %p56
      %p58 = scmp.ne.s32.totalorder %s49, %s50
      %p59 = scmp.eq.s32.totalorder %s18, 0
      %p60 = por %p58, %p59
      %p61 = scmp.ne.s32.totalorder %s49, %s50
      %p62 = scmp.eq.s32.totalorder %s19, 1
      %p63 = por %p61, %p62
      %p65 = scmp.ne.s32.totalorder %s50, %s64
      %p66 = scmp.eq.s32.totalorder %s19, 0
      %p67 = por %p65, %p66
      %s69 = sadd.s32 %s68, 1
      %p72 = scmp.eq.s32.totalorder %s13, 1
      %p73 = scmp.ne.s32.totalorder %s68, %s70
      %p74 = scmp.eq.s32.totalorder %s13, 0
      %p75 = por %p73, %p74
      %p76 = scmp.ne.s32.totalorder %s68, %s70
      %p77 = scmp.eq.s32.totalorder %s18, 1
      %p78 = por %p76, %p77
      %p79 = scmp.ne.s32.totalorder %s70, %s71
      %p80 = scmp.eq.s32.totalorder %s18, 0
      %p81 = por %p79, %p80
      %p82 = scmp.ne.s32.totalorder %s70, %s71
      %p83 = scmp.eq.s32.totalorder %s19, 1
      %p84 = por %p82, %p83
      %p86 = scmp.ne.s32.totalorder %s71, %s85
      %p87 = scmp.eq.s32.totalorder %s19, 0
      %p88 = por %p86, %p87
      %s90 = sadd.s32 %s89, 1
      %p93 = scmp.eq.s32.totalorder %s13, 1
      %p94 = scmp.ne.s32.totalorder %s89, %s91
      %p95 = scmp.eq.s32.totalorder %s13, 0
      %p96 = por %p94, %p95
      %p97 = scmp.ne.s32.totalorder %s89, %s91
      %p98 = scmp.eq.s32.totalorder %s18, 1
      %p99 = por %p97, %p98
      %p100 = scmp.ne.s32.totalorder %s91, %s92
      %p101 = scmp.eq.s32.totalorder %s18, 0
      %p102 = por %p100, %p101
      %p103 = scmp.ne.s32.totalorder %s91, %s92
      %p104 = scmp.eq.s32.totalorder %s19, 1
      %p105 = por %p103, %p104
      %p107 = scmp.ne.s32.totalorder %s92, %s106
      %p108 = scmp.eq.s32.totalorder %s19, 0
      %p109 = por %p107, %p108
      %s110 = ssub.s32 %s13, %s20
      %p111 = scmp.eq.s32.totalorder %s110, 0
      %s113 = sadd.s32 %s112, 1
      %s114 = scalar_select %p111, %s112, %s113
      %p117 = pneg %p111
      %p118 = scmp.eq.s32.totalorder %s13, 1
      %p119 = por %p117, %p118
      %p120 = scmp.ne.s32.totalorder %s112, %s115
      %p121 = scmp.eq.s32.totalorder %s13, 0
      %p122 = por %p120, %p121
      %p123 = scmp.ne.s32.totalorder %s112, %s115
      %p124 = scmp.eq.s32.totalorder %s18, 1
      %p125 = por %p123, %p124
      %p126 = scmp.ne.s32.totalorder %s115, %s116
      %p127 = scmp.eq.s32.totalorder %s18, 0
      %p128 = por %p126, %p127
      %p129 = scmp.ne.s32.totalorder %s115, %s116
      %p130 = scmp.eq.s32.totalorder %s19, 1
      %p131 = por %p129, %p130
      %p133 = scmp.ne.s32.totalorder %s116, %s132
      %p134 = scmp.eq.s32.totalorder %s19, 0
      %p135 = por %p133, %p134
      %p136 = scmp.le.s32.totalorder 1, %s13
      %p137 = scmp.lt.s32.totalorder %s13, 3
      %p138 = pnand %p136, %p137
      %p139 = pneg %p138
      // Predicated region
      $region9: #{t_multihead_attention.1} parent=5 // pred_check
        _
      $region10: #{t_multihead_attention.1} parent=5 // pred_check_branch
        %141 = sbr.rel (%p138) target = $region12
      $region11: #{t_multihead_attention.1} parent=5 // pred_region
        %s142 = ssub.s32 %s13, 1
        // Predicated region
        $region13: #{t_multihead_attention.1} parent=11 // pred_check
          %p143 = pneg %p60
        $region14: #{t_multihead_attention.1} parent=11 // pred_check_branch
          %145 = sbr.rel (%p143) target = $region16
        $region15: #{t_multihead_attention.1} parent=11 // pred_region
          _
        $region16: #{t_multihead_attention.1} parent=11 // pred_fallthru
          _
        // Predicated region
        $region17: #{t_multihead_attention.1} parent=11 // pred_check
          %p146 = pneg %p81
        $region18: #{t_multihead_attention.1} parent=11 // pred_check_branch
          %148 = sbr.rel (%p146) target = $region20
        $region19: #{t_multihead_attention.1} parent=11 // pred_region
          _
        $region20: #{t_multihead_attention.1} parent=11 // pred_fallthru
          _
        // Predicated region
        $region21: #{t_multihead_attention.1} parent=11 // pred_check
          %p149 = pneg %p102
        $region22: #{t_multihead_attention.1} parent=11 // pred_check_branch
          %151 = sbr.rel (%p149) target = $region24
        $region23: #{t_multihead_attention.1} parent=11 // pred_region
          _
        $region24: #{t_multihead_attention.1} parent=11 // pred_fallthru
          _
      $region12: #{t_multihead_attention.1} parent=5 // pred_fallthru
        _
      %p152 = scmp.lt.s32.totalorder %s13, 2
      // Predicated region
      $region25: #{t_multihead_attention.1} parent=5 // pred_check
        %p153 = pneg %p152
      $region26: #{t_multihead_attention.1} parent=5 // pred_check_branch
        %155 = sbr.rel (%p153) target = $region28
      $region27: #{t_multihead_attention.1} parent=5 // pred_region
        // Predicated region
        $region29: #{t_multihead_attention.1} parent=27 // pred_check
          %p156 = pneg %p33
        $region30: #{t_multihead_attention.1} parent=27 // pred_check_branch
          %158 = sbr.rel (%p156) target = $region32
        $region31: #{t_multihead_attention.1} parent=27 // pred_region
          %p159 = scmp.lt.s32.totalorder %s13, 1
          %s160 = scalar_select %p159, %s13, 1
          %s161 = smul.addr %s160, 5
          %s162 = smul.addr %s161, 8
          %s163 = scalar_lea.vmem %s0, %s162
        $region32: #{t_multihead_attention.1} parent=27 // pred_fallthru
          _
      $region28: #{t_multihead_attention.1} parent=5 // pred_fallthru
        _
      %p164 = scmp.le.s32.totalorder 1, %s13
      %p165 = scmp.lt.s32.totalorder %s13, 3
      %p166 = pnand %p164, %p165
      %p167 = pneg %p166
      // Predicated region
      $region33: #{t_multihead_attention.1} parent=5 // pred_check
        _
      $region34: #{t_multihead_attention.1} parent=5 // pred_check_branch
        %169 = sbr.rel (%p166) target = $region36
      $region35: #{t_multihead_attention.1} parent=5 // pred_region
        %s170 = ssub.s32 %s13, 1
        %p171 = scmp.lt.s32.totalorder %s18, 1
        %s172 = scalar_select %p171, %s18, 1
        %s173 = smul.addr %s172, 5
        %s174 = smul.addr %s173, 8
        %s175 = scalar_lea.vmem %s0, %s174
        %p176 = pneg %p39
        %p177 = pneg %p36
        %p178 = pneg %p60
        %p179 = pneg %p57
        %p180 = pneg %p81
        %p181 = pneg %p78
        %p182 = pneg %p102
        %p183 = pneg %p99
        %p184 = pneg %p128
        %p185 = pneg %p125
        %s186 = sand.u32 %s115, 1
        %s187 = scalar_lea.sflag [#allocation4], %s186
        %s188 = sand.u32 %s115, 1
        %s189 = smul.addr %s188, 40
        %s190 = scalar_lea.vmem [#allocation3], %s189
        %p191 = scmp.lt.s32.totalorder %s18, 1
        %s192 = scalar_select %p191, %s18, 1
        %s193 = smul.addr %s192, 5
        %s194 = smul.addr %s193, 8
        %s195 = scalar_lea.vmem %s0, %s194
        %v196 = vld [vmem:[%s195] sm:$0xff]
        %v197 = vld [vmem:[%s195 + $0x8] sm:$0xff]
        %v198 = vld [vmem:[%s195 + $0x10] sm:$0xff]
        %v199 = vld [vmem:[%s195 + $0x18] sm:$0xff]
        %v200 = vld [vmem:[%s195 + $0x20] sm:$0xff]
        %v201 = vld [vmem:[%s1] sm:$0xff]
        %v202 = vld [vmem:[%s1 + $0x8] sm:$0xff]
        %v203 = vld [vmem:[%s1 + $0x10] sm:$0xff]
        %v204 = vld [vmem:[%s1 + $0x18] sm:$0xff]
        %vm205 = vcmask 261120
        %v207 = vsel %vm205, %v196, 0
        %v210 = vsel %vm205, %v197, 0
        %v213 = vsel %vm205, %v198, 0
        %v216 = vsel %vm205, %v199, 0
        %v219 = vsel %vm205, %v200, 0
        %221 = vmatprep.subr.mxu0 0.0
        %222 = vmatpush1.msra.mxu0 %v201
        %223 = vmatprep.subr.mxu0 0.0
        %224 = vmatpush1.msra.mxu0 %v202
        %225 = vmatprep.subr.mxu0 0.0
        %226 = vmatpush1.msra.mxu0 %v203
        %227 = vmatprep.subr.mxu0 0.0
        %228 = vmatpush1.msra.mxu0 %v204
        %229 = vmatprep.subr.mxu0 0.0
        %230 = vmatpush1.msra.mxu0 0.0
        %231 = vmatprep.subr.mxu0 0.0
        %232 = vmatpush1.msra.mxu0 0.0
        %233 = vmatprep.subr.mxu0 0.0
        %234 = vmatpush1.msra.mxu0 0.0
        %235 = vmatprep.subr.mxu0 0.0
        %236 = vmatpush1.msra.mxu0 0.0
        %237 = vmatprep.subr.mxu0 0.0
        %238 = vmatpush1.msra.mxu0 0.0
        %239 = vmatprep.subr.mxu0 0.0
        %240 = vmatpush1.msra.mxu0 0.0
        %241 = vmatprep.subr.mxu0 0.0
        %242 = vmatpush1.msra.mxu0 0.0
        %243 = vmatprep.subr.mxu0 0.0
        %244 = vmatpush1.msra.mxu0 0.0
        %245 = vmatprep.subr.mxu0 0.0
        %246 = vmatpush1.msra.mxu0 0.0
        %247 = vmatprep.subr.mxu0 0.0
        %248 = vmatpush1.msra.mxu0 0.0
        %249 = vmatprep.subr.mxu0 0.0
        %250 = vmatpush1.msra.mxu0 0.0
        %251 = vmatprep.subr.mxu0 0.0
        %252 = vmatpush1.msra.mxu0 0.0
        %253 = vmatprep.subr.mxu0 0.0
        %254 = vmatpush1.msra.mxu0 0.0
        %255 = vmatprep.subr.mxu0 0.0
        %256 = vmatpush1.msra.mxu0 0.0
        %257 = vmatprep.subr.mxu0 0.0
        %258 = vmatpush1.msra.mxu0 0.0
        %259 = vmatprep.subr.mxu0 0.0
        %260 = vmatpush1.msra.mxu0 0.0
        %261 = vmatprep.subr.mxu0 0.0
        %262 = vmatpush1.msra.mxu0 0.0
        %263 = vmatprep.subr.mxu0 0.0
        %264 = vmatpush1.msra.mxu0 0.0
        %265 = vmatprep.subr.mxu0 0.0
        %266 = vmatpush1.msra.mxu0 0.0
        %267 = vmatprep.subr.mxu0 0.0
        %268 = vmatpush1.msra.mxu0 0.0
        %269 = vmatprep.subr.mxu0 0.0
        %270 = vmatpush1.msra.mxu0 0.0
        %271 = vmatprep.subr.mxu0 0.0
        %272 = vmatpush1.msra.mxu0 0.0
        %273 = vmatprep.subr.mxu0 0.0
        %274 = vmatpush1.msra.mxu0 0.0
        %275 = vmatprep.subr.mxu0 0.0
        %276 = vmatpush1.msra.mxu0 0.0
        %277 = vmatprep.subr.mxu0 0.0
        %278 = vmatpush1.msra.mxu0 0.0
        %279 = vmatprep.subr.mxu0 0.0
        %280 = vmatpush1.msra.mxu0 0.0
        %281 = vmatprep.subr.mxu0 0.0
        %282 = vmatpush1.msra.mxu0 0.0
        %283 = vmatprep.subr.mxu0 0.0
        %284 = vmatpush1.msra.mxu0 0.0
        %285 = vmatprep.mubr.f32.mxu0 0.0
        %286 = vmatmul.mubr.f32.gmra.mrb[0].mxu0 %v207
        %v287 = vpop.f32.mrb[0].mxu0
        %v288 = vadd.f32 0.0, %v287
        %v289 = vpop.f32.mrb[0].mxu0
        %290 = vmatprep.mubr.f32.mxu0 0.0
        %291 = vmatmul.mubr.f32.gmra.mrb[0].mxu0 %v210
        %v292 = vpop.f32.mrb[0].mxu0
        %v293 = vadd.f32 0.0, %v292
        %v294 = vpop.f32.mrb[0].mxu0
        %295 = vmatprep.mubr.f32.mxu0 0.0
        %296 = vmatmul.mubr.f32.gmra.mrb[0].mxu0 %v213
        %v297 = vpop.f32.mrb[0].mxu0
        %v298 = vadd.f32 0.0, %v297
        %v299 = vpop.f32.mrb[0].mxu0
        %300 = vmatprep.mubr.f32.mxu0 0.0
        %301 = vmatmul.mubr.f32.gmra.mrb[0].mxu0 %v216
        %v302 = vpop.f32.mrb[0].mxu0
        %v303 = vadd.f32 0.0, %v302
        %v304 = vpop.f32.mrb[0].mxu0
        %305 = vmatprep.mubr.f32.mxu0 0.0
        %306 = vmatmul.mubr.f32.gmra.mrb[0].mxu0 %v219
        %v307 = vpop.f32.mrb[0].mxu0
        %v308 = vadd.f32 0.0, %v307
        %v309 = vpop.f32.mrb[0].mxu0
        %310 = vdwg.mxu0
        %vm311 = vcmask 785408
        %312 = vst.msk [vmem:[#allocation2] sm:$0xff] %vm311, %v288
        %313 = vst.msk [vmem:[#allocation2 + $0x8] sm:$0xff] %vm311, %v293
        %314 = vst.msk [vmem:[#allocation2 + $0x10] sm:$0xff] %vm311, %v298
        %315 = vst.msk [vmem:[#allocation2 + $0x18] sm:$0xff] %vm311, %v303
        %316 = vst.msk [vmem:[#allocation2 + $0x20] sm:$0xff] %vm311, %v308
        %v317 = vld [vmem:[%s3] sm:$0x1]
        %v319 = vlaneseq
        %v320 = vshrl.u32 %v319, 7
        %v321 = vsub.s32 0, %v320
        %v322 = vrot.slane %v317, %v321
        %v324 = vld [vmem:[#allocation2] sm:$0xff]
        %v325 = vld [vmem:[#allocation2 + $0x8] sm:$0xff]
        %v326 = vld [vmem:[#allocation2 + $0x10] sm:$0xff]
        %v327 = vld [vmem:[#allocation2 + $0x18] sm:$0xff]
        %v328 = vld [vmem:[#allocation2 + $0x20] sm:$0xff]
        %330 = vrot.lane.b32.xlu0 %v324, 96
        %v331 = vpop.permute.xlu0 %330
        %vm332 = vcmask 64512
        %v333 = vsel %vm332, %v324, 0
        %v335 = vsel %vm332, %v331, 0
        %337 = vmatprep.subr.mxu0 0.0
        %338 = vmatpush1.xpose.msra.mxu0 %v335
        %339 = vmatprep.subr.mxu0 0.0
        %340 = vmatpush1.xpose.msra.mxu0 0.0
        %341 = vmatprep.subr.mxu0 0.0
        %342 = vmatpush1.xpose.msra.mxu0 0.0
        %343 = vmatprep.subr.mxu0 0.0
        %344 = vmatpush1.xpose.msra.mxu0 0.0
        %345 = vmatprep.subr.mxu0 0.0
        %346 = vmatpush1.xpose.msra.mxu0 0.0
        %347 = vmatprep.subr.mxu0 0.0
        %348 = vmatpush1.xpose.msra.mxu0 0.0
        %349 = vmatprep.subr.mxu0 0.0
        %350 = vmatpush1.xpose.msra.mxu0 0.0
        %351 = vmatprep.subr.mxu0 0.0
        %352 = vmatpush1.xpose.msra.mxu0 0.0
        %353 = vmatprep.subr.mxu0 0.0
        %354 = vmatpush1.xpose.msra.mxu0 0.0
        %355 = vmatprep.subr.mxu0 0.0
        %356 = vmatpush1.xpose.msra.mxu0 0.0
        %357 = vmatprep.subr.mxu0 0.0
        %358 = vmatpush1.xpose.msra.mxu0 0.0
        %359 = vmatprep.subr.mxu0 0.0
        %360 = vmatpush1.xpose.msra.mxu0 0.0
        %361 = vmatprep.subr.mxu0 0.0
        %362 = vmatpush1.xpose.msra.mxu0 0.0
        %363 = vmatprep.subr.mxu0 0.0
        %364 = vmatpush1.xpose.msra.mxu0 0.0
        %365 = vmatprep.subr.mxu0 0.0
        %366 = vmatpush1.xpose.msra.mxu0 0.0
        %367 = vmatprep.subr.mxu0 0.0
        %368 = vmatpush1.xpose.msra.mxu0 0.0
        %369 = vmatprep.subr.mxu0 0.0
        %370 = vmatpush1.xpose.msra.mxu0 0.0
        %371 = vmatprep.subr.mxu0 0.0
        %372 = vmatpush1.xpose.msra.mxu0 0.0
        %373 = vmatprep.subr.mxu0 0.0
        %374 = vmatpush1.xpose.msra.mxu0 0.0
        %375 = vmatprep.subr.mxu0 0.0
        %376 = vmatpush1.xpose.msra.mxu0 0.0
        %377 = vmatprep.subr.mxu0 0.0
        %378 = vmatpush1.xpose.msra.mxu0 0.0
        %379 = vmatprep.subr.mxu0 0.0
        %380 = vmatpush1.xpose.msra.mxu0 0.0
        %381 = vmatprep.subr.mxu0 0.0
        %382 = vmatpush1.xpose.msra.mxu0 0.0
        %383 = vmatprep.subr.mxu0 0.0
        %384 = vmatpush1.xpose.msra.mxu0 0.0
        %385 = vmatprep.subr.mxu0 0.0
        %386 = vmatpush1.xpose.msra.mxu0 0.0
        %387 = vmatprep.subr.mxu0 0.0
        %388 = vmatpush1.xpose.msra.mxu0 0.0
        %389 = vmatprep.subr.mxu0 0.0
        %390 = vmatpush1.xpose.msra.mxu0 0.0
        %391 = vmatprep.subr.mxu0 0.0
        %392 = vmatpush1.xpose.msra.mxu0 0.0
        %393 = vmatprep.subr.mxu0 0.0
        %394 = vmatpush1.xpose.msra.mxu0 0.0
        %395 = vmatprep.subr.mxu0 0.0
        %396 = vmatpush1.xpose.msra.mxu0 0.0
        %397 = vmatprep.subr.mxu0 0.0
        %398 = vmatpush1.xpose.msra.mxu0 0.0
        %399 = vmatprep.subr.mxu0 0.0
        %400 = vmatpush1.xpose.msra.mxu0 0.0
        %401 = vmatprep.mubr.f32.mxu0 0.0
        %402 = vmatmul.mubr.f32.gmra.mrb[0].mxu0 %v333
        %v403 = vpop.f32.mrb[0].mxu0
        %v404 = vadd.f32 0.0, %v403
        %v405 = vpop.f32.mrb[0].mxu0
        %406 = vdwg.mxu0
        %408 = vrot.lane.b32.xlu0 %v325, 96
        %v409 = vpop.permute.xlu0 %408
        %v410 = vsel %vm332, %v325, 0
        %v412 = vsel %vm332, %v409, 0
        %414 = vmatprep.subr.mxu0 0.0
        %415 = vmatpush1.xpose.msra.mxu0 %v412
        %416 = vmatprep.subr.mxu0 0.0
        %417 = vmatpush1.xpose.msra.mxu0 0.0
        %418 = vmatprep.subr.mxu0 0.0
        %419 = vmatpush1.xpose.msra.mxu0 0.0
        %420 = vmatprep.subr.mxu0 0.0
        %421 = vmatpush1.xpose.msra.mxu0 0.0
        %422 = vmatprep.subr.mxu0 0.0
        %423 = vmatpush1.xpose.msra.mxu0 0.0
        %424 = vmatprep.subr.mxu0 0.0
        %425 = vmatpush1.xpose.msra.mxu0 0.0
        %426 = vmatprep.subr.mxu0 0.0
        %427 = vmatpush1.xpose.msra.mxu0 0.0
        %428 = vmatprep.subr.mxu0 0.0
        %429 = vmatpush1.xpose.msra.mxu0 0.0
        %430 = vmatprep.subr.mxu0 0.0
        %431 = vmatpush1.xpose.msra.mxu0 0.0
        %432 = vmatprep.subr.mxu0 0.0
        %433 = vmatpush1.xpose.msra.mxu0 0.0
        %434 = vmatprep.subr.mxu0 0.0
        %435 = vmatpush1.xpose.msra.mxu0 0.0
        %436 = vmatprep.subr.mxu0 0.0
        %437 = vmatpush1.xpose.msra.mxu0 0.0
        %438 = vmatprep.subr.mxu0 0.0
        %439 = vmatpush1.xpose.msra.mxu0 0.0
        %440 = vmatprep.subr.mxu0 0.0
        %441 = vmatpush1.xpose.msra.mxu0 0.0
        %442 = vmatprep.subr.mxu0 0.0
        %443 = vmatpush1.xpose.msra.mxu0 0.0
        %444 = vmatprep.subr.mxu0 0.0
        %445 = vmatpush1.xpose.msra.mxu0 0.0
        %446 = vmatprep.subr.mxu0 0.0
        %447 = vmatpush1.xpose.msra.mxu0 0.0
        %448 = vmatprep.subr.mxu0 0.0
        %449 = vmatpush1.xpose.msra.mxu0 0.0
        %450 = vmatprep.subr.mxu0 0.0
        %451 = vmatpush1.xpose.msra.mxu0 0.0
        %452 = vmatprep.subr.mxu0 0.0
        %453 = vmatpush1.xpose.msra.mxu0 0.0
        %454 = vmatprep.subr.mxu0 0.0
        %455 = vmatpush1.xpose.msra.mxu0 0.0
        %456 = vmatprep.subr.mxu0 0.0
        %457 = vmatpush1.xpose.msra.mxu0 0.0
        %458 = vmatprep.subr.mxu0 0.0
        %459 = vmatpush1.xpose.msra.mxu0 0.0
        %460 = vmatprep.subr.mxu0 0.0
        %461 = vmatpush1.xpose.msra.mxu0 0.0
        %462 = vmatprep.subr.mxu0 0.0
        %463 = vmatpush1.xpose.msra.mxu0 0.0
        %464 = vmatprep.subr.mxu0 0.0
        %465 = vmatpush1.xpose.msra.mxu0 0.0
        %466 = vmatprep.subr.mxu0 0.0
        %467 = vmatpush1.xpose.msra.mxu0 0.0
        %468 = vmatprep.subr.mxu0 0.0
        %469 = vmatpush1.xpose.msra.mxu0 0.0
        %470 = vmatprep.subr.mxu0 0.0
        %471 = vmatpush1.xpose.msra.mxu0 0.0
        %472 = vmatprep.subr.mxu0 0.0
        %473 = vmatpush1.xpose.msra.mxu0 0.0
        %474 = vmatprep.subr.mxu0 0.0
        %475 = vmatpush1.xpose.msra.mxu0 0.0
        %476 = vmatprep.subr.mxu0 0.0
        %477 = vmatpush1.xpose.msra.mxu0 0.0
        %478 = vmatprep.mubr.f32.mxu0 0.0
        %479 = vmatmul.mubr.f32.gmra.mrb[0].mxu0 %v410
        %v480 = vpop.f32.mrb[0].mxu0
        %v481 = vadd.f32 0.0, %v480
        %v482 = vpop.f32.mrb[0].mxu0
        %483 = vdwg.mxu0
        %485 = vrot.lane.b32.xlu0 %v326, 96
        %v486 = vpop.permute.xlu0 %485
        %v487 = vsel %vm332, %v326, 0
        %v489 = vsel %vm332, %v486, 0
        %491 = vmatprep.subr.mxu0 0.0
        %492 = vmatpush1.xpose.msra.mxu0 %v489
        %493 = vmatprep.subr.mxu0 0.0
        %494 = vmatpush1.xpose.msra.mxu0 0.0
        %495 = vmatprep.subr.mxu0 0.0
        %496 = vmatpush1.xpose.msra.mxu0 0.0
        %497 = vmatprep.subr.mxu0 0.0
        %498 = vmatpush1.xpose.msra.mxu0 0.0
        %499 = vmatprep.subr.mxu0 0.0
        %500 = vmatpush1.xpose.msra.mxu0 0.0
        %501 = vmatprep.subr.mxu0 0.0
        %502 = vmatpush1.xpose.msra.mxu0 0.0
        %503 = vmatprep.subr.mxu0 0.0
        %504 = vmatpush1.xpose.msra.mxu0 0.0
        %505 = vmatprep.subr.mxu0 0.0
        %506 = vmatpush1.xpose.msra.mxu0 0.0
        %507 = vmatprep.subr.mxu0 0.0
        %508 = vmatpush1.xpose.msra.mxu0 0.0
        %509 = vmatprep.subr.mxu0 0.0
        %510 = vmatpush1.xpose.msra.mxu0 0.0
        %511 = vmatprep.subr.mxu0 0.0
        %512 = vmatpush1.xpose.msra.mxu0 0.0
        %513 = vmatprep.subr.mxu0 0.0
        %514 = vmatpush1.xpose.msra.mxu0 0.0
        %515 = vmatprep.subr.mxu0 0.0
        %516 = vmatpush1.xpose.msra.mxu0 0.0
        %517 = vmatprep.subr.mxu0 0.0
        %518 = vmatpush1.xpose.msra.mxu0 0.0
        %519 = vmatprep.subr.mxu0 0.0
        %520 = vmatpush1.xpose.msra.mxu0 0.0
        %521 = vmatprep.subr.mxu0 0.0
        %522 = vmatpush1.xpose.msra.mxu0 0.0
        %523 = vmatprep.subr.mxu0 0.0
        %524 = vmatpush1.xpose.msra.mxu0 0.0
        %525 = vmatprep.subr.mxu0 0.0
        %526 = vmatpush1.xpose.msra.mxu0 0.0
        %527 = vmatprep.subr.mxu0 0.0
        %528 = vmatpush1.xpose.msra.mxu0 0.0
        %529 = vmatprep.subr.mxu0 0.0
        %530 = vmatpush1.xpose.msra.mxu0 0.0
        %531 = vmatprep.subr.mxu0 0.0
        %532 = vmatpush1.xpose.msra.mxu0 0.0
        %533 = vmatprep.subr.mxu0 0.0
        %534 = vmatpush1.xpose.msra.mxu0 0.0
        %535 = vmatprep.subr.mxu0 0.0
        %536 = vmatpush1.xpose.msra.mxu0 0.0
        %537 = vmatprep.subr.mxu0 0.0
        %538 = vmatpush1.xpose.msra.mxu0 0.0
        %539 = vmatprep.subr.mxu0 0.0
        %540 = vmatpush1.xpose.msra.mxu0 0.0
        %541 = vmatprep.subr.mxu0 0.0
        %542 = vmatpush1.xpose.msra.mxu0 0.0
        %543 = vmatprep.subr.mxu0 0.0
        %544 = vmatpush1.xpose.msra.mxu0 0.0
        %545 = vmatprep.subr.mxu0 0.0
        %546 = vmatpush1.xpose.msra.mxu0 0.0
        %547 = vmatprep.subr.mxu0 0.0
        %548 = vmatpush1.xpose.msra.mxu0 0.0
        %549 = vmatprep.subr.mxu0 0.0
        %550 = vmatpush1.xpose.msra.mxu0 0.0
        %551 = vmatprep.subr.mxu0 0.0
        %552 = vmatpush1.xpose.msra.mxu0 0.0
        %553 = vmatprep.subr.mxu0 0.0
        %554 = vmatpush1.xpose.msra.mxu0 0.0
        %555 = vmatprep.mubr.f32.mxu0 0.0
        %556 = vmatmul.mubr.f32.gmra.mrb[0].mxu0 %v487
        %v557 = vpop.f32.mrb[0].mxu0
        %v558 = vadd.f32 0.0, %v557
        %v559 = vpop.f32.mrb[0].mxu0
        %560 = vdwg.mxu0
        %562 = vrot.lane.b32.xlu0 %v327, 96
        %v563 = vpop.permute.xlu0 %562
        %v564 = vsel %vm332, %v327, 0
        %v566 = vsel %vm332, %v563, 0
        %568 = vmatprep.subr.mxu0 0.0
        %569 = vmatpush1.xpose.msra.mxu0 %v566
        %570 = vmatprep.subr.mxu0 0.0
        %571 = vmatpush1.xpose.msra.mxu0 0.0
        %572 = vmatprep.subr.mxu0 0.0
        %573 = vmatpush1.xpose.msra.mxu0 0.0
        %574 = vmatprep.subr.mxu0 0.0
        %575 = vmatpush1.xpose.msra.mxu0 0.0
        %576 = vmatprep.subr.mxu0 0.0
        %577 = vmatpush1.xpose.msra.mxu0 0.0
        %578 = vmatprep.subr.mxu0 0.0
        %579 = vmatpush1.xpose.msra.mxu0 0.0
        %580 = vmatprep.subr.mxu0 0.0
        %581 = vmatpush1.xpose.msra.mxu0 0.0
        %582 = vmatprep.subr.mxu0 0.0
        %583 = vmatpush1.xpose.msra.mxu0 0.0
        %584 = vmatprep.subr.mxu0 0.0
        %585 = vmatpush1.xpose.msra.mxu0 0.0
        %586 = vmatprep.subr.mxu0 0.0
        %587 = vmatpush1.xpose.msra.mxu0 0.0
        %588 = vmatprep.subr.mxu0 0.0
        %589 = vmatpush1.xpose.msra.mxu0 0.0
        %590 = vmatprep.subr.mxu0 0.0
        %591 = vmatpush1.xpose.msra.mxu0 0.0
        %592 = vmatprep.subr.mxu0 0.0
        %593 = vmatpush1.xpose.msra.mxu0 0.0
        %594 = vmatprep.subr.mxu0 0.0
        %595 = vmatpush1.xpose.msra.mxu0 0.0
        %596 = vmatprep.subr.mxu0 0.0
        %597 = vmatpush1.xpose.msra.mxu0 0.0
        %598 = vmatprep.subr.mxu0 0.0
        %599 = vmatpush1.xpose.msra.mxu0 0.0
        %600 = vmatprep.subr.mxu0 0.0
        %601 = vmatpush1.xpose.msra.mxu0 0.0
        %602 = vmatprep.subr.mxu0 0.0
        %603 = vmatpush1.xpose.msra.mxu0 0.0
        %604 = vmatprep.subr.mxu0 0.0
        %605 = vmatpush1.xpose.msra.mxu0 0.0
        %606 = vmatprep.subr.mxu0 0.0
        %607 = vmatpush1.xpose.msra.mxu0 0.0
        %608 = vmatprep.subr.mxu0 0.0
        %609 = vmatpush1.xpose.msra.mxu0 0.0
        %610 = vmatprep.subr.mxu0 0.0
        %611 = vmatpush1.xpose.msra.mxu0 0.0
        %612 = vmatprep.subr.mxu0 0.0
        %613 = vmatpush1.xpose.msra.mxu0 0.0
        %614 = vmatprep.subr.mxu0 0.0
        %615 = vmatpush1.xpose.msra.mxu0 0.0
        %616 = vmatprep.subr.mxu0 0.0
        %617 = vmatpush1.xpose.msra.mxu0 0.0
        %618 = vmatprep.subr.mxu0 0.0
        %619 = vmatpush1.xpose.msra.mxu0 0.0
        %620 = vmatprep.subr.mxu0 0.0
        %621 = vmatpush1.xpose.msra.mxu0 0.0
        %622 = vmatprep.subr.mxu0 0.0
        %623 = vmatpush1.xpose.msra.mxu0 0.0
        %624 = vmatprep.subr.mxu0 0.0
        %625 = vmatpush1.xpose.msra.mxu0 0.0
        %626 = vmatprep.subr.mxu0 0.0
        %627 = vmatpush1.xpose.msra.mxu0 0.0
        %628 = vmatprep.subr.mxu0 0.0
        %629 = vmatpush1.xpose.msra.mxu0 0.0
        %630 = vmatprep.subr.mxu0 0.0
        %631 = vmatpush1.xpose.msra.mxu0 0.0
        %632 = vmatprep.mubr.f32.mxu0 0.0
        %633 = vmatmul.mubr.f32.gmra.mrb[0].mxu0 %v564
        %v634 = vpop.f32.mrb[0].mxu0
        %v635 = vadd.f32 0.0, %v634
        %v636 = vpop.f32.mrb[0].mxu0
        %637 = vdwg.mxu0
        %639 = vrot.lane.b32.xlu0 %v328, 96
        %v640 = vpop.permute.xlu0 %639
        %v641 = vsel %vm332, %v328, 0
        %v643 = vsel %vm332, %v640, 0
        %645 = vmatprep.subr.mxu0 0.0
        %646 = vmatpush1.xpose.msra.mxu0 %v643
        %647 = vmatprep.subr.mxu0 0.0
        %648 = vmatpush1.xpose.msra.mxu0 0.0
        %649 = vmatprep.subr.mxu0 0.0
        %650 = vmatpush1.xpose.msra.mxu0 0.0
        %651 = vmatprep.subr.mxu0 0.0
        %652 = vmatpush1.xpose.msra.mxu0 0.0
        %653 = vmatprep.subr.mxu0 0.0
        %654 = vmatpush1.xpose.msra.mxu0 0.0
        %655 = vmatprep.subr.mxu0 0.0
        %656 = vmatpush1.xpose.msra.mxu0 0.0
        %657 = vmatprep.subr.mxu0 0.0
        %658 = vmatpush1.xpose.msra.mxu0 0.0
        %659 = vmatprep.subr.mxu0 0.0
        %660 = vmatpush1.xpose.msra.mxu0 0.0
        %661 = vmatprep.subr.mxu0 0.0
        %662 = vmatpush1.xpose.msra.mxu0 0.0
        %663 = vmatprep.subr.mxu0 0.0
        %664 = vmatpush1.xpose.msra.mxu0 0.0
        %665 = vmatprep.subr.mxu0 0.0
        %666 = vmatpush1.xpose.msra.mxu0 0.0
        %667 = vmatprep.subr.mxu0 0.0
        %668 = vmatpush1.xpose.msra.mxu0 0.0
        %669 = vmatprep.subr.mxu0 0.0
        %670 = vmatpush1.xpose.msra.mxu0 0.0
        %671 = vmatprep.subr.mxu0 0.0
        %672 = vmatpush1.xpose.msra.mxu0 0.0
        %673 = vmatprep.subr.mxu0 0.0
        %674 = vmatpush1.xpose.msra.mxu0 0.0
        %675 = vmatprep.subr.mxu0 0.0
        %676 = vmatpush1.xpose.msra.mxu0 0.0
        %677 = vmatprep.subr.mxu0 0.0
        %678 = vmatpush1.xpose.msra.mxu0 0.0
        %679 = vmatprep.subr.mxu0 0.0
        %680 = vmatpush1.xpose.msra.mxu0 0.0
        %681 = vmatprep.subr.mxu0 0.0
        %682 = vmatpush1.xpose.msra.mxu0 0.0
        %683 = vmatprep.subr.mxu0 0.0
        %684 = vmatpush1.xpose.msra.mxu0 0.0
        %685 = vmatprep.subr.mxu0 0.0
        %686 = vmatpush1.xpose.msra.mxu0 0.0
        %687 = vmatprep.subr.mxu0 0.0
        %688 = vmatpush1.xpose.msra.mxu0 0.0
        %689 = vmatprep.subr.mxu0 0.0
        %690 = vmatpush1.xpose.msra.mxu0 0.0
        %691 = vmatprep.subr.mxu0 0.0
        %692 = vmatpush1.xpose.msra.mxu0 0.0
        %693 = vmatprep.subr.mxu0 0.0
        %694 = vmatpush1.xpose.msra.mxu0 0.0
        %695 = vmatprep.subr.mxu0 0.0
        %696 = vmatpush1.xpose.msra.mxu0 0.0
        %697 = vmatprep.subr.mxu0 0.0
        %698 = vmatpush1.xpose.msra.mxu0 0.0
        %699 = vmatprep.subr.mxu0 0.0
        %700 = vmatpush1.xpose.msra.mxu0 0.0
        %701 = vmatprep.subr.mxu0 0.0
        %702 = vmatpush1.xpose.msra.mxu0 0.0
        %703 = vmatprep.subr.mxu0 0.0
        %704 = vmatpush1.xpose.msra.mxu0 0.0
        %705 = vmatprep.subr.mxu0 0.0
        %706 = vmatpush1.xpose.msra.mxu0 0.0
        %707 = vmatprep.subr.mxu0 0.0
        %708 = vmatpush1.xpose.msra.mxu0 0.0
        %709 = vmatprep.mubr.f32.mxu0 0.0
        %710 = vmatmul.mubr.f32.gmra.mrb[0].mxu0 %v641
        %v711 = vpop.f32.mrb[0].mxu0
        %v712 = vadd.f32 0.0, %v711
        %v713 = vpop.f32.mrb[0].mxu0
        %714 = vdwg.mxu0
        %v715 = vsel %vm332, %v404, -inf
        %716 = vmax.xlane.f32.xlu0 %v715
        %v717 = vpop.xlane.xlu0 %716
        %v718 = vsel %vm332, %v481, -inf
        %719 = vmax.xlane.f32.xlu0 %v718
        %v720 = vpop.xlane.xlu0 %719
        %v721 = vsel %vm332, %v558, -inf
        %722 = vmax.xlane.f32.xlu0 %v721
        %v723 = vpop.xlane.xlu0 %722
        %v724 = vsel %vm332, %v635, -inf
        %725 = vmax.xlane.f32.xlu0 %v724
        %v726 = vpop.xlane.xlu0 %725
        %v727 = vsel %vm332, %v712, -inf
        %728 = vmax.xlane.f32.xlu0 %v727
        %v729 = vpop.xlane.xlu0 %728
        %v730 = vsub.f32 %v404, %v717
        %v731 = vsub.f32 %v481, %v720
        %v732 = vsub.f32 %v558, %v723
        %v733 = vsub.f32 %v635, %v726
        %v734 = vsub.f32 %v712, %v729
        %v735 = vmul.f32 %v730, 1.442695
        %v736 = vpow.pop %v735
        %v737 = vmul.f32 %v731, 1.442695
        %v738 = vpow.pop %v737
        %v739 = vmul.f32 %v732, 1.442695
        %v740 = vpow.pop %v739
        %v741 = vmul.f32 %v733, 1.442695
        %v742 = vpow.pop %v741
        %v743 = vmul.f32 %v734, 1.442695
        %v744 = vpow.pop %v743
        %v745 = vsel %vm332, %v736, 0.0
        %746 = vadd.xlane.f32.xlu0 %v745
        %v747 = vpop.xlane.xlu0 %746
        %v748 = vsel %vm332, %v738, 0.0
        %749 = vadd.xlane.f32.xlu0 %v748
        %v750 = vpop.xlane.xlu0 %749
        %v751 = vsel %vm332, %v740, 0.0
        %752 = vadd.xlane.f32.xlu0 %v751
        %v753 = vpop.xlane.xlu0 %752
        %v754 = vsel %vm332, %v742, 0.0
        %755 = vadd.xlane.f32.xlu0 %v754
        %v756 = vpop.xlane.xlu0 %755
        %v757 = vsel %vm332, %v744, 0.0
        %758 = vadd.xlane.f32.xlu0 %v757
        %v759 = vpop.xlane.xlu0 %758
        %v760 = vrcp.pop %v747
        %v761 = vrcp.pop %v750
        %v762 = vrcp.pop %v753
        %v763 = vrcp.pop %v756
        %v764 = vrcp.pop %v759
        %v765 = vmul.f32 %v736, %v760
        %v766 = vmul.f32 %v738, %v761
        %v767 = vmul.f32 %v740, %v762
        %v768 = vmul.f32 %v742, %v763
        %v769 = vmul.f32 %v744, %v764
        %770 = vrot.lane.b32.xlu0 %v324, 64
        %v771 = vpop.permute.xlu0 %770
        %v774 = vsel %vm332, %v765, 0
        %776 = vmatprep.subr.mxu0 0.0
        %777 = vmatpush1.msra.mxu0 %v771
        %778 = vmatprep.subr.mxu0 0.0
        %779 = vmatpush1.msra.mxu0 0.0
        %780 = vmatprep.subr.mxu0 0.0
        %781 = vmatpush1.msra.mxu0 0.0
        %782 = vmatprep.subr.mxu0 0.0
        %783 = vmatpush1.msra.mxu0 0.0
        %784 = vmatprep.subr.mxu0 0.0
        %785 = vmatpush1.msra.mxu0 0.0
        %786 = vmatprep.subr.mxu0 0.0
        %787 = vmatpush1.msra.mxu0 0.0
        %788 = vmatprep.subr.mxu0 0.0
        %789 = vmatpush1.msra.mxu0 0.0
        %790 = vmatprep.subr.mxu0 0.0
        %791 = vmatpush1.msra.mxu0 0.0
        %792 = vmatprep.subr.mxu0 0.0
        %793 = vmatpush1.msra.mxu0 0.0
        %794 = vmatprep.subr.mxu0 0.0
        %795 = vmatpush1.msra.mxu0 0.0
        %796 = vmatprep.subr.mxu0 0.0
        %797 = vmatpush1.msra.mxu0 0.0
        %798 = vmatprep.subr.mxu0 0.0
        %799 = vmatpush1.msra.mxu0 0.0
        %800 = vmatprep.subr.mxu0 0.0
        %801 = vmatpush1.msra.mxu0 0.0
        %802 = vmatprep.subr.mxu0 0.0
        %803 = vmatpush1.msra.mxu0 0.0
        %804 = vmatprep.subr.mxu0 0.0
        %805 = vmatpush1.msra.mxu0 0.0
        %806 = vmatprep.subr.mxu0 0.0
        %807 = vmatpush1.msra.mxu0 0.0
        %808 = vmatprep.subr.mxu0 0.0
        %809 = vmatpush1.msra.mxu0 0.0
        %810 = vmatprep.subr.mxu0 0.0
        %811 = vmatpush1.msra.mxu0 0.0
        %812 = vmatprep.subr.mxu0 0.0
        %813 = vmatpush1.msra.mxu0 0.0
        %814 = vmatprep.subr.mxu0 0.0
        %815 = vmatpush1.msra.mxu0 0.0
        %816 = vmatprep.subr.mxu0 0.0
        %817 = vmatpush1.msra.mxu0 0.0
        %818 = vmatprep.subr.mxu0 0.0
        %819 = vmatpush1.msra.mxu0 0.0
        %820 = vmatprep.subr.mxu0 0.0
        %821 = vmatpush1.msra.mxu0 0.0
        %822 = vmatprep.subr.mxu0 0.0
        %823 = vmatpush1.msra.mxu0 0.0
        %824 = vmatprep.subr.mxu0 0.0
        %825 = vmatpush1.msra.mxu0 0.0
        %826 = vmatprep.subr.mxu0 0.0
        %827 = vmatpush1.msra.mxu0 0.0
        %828 = vmatprep.subr.mxu0 0.0
        %829 = vmatpush1.msra.mxu0 0.0
        %830 = vmatprep.subr.mxu0 0.0
        %831 = vmatpush1.msra.mxu0 0.0
        %832 = vmatprep.subr.mxu0 0.0
        %833 = vmatpush1.msra.mxu0 0.0
        %834 = vmatprep.subr.mxu0 0.0
        %835 = vmatpush1.msra.mxu0 0.0
        %836 = vmatprep.subr.mxu0 0.0
        %837 = vmatpush1.msra.mxu0 0.0
        %838 = vmatprep.subr.mxu0 0.0
        %839 = vmatpush1.msra.mxu0 0.0
        %840 = vmatprep.mubr.f32.mxu0 0.0
        %841 = vmatmul.mubr.f32.gmra.mrb[0].mxu0 %v774
        %v842 = vpop.f32.mrb[0].mxu0
        %v843 = vadd.f32 0.0, %v842
        %v844 = vpop.f32.mrb[0].mxu0
        %845 = vdwg.mxu0
        %846 = vrot.lane.b32.xlu0 %v325, 64
        %v847 = vpop.permute.xlu0 %846
        %v850 = vsel %vm332, %v766, 0
        %852 = vmatprep.subr.mxu0 0.0
        %853 = vmatpush1.msra.mxu0 %v847
        %854 = vmatprep.subr.mxu0 0.0
        %855 = vmatpush1.msra.mxu0 0.0
        %856 = vmatprep.subr.mxu0 0.0
        %857 = vmatpush1.msra.mxu0 0.0
        %858 = vmatprep.subr.mxu0 0.0
        %859 = vmatpush1.msra.mxu0 0.0
        %860 = vmatprep.subr.mxu0 0.0
        %861 = vmatpush1.msra.mxu0 0.0
        %862 = vmatprep.subr.mxu0 0.0
        %863 = vmatpush1.msra.mxu0 0.0
        %864 = vmatprep.subr.mxu0 0.0
        %865 = vmatpush1.msra.mxu0 0.0
        %866 = vmatprep.subr.mxu0 0.0
        %867 = vmatpush1.msra.mxu0 0.0
        %868 = vmatprep.subr.mxu0 0.0
        %869 = vmatpush1.msra.mxu0 0.0
        %870 = vmatprep.subr.mxu0 0.0
        %871 = vmatpush1.msra.mxu0 0.0
        %872 = vmatprep.subr.mxu0 0.0
        %873 = vmatpush1.msra.mxu0 0.0
        %874 = vmatprep.subr.mxu0 0.0
        %875 = vmatpush1.msra.mxu0 0.0
        %876 = vmatprep.subr.mxu0 0.0
        %877 = vmatpush1.msra.mxu0 0.0
        %878 = vmatprep.subr.mxu0 0.0
        %879 = vmatpush1.msra.mxu0 0.0
        %880 = vmatprep.subr.mxu0 0.0
        %881 = vmatpush1.msra.mxu0 0.0
        %882 = vmatprep.subr.mxu0 0.0
        %883 = vmatpush1.msra.mxu0 0.0
        %884 = vmatprep.subr.mxu0 0.0
        %885 = vmatpush1.msra.mxu0 0.0
        %886 = vmatprep.subr.mxu0 0.0
        %887 = vmatpush1.msra.mxu0 0.0
        %888 = vmatprep.subr.mxu0 0.0
        %889 = vmatpush1.msra.mxu0 0.0
        %890 = vmatprep.subr.mxu0 0.0
        %891 = vmatpush1.msra.mxu0 0.0
        %892 = vmatprep.subr.mxu0 0.0
        %893 = vmatpush1.msra.mxu0 0.0
        %894 = vmatprep.subr.mxu0 0.0
        %895 = vmatpush1.msra.mxu0 0.0
        %896 = vmatprep.subr.mxu0 0.0
        %897 = vmatpush1.msra.mxu0 0.0
        %898 = vmatprep.subr.mxu0 0.0
        %899 = vmatpush1.msra.mxu0 0.0
        %900 = vmatprep.subr.mxu0 0.0
        %901 = vmatpush1.msra.mxu0 0.0
        %902 = vmatprep.subr.mxu0 0.0
        %903 = vmatpush1.msra.mxu0 0.0
        %904 = vmatprep.subr.mxu0 0.0
        %905 = vmatpush1.msra.mxu0 0.0
        %906 = vmatprep.subr.mxu0 0.0
        %907 = vmatpush1.msra.mxu0 0.0
        %908 = vmatprep.subr.mxu0 0.0
        %909 = vmatpush1.msra.mxu0 0.0
        %910 = vmatprep.subr.mxu0 0.0
        %911 = vmatpush1.msra.mxu0 0.0
        %912 = vmatprep.subr.mxu0 0.0
        %913 = vmatpush1.msra.mxu0 0.0
        %914 = vmatprep.subr.mxu0 0.0
        %915 = vmatpush1.msra.mxu0 0.0
        %916 = vmatprep.mubr.f32.mxu0 0.0
        %917 = vmatmul.mubr.f32.gmra.mrb[0].mxu0 %v850
        %v918 = vpop.f32.mrb[0].mxu0
        %v919 = vadd.f32 0.0, %v918
        %v920 = vpop.f32.mrb[0].mxu0
        %921 = vdwg.mxu0
        %922 = vrot.lane.b32.xlu0 %v326, 64
        %v923 = vpop.permute.xlu0 %922
        %v926 = vsel %vm332, %v767, 0
        %928 = vmatprep.subr.mxu0 0.0
        %929 = vmatpush1.msra.mxu0 %v923
        %930 = vmatprep.subr.mxu0 0.0
        %931 = vmatpush1.msra.mxu0 0.0
        %932 = vmatprep.subr.mxu0 0.0
        %933 = vmatpush1.msra.mxu0 0.0
        %934 = vmatprep.subr.mxu0 0.0
        %935 = vmatpush1.msra.mxu0 0.0
        %936 = vmatprep.subr.mxu0 0.0
        %937 = vmatpush1.msra.mxu0 0.0
        %938 = vmatprep.subr.mxu0 0.0
        %939 = vmatpush1.msra.mxu0 0.0
        %940 = vmatprep.subr.mxu0 0.0
        %941 = vmatpush1.msra.mxu0 0.0
        %942 = vmatprep.subr.mxu0 0.0
        %943 = vmatpush1.msra.mxu0 0.0
        %944 = vmatprep.subr.mxu0 0.0
        %945 = vmatpush1.msra.mxu0 0.0
        %946 = vmatprep.subr.mxu0 0.0
        %947 = vmatpush1.msra.mxu0 0.0
        %948 = vmatprep.subr.mxu0 0.0
        %949 = vmatpush1.msra.mxu0 0.0
        %950 = vmatprep.subr.mxu0 0.0
        %951 = vmatpush1.msra.mxu0 0.0
        %952 = vmatprep.subr.mxu0 0.0
        %953 = vmatpush1.msra.mxu0 0.0
        %954 = vmatprep.subr.mxu0 0.0
        %955 = vmatpush1.msra.mxu0 0.0
        %956 = vmatprep.subr.mxu0 0.0
        %957 = vmatpush1.msra.mxu0 0.0
        %958 = vmatprep.subr.mxu0 0.0
        %959 = vmatpush1.msra.mxu0 0.0
        %960 = vmatprep.subr.mxu0 0.0
        %961 = vmatpush1.msra.mxu0 0.0
        %962 = vmatprep.subr.mxu0 0.0
        %963 = vmatpush1.msra.mxu0 0.0
        %964 = vmatprep.subr.mxu0 0.0
        %965 = vmatpush1.msra.mxu0 0.0
        %966 = vmatprep.subr.mxu0 0.0
        %967 = vmatpush1.msra.mxu0 0.0
        %968 = vmatprep.subr.mxu0 0.0
        %969 = vmatpush1.msra.mxu0 0.0
        %970 = vmatprep.subr.mxu0 0.0
        %971 = vmatpush1.msra.mxu0 0.0
        %972 = vmatprep.subr.mxu0 0.0
        %973 = vmatpush1.msra.mxu0 0.0
        %974 = vmatprep.subr.mxu0 0.0
        %975 = vmatpush1.msra.mxu0 0.0
        %976 = vmatprep.subr.mxu0 0.0
        %977 = vmatpush1.msra.mxu0 0.0
        %978 = vmatprep.subr.mxu0 0.0
        %979 = vmatpush1.msra.mxu0 0.0
        %980 = vmatprep.subr.mxu0 0.0
        %981 = vmatpush1.msra.mxu0 0.0
        %982 = vmatprep.subr.mxu0 0.0
        %983 = vmatpush1.msra.mxu0 0.0
        %984 = vmatprep.subr.mxu0 0.0
        %985 = vmatpush1.msra.mxu0 0.0
        %986 = vmatprep.subr.mxu0 0.0
        %987 = vmatpush1.msra.mxu0 0.0
        %988 = vmatprep.subr.mxu0 0.0
        %989 = vmatpush1.msra.mxu0 0.0
        %990 = vmatprep.subr.mxu0 0.0
        %991 = vmatpush1.msra.mxu0 0.0
        %992 = vmatprep.mubr.f32.mxu0 0.0
        %993 = vmatmul.mubr.f32.gmra.mrb[0].mxu0 %v926
        %v994 = vpop.f32.mrb[0].mxu0
        %v995 = vadd.f32 0.0, %v994
        %v996 = vpop.f32.mrb[0].mxu0
        %997 = vdwg.mxu0
        %998 = vrot.lane.b32.xlu0 %v327, 64
        %v999 = vpop.permute.xlu0 %998
        %v1002 = vsel %vm332, %v768, 0
        %1004 = vmatprep.subr.mxu0 0.0
        %1005 = vmatpush1.msra.mxu0 %v999
        %1006 = vmatprep.subr.mxu0 0.0
        %1007 = vmatpush1.msra.mxu0 0.0
        %1008 = vmatprep.subr.mxu0 0.0
        %1009 = vmatpush1.msra.mxu0 0.0
        %1010 = vmatprep.subr.mxu0 0.0
        %1011 = vmatpush1.msra.mxu0 0.0
        %1012 = vmatprep.subr.mxu0 0.0
        %1013 = vmatpush1.msra.mxu0 0.0
        %1014 = vmatprep.subr.mxu0 0.0
        %1015 = vmatpush1.msra.mxu0 0.0
        %1016 = vmatprep.subr.mxu0 0.0
        %1017 = vmatpush1.msra.mxu0 0.0
        %1018 = vmatprep.subr.mxu0 0.0
        %1019 = vmatpush1.msra.mxu0 0.0
        %1020 = vmatprep.subr.mxu0 0.0
        %1021 = vmatpush1.msra.mxu0 0.0
        %1022 = vmatprep.subr.mxu0 0.0
        %1023 = vmatpush1.msra.mxu0 0.0
        %1024 = vmatprep.subr.mxu0 0.0
        %1025 = vmatpush1.msra.mxu0 0.0
        %1026 = vmatprep.subr.mxu0 0.0
        %1027 = vmatpush1.msra.mxu0 0.0
        %1028 = vmatprep.subr.mxu0 0.0
        %1029 = vmatpush1.msra.mxu0 0.0
        %1030 = vmatprep.subr.mxu0 0.0
        %1031 = vmatpush1.msra.mxu0 0.0
        %1032 = vmatprep.subr.mxu0 0.0
        %1033 = vmatpush1.msra.mxu0 0.0
        %1034 = vmatprep.subr.mxu0 0.0
        %1035 = vmatpush1.msra.mxu0 0.0
        %1036 = vmatprep.subr.mxu0 0.0
        %1037 = vmatpush1.msra.mxu0 0.0
        %1038 = vmatprep.subr.mxu0 0.0
        %1039 = vmatpush1.msra.mxu0 0.0
        %1040 = vmatprep.subr.mxu0 0.0
        %1041 = vmatpush1.msra.mxu0 0.0
        %1042 = vmatprep.subr.mxu0 0.0
        %1043 = vmatpush1.msra.mxu0 0.0
        %1044 = vmatprep.subr.mxu0 0.0
        %1045 = vmatpush1.msra.mxu0 0.0
        %1046 = vmatprep.subr.mxu0 0.0
        %1047 = vmatpush1.msra.mxu0 0.0
        %1048 = vmatprep.subr.mxu0 0.0
        %1049 = vmatpush1.msra.mxu0 0.0
        %1050 = vmatprep.subr.mxu0 0.0
        %1051 = vmatpush1.msra.mxu0 0.0
        %1052 = vmatprep.subr.mxu0 0.0
        %1053 = vmatpush1.msra.mxu0 0.0
        %1054 = vmatprep.subr.mxu0 0.0
        %1055 = vmatpush1.msra.mxu0 0.0
        %1056 = vmatprep.subr.mxu0 0.0
        %1057 = vmatpush1.msra.mxu0 0.0
        %1058 = vmatprep.subr.mxu0 0.0
        %1059 = vmatpush1.msra.mxu0 0.0
        %1060 = vmatprep.subr.mxu0 0.0
        %1061 = vmatpush1.msra.mxu0 0.0
        %1062 = vmatprep.subr.mxu0 0.0
        %1063 = vmatpush1.msra.mxu0 0.0
        %1064 = vmatprep.subr.mxu0 0.0
        %1065 = vmatpush1.msra.mxu0 0.0
        %1066 = vmatprep.subr.mxu0 0.0
        %1067 = vmatpush1.msra.mxu0 0.0
        %1068 = vmatprep.mubr.f32.mxu0 0.0
        %1069 = vmatmul.mubr.f32.gmra.mrb[0].mxu0 %v1002
        %v1070 = vpop.f32.mrb[0].mxu0
        %v1071 = vadd.f32 0.0, %v1070
        %v1072 = vpop.f32.mrb[0].mxu0
        %1073 = vdwg.mxu0
        %1074 = vrot.lane.b32.xlu0 %v328, 64
        %v1075 = vpop.permute.xlu0 %1074
        %v1078 = vsel %vm332, %v769, 0
        %1080 = vmatprep.subr.mxu0 0.0
        %1081 = vmatpush1.msra.mxu0 %v1075
        %1082 = vmatprep.subr.mxu0 0.0
        %1083 = vmatpush1.msra.mxu0 0.0
        %1084 = vmatprep.subr.mxu0 0.0
        %1085 = vmatpush1.msra.mxu0 0.0
        %1086 = vmatprep.subr.mxu0 0.0
        %1087 = vmatpush1.msra.mxu0 0.0
        %1088 = vmatprep.subr.mxu0 0.0
        %1089 = vmatpush1.msra.mxu0 0.0
        %1090 = vmatprep.subr.mxu0 0.0
        %1091 = vmatpush1.msra.mxu0 0.0
        %1092 = vmatprep.subr.mxu0 0.0
        %1093 = vmatpush1.msra.mxu0 0.0
        %1094 = vmatprep.subr.mxu0 0.0
        %1095 = vmatpush1.msra.mxu0 0.0
        %1096 = vmatprep.subr.mxu0 0.0
        %1097 = vmatpush1.msra.mxu0 0.0
        %1098 = vmatprep.subr.mxu0 0.0
        %1099 = vmatpush1.msra.mxu0 0.0
        %1100 = vmatprep.subr.mxu0 0.0
        %1101 = vmatpush1.msra.mxu0 0.0
        %1102 = vmatprep.subr.mxu0 0.0
        %1103 = vmatpush1.msra.mxu0 0.0
        %1104 = vmatprep.subr.mxu0 0.0
        %1105 = vmatpush1.msra.mxu0 0.0
        %1106 = vmatprep.subr.mxu0 0.0
        %1107 = vmatpush1.msra.mxu0 0.0
        %1108 = vmatprep.subr.mxu0 0.0
        %1109 = vmatpush1.msra.mxu0 0.0
        %1110 = vmatprep.subr.mxu0 0.0
        %1111 = vmatpush1.msra.mxu0 0.0
        %1112 = vmatprep.subr.mxu0 0.0
        %1113 = vmatpush1.msra.mxu0 0.0
        %1114 = vmatprep.subr.mxu0 0.0
        %1115 = vmatpush1.msra.mxu0 0.0
        %1116 = vmatprep.subr.mxu0 0.0
        %1117 = vmatpush1.msra.mxu0 0.0
        %1118 = vmatprep.subr.mxu0 0.0
        %1119 = vmatpush1.msra.mxu0 0.0
        %1120 = vmatprep.subr.mxu0 0.0
        %1121 = vmatpush1.msra.mxu0 0.0
        %1122 = vmatprep.subr.mxu0 0.0
        %1123 = vmatpush1.msra.mxu0 0.0
        %1124 = vmatprep.subr.mxu0 0.0
        %1125 = vmatpush1.msra.mxu0 0.0
        %1126 = vmatprep.subr.mxu0 0.0
        %1127 = vmatpush1.msra.mxu0 0.0
        %1128 = vmatprep.subr.mxu0 0.0
        %1129 = vmatpush1.msra.mxu0 0.0
        %1130 = vmatprep.subr.mxu0 0.0
        %1131 = vmatpush1.msra.mxu0 0.0
        %1132 = vmatprep.subr.mxu0 0.0
        %1133 = vmatpush1.msra.mxu0 0.0
        %1134 = vmatprep.subr.mxu0 0.0
        %1135 = vmatpush1.msra.mxu0 0.0
        %1136 = vmatprep.subr.mxu0 0.0
        %1137 = vmatpush1.msra.mxu0 0.0
        %1138 = vmatprep.subr.mxu0 0.0
        %1139 = vmatpush1.msra.mxu0 0.0
        %1140 = vmatprep.subr.mxu0 0.0
        %1141 = vmatpush1.msra.mxu0 0.0
        %1142 = vmatprep.subr.mxu0 0.0
        %1143 = vmatpush1.msra.mxu0 0.0
        %1144 = vmatprep.mubr.f32.mxu0 0.0
        %1145 = vmatmul.mubr.f32.gmra.mrb[0].mxu0 %v1078
        %v1146 = vpop.f32.mrb[0].mxu0
        %v1147 = vadd.f32 0.0, %v1146
        %v1148 = vpop.f32.mrb[0].mxu0
        %1149 = vdwg.mxu0
        %v1150 = vld [vmem:[%s2] sm:$0xff]
        %v1152 = vsel %vm332, %v843, 0
        %v1155 = vsel %vm332, %v919, 0
        %v1158 = vsel %vm332, %v995, 0
        %v1161 = vsel %vm332, %v1071, 0
        %v1164 = vsel %vm332, %v1147, 0
        %1166 = vmatprep.subr.mxu0 0.0
        %1167 = vmatpush1.msra.mxu0 %v1150
        %1168 = vmatprep.subr.mxu0 0.0
        %1169 = vmatpush1.msra.mxu0 0.0
        %1170 = vmatprep.subr.mxu0 0.0
        %1171 = vmatpush1.msra.mxu0 0.0
        %1172 = vmatprep.subr.mxu0 0.0
        %1173 = vmatpush1.msra.mxu0 0.0
        %1174 = vmatprep.subr.mxu0 0.0
        %1175 = vmatpush1.msra.mxu0 0.0
        %1176 = vmatprep.subr.mxu0 0.0
        %1177 = vmatpush1.msra.mxu0 0.0
        %1178 = vmatprep.subr.mxu0 0.0
        %1179 = vmatpush1.msra.mxu0 0.0
        %1180 = vmatprep.subr.mxu0 0.0
        %1181 = vmatpush1.msra.mxu0 0.0
        %1182 = vmatprep.subr.mxu0 0.0
        %1183 = vmatpush1.msra.mxu0 0.0
        %1184 = vmatprep.subr.mxu0 0.0
        %1185 = vmatpush1.msra.mxu0 0.0
        %1186 = vmatprep.subr.mxu0 0.0
        %1187 = vmatpush1.msra.mxu0 0.0
        %1188 = vmatprep.subr.mxu0 0.0
        %1189 = vmatpush1.msra.mxu0 0.0
        %1190 = vmatprep.subr.mxu0 0.0
        %1191 = vmatpush1.msra.mxu0 0.0
        %1192 = vmatprep.subr.mxu0 0.0
        %1193 = vmatpush1.msra.mxu0 0.0
        %1194 = vmatprep.subr.mxu0 0.0
        %1195 = vmatpush1.msra.mxu0 0.0
        %1196 = vmatprep.subr.mxu0 0.0
        %1197 = vmatpush1.msra.mxu0 0.0
        %1198 = vmatprep.subr.mxu0 0.0
        %1199 = vmatpush1.msra.mxu0 0.0
        %1200 = vmatprep.subr.mxu0 0.0
        %1201 = vmatpush1.msra.mxu0 0.0
        %1202 = vmatprep.subr.mxu0 0.0
        %1203 = vmatpush1.msra.mxu0 0.0
        %1204 = vmatprep.subr.mxu0 0.0
        %1205 = vmatpush1.msra.mxu0 0.0
        %1206 = vmatprep.subr.mxu0 0.0
        %1207 = vmatpush1.msra.mxu0 0.0
        %1208 = vmatprep.subr.mxu0 0.0
        %1209 = vmatpush1.msra.mxu0 0.0
        %1210 = vmatprep.subr.mxu0 0.0
        %1211 = vmatpush1.msra.mxu0 0.0
        %1212 = vmatprep.subr.mxu0 0.0
        %1213 = vmatpush1.msra.mxu0 0.0
        %1214 = vmatprep.subr.mxu0 0.0
        %1215 = vmatpush1.msra.mxu0 0.0
        %1216 = vmatprep.subr.mxu0 0.0
        %1217 = vmatpush1.msra.mxu0 0.0
        %1218 = vmatprep.subr.mxu0 0.0
        %1219 = vmatpush1.msra.mxu0 0.0
        %1220 = vmatprep.subr.mxu0 0.0
        %1221 = vmatpush1.msra.mxu0 0.0
        %1222 = vmatprep.subr.mxu0 0.0
        %1223 = vmatpush1.msra.mxu0 0.0
        %1224 = vmatprep.subr.mxu0 0.0
        %1225 = vmatpush1.msra.mxu0 0.0
        %1226 = vmatprep.subr.mxu0 0.0
        %1227 = vmatpush1.msra.mxu0 0.0
        %1228 = vmatprep.subr.mxu0 0.0
        %1229 = vmatpush1.msra.mxu0 0.0
        %1230 = vmatprep.mubr.f32.mxu0 0.0
        %1231 = vmatmul.mubr.f32.gmra.mrb[0].mxu0 %v1152
        %v1232 = vpop.f32.mrb[0].mxu0
        %v1233 = vadd.f32 0.0, %v1232
        %v1234 = vpop.f32.mrb[0].mxu0
        %1235 = vmatprep.mubr.f32.mxu0 0.0
        %1236 = vmatmul.mubr.f32.gmra.mrb[0].mxu0 %v1155
        %v1237 = vpop.f32.mrb[0].mxu0
        %v1238 = vadd.f32 0.0, %v1237
        %v1239 = vpop.f32.mrb[0].mxu0
        %1240 = vmatprep.mubr.f32.mxu0 0.0
        %1241 = vmatmul.mubr.f32.gmra.mrb[0].mxu0 %v1158
        %v1242 = vpop.f32.mrb[0].mxu0
        %v1243 = vadd.f32 0.0, %v1242
        %v1244 = vpop.f32.mrb[0].mxu0
        %1245 = vmatprep.mubr.f32.mxu0 0.0
        %1246 = vmatmul.mubr.f32.gmra.mrb[0].mxu0 %v1161
        %v1247 = vpop.f32.mrb[0].mxu0
        %v1248 = vadd.f32 0.0, %v1247
        %v1249 = vpop.f32.mrb[0].mxu0
        %1250 = vmatprep.mubr.f32.mxu0 0.0
        %1251 = vmatmul.mubr.f32.gmra.mrb[0].mxu0 %v1164
        %v1252 = vpop.f32.mrb[0].mxu0
        %v1253 = vadd.f32 0.0, %v1252
        %v1254 = vpop.f32.mrb[0].mxu0
        %1255 = vdwg.mxu0
        %v1256 = vadd.f32 %v322, %v1233
        %v1257 = vadd.f32 %v322, %v1238
        %v1258 = vadd.f32 %v322, %v1243
        %v1259 = vadd.f32 %v322, %v1248
        %v1260 = vadd.f32 %v322, %v1253
        %v1261 = vld [vmem:[#allocation2] sm:$0xff]
        %v1262 = vld [vmem:[#allocation2 + $0x8] sm:$0xff]
        %v1263 = vld [vmem:[#allocation2 + $0x10] sm:$0xff]
        %v1264 = vld [vmem:[#allocation2 + $0x18] sm:$0xff]
        %v1265 = vld [vmem:[#allocation2 + $0x20] sm:$0xff]
        %1267 = vrot.lane.b32.xlu0 %v1261, 120
        %v1268 = vpop.permute.xlu0 %1267
        %1269 = vrot.lane.b32.xlu0 %v1261, 88
        %v1270 = vpop.permute.xlu0 %1269
        %v1271 = vsel %vm332, %v1268, 0
        %v1273 = vsel %vm332, %v1270, 0
        %1275 = vmatprep.subr.mxu0 0.0
        %1276 = vmatpush1.xpose.msra.mxu0 %v1273
        %1277 = vmatprep.subr.mxu0 0.0
        %1278 = vmatpush1.xpose.msra.mxu0 0.0
        %1279 = vmatprep.subr.mxu0 0.0
        %1280 = vmatpush1.xpose.msra.mxu0 0.0
        %1281 = vmatprep.subr.mxu0 0.0
        %1282 = vmatpush1.xpose.msra.mxu0 0.0
        %1283 = vmatprep.subr.mxu0 0.0
        %1284 = vmatpush1.xpose.msra.mxu0 0.0
        %1285 = vmatprep.subr.mxu0 0.0
        %1286 = vmatpush1.xpose.msra.mxu0 0.0
        %1287 = vmatprep.subr.mxu0 0.0
        %1288 = vmatpush1.xpose.msra.mxu0 0.0
        %1289 = vmatprep.subr.mxu0 0.0
        %1290 = vmatpush1.xpose.msra.mxu0 0.0
        %1291 = vmatprep.subr.mxu0 0.0
        %1292 = vmatpush1.xpose.msra.mxu0 0.0
        %1293 = vmatprep.subr.mxu0 0.0
        %1294 = vmatpush1.xpose.msra.mxu0 0.0
        %1295 = vmatprep.subr.mxu0 0.0
        %1296 = vmatpush1.xpose.msra.mxu0 0.0
        %1297 = vmatprep.subr.mxu0 0.0
        %1298 = vmatpush1.xpose.msra.mxu0 0.0
        %1299 = vmatprep.subr.mxu0 0.0
        %1300 = vmatpush1.xpose.msra.mxu0 0.0
        %1301 = vmatprep.subr.mxu0 0.0
        %1302 = vmatpush1.xpose.msra.mxu0 0.0
        %1303 = vmatprep.subr.mxu0 0.0
        %1304 = vmatpush1.xpose.msra.mxu0 0.0
        %1305 = vmatprep.subr.mxu0 0.0
        %1306 = vmatpush1.xpose.msra.mxu0 0.0
        %1307 = vmatprep.subr.mxu0 0.0
        %1308 = vmatpush1.xpose.msra.mxu0 0.0
        %1309 = vmatprep.subr.mxu0 0.0
        %1310 = vmatpush1.xpose.msra.mxu0 0.0
        %1311 = vmatprep.subr.mxu0 0.0
        %1312 = vmatpush1.xpose.msra.mxu0 0.0
        %1313 = vmatprep.subr.mxu0 0.0
        %1314 = vmatpush1.xpose.msra.mxu0 0.0
        %1315 = vmatprep.subr.mxu0 0.0
        %1316 = vmatpush1.xpose.msra.mxu0 0.0
        %1317 = vmatprep.subr.mxu0 0.0
        %1318 = vmatpush1.xpose.msra.mxu0 0.0
        %1319 = vmatprep.subr.mxu0 0.0
        %1320 = vmatpush1.xpose.msra.mxu0 0.0
        %1321 = vmatprep.subr.mxu0 0.0
        %1322 = vmatpush1.xpose.msra.mxu0 0.0
        %1323 = vmatprep.subr.mxu0 0.0
        %1324 = vmatpush1.xpose.msra.mxu0 0.0
        %1325 = vmatprep.subr.mxu0 0.0
        %1326 = vmatpush1.xpose.msra.mxu0 0.0
        %1327 = vmatprep.subr.mxu0 0.0
        %1328 = vmatpush1.xpose.msra.mxu0 0.0
        %1329 = vmatprep.subr.mxu0 0.0
        %1330 = vmatpush1.xpose.msra.mxu0 0.0
        %1331 = vmatprep.subr.mxu0 0.0
        %1332 = vmatpush1.xpose.msra.mxu0 0.0
        %1333 = vmatprep.subr.mxu0 0.0
        %1334 = vmatpush1.xpose.msra.mxu0 0.0
        %1335 = vmatprep.subr.mxu0 0.0
        %1336 = vmatpush1.xpose.msra.mxu0 0.0
        %1337 = vmatprep.subr.mxu0 0.0
        %1338 = vmatpush1.xpose.msra.mxu0 0.0
        %1339 = vmatprep.mubr.f32.mxu0 0.0
        %1340 = vmatmul.mubr.f32.gmra.mrb[0].mxu0 %v1271
        %v1341 = vpop.f32.mrb[0].mxu0
        %v1342 = vadd.f32 0.0, %v1341
        %v1343 = vpop.f32.mrb[0].mxu0
        %1344 = vdwg.mxu0
        %1346 = vrot.lane.b32.xlu0 %v1262, 120
        %v1347 = vpop.permute.xlu0 %1346
        %1348 = vrot.lane.b32.xlu0 %v1262, 88
        %v1349 = vpop.permute.xlu0 %1348
        %v1350 = vsel %vm332, %v1347, 0
        %v1352 = vsel %vm332, %v1349, 0
        %1354 = vmatprep.subr.mxu0 0.0
        %1355 = vmatpush1.xpose.msra.mxu0 %v1352
        %1356 = vmatprep.subr.mxu0 0.0
        %1357 = vmatpush1.xpose.msra.mxu0 0.0
        %1358 = vmatprep.subr.mxu0 0.0
        %1359 = vmatpush1.xpose.msra.mxu0 0.0
        %1360 = vmatprep.subr.mxu0 0.0
        %1361 = vmatpush1.xpose.msra.mxu0 0.0
        %1362 = vmatprep.subr.mxu0 0.0
        %1363 = vmatpush1.xpose.msra.mxu0 0.0
        %1364 = vmatprep.subr.mxu0 0.0
        %1365 = vmatpush1.xpose.msra.mxu0 0.0
        %1366 = vmatprep.subr.mxu0 0.0
        %1367 = vmatpush1.xpose.msra.mxu0 0.0
        %1368 = vmatprep.subr.mxu0 0.0
        %1369 = vmatpush1.xpose.msra.mxu0 0.0
        %1370 = vmatprep.subr.mxu0 0.0
        %1371 = vmatpush1.xpose.msra.mxu0 0.0
        %1372 = vmatprep.subr.mxu0 0.0
        %1373 = vmatpush1.xpose.msra.mxu0 0.0
        %1374 = vmatprep.subr.mxu0 0.0
        %1375 = vmatpush1.xpose.msra.mxu0 0.0
        %1376 = vmatprep.subr.mxu0 0.0
        %1377 = vmatpush1.xpose.msra.mxu0 0.0
        %1378 = vmatprep.subr.mxu0 0.0
        %1379 = vmatpush1.xpose.msra.mxu0 0.0
        %1380 = vmatprep.subr.mxu0 0.0
        %1381 = vmatpush1.xpose.msra.mxu0 0.0
        %1382 = vmatprep.subr.mxu0 0.0
        %1383 = vmatpush1.xpose.msra.mxu0 0.0
        %1384 = vmatprep.subr.mxu0 0.0
        %1385 = vmatpush1.xpose.msra.mxu0 0.0
        %1386 = vmatprep.subr.mxu0 0.0
        %1387 = vmatpush1.xpose.msra.mxu0 0.0
        %1388 = vmatprep.subr.mxu0 0.0
        %1389 = vmatpush1.xpose.msra.mxu0 0.0
        %1390 = vmatprep.subr.mxu0 0.0
        %1391 = vmatpush1.xpose.msra.mxu0 0.0
        %1392 = vmatprep.subr.mxu0 0.0
        %1393 = vmatpush1.xpose.msra.mxu0 0.0
        %1394 = vmatprep.subr.mxu0 0.0
        %1395 = vmatpush1.xpose.msra.mxu0 0.0
        %1396 = vmatprep.subr.mxu0 0.0
        %1397 = vmatpush1.xpose.msra.mxu0 0.0
        %1398 = vmatprep.subr.mxu0 0.0
        %1399 = vmatpush1.xpose.msra.mxu0 0.0
        %1400 = vmatprep.subr.mxu0 0.0
        %1401 = vmatpush1.xpose.msra.mxu0 0.0
        %1402 = vmatprep.subr.mxu0 0.0
        %1403 = vmatpush1.xpose.msra.mxu0 0.0
        %1404 = vmatprep.subr.mxu0 0.0
        %1405 = vmatpush1.xpose.msra.mxu0 0.0
        %1406 = vmatprep.subr.mxu0 0.0
        %1407 = vmatpush1.xpose.msra.mxu0 0.0
        %1408 = vmatprep.subr.mxu0 0.0
        %1409 = vmatpush1.xpose.msra.mxu0 0.0
        %1410 = vmatprep.subr.mxu0 0.0
        %1411 = vmatpush1.xpose.msra.mxu0 0.0
        %1412 = vmatprep.subr.mxu0 0.0
        %1413 = vmatpush1.xpose.msra.mxu0 0.0
        %1414 = vmatprep.subr.mxu0 0.0
        %1415 = vmatpush1.xpose.msra.mxu0 0.0
        %1416 = vmatprep.subr.mxu0 0.0
        %1417 = vmatpush1.xpose.msra.mxu0 0.0
        %1418 = vmatprep.mubr.f32.mxu0 0.0
        %1419 = vmatmul.mubr.f32.gmra.mrb[0].mxu0 %v1350
        %v1420 = vpop.f32.mrb[0].mxu0
        %v1421 = vadd.f32 0.0, %v1420
        %v1422 = vpop.f32.mrb[0].mxu0
        %1423 = vdwg.mxu0
        %1425 = vrot.lane.b32.xlu0 %v1263, 120
        %v1426 = vpop.permute.xlu0 %1425
        %1427 = vrot.lane.b32.xlu0 %v1263, 88
        %v1428 = vpop.permute.xlu0 %1427
        %v1429 = vsel %vm332, %v1426, 0
        %v1431 = vsel %vm332, %v1428, 0
        %1433 = vmatprep.subr.mxu0 0.0
        %1434 = vmatpush1.xpose.msra.mxu0 %v1431
        %1435 = vmatprep.subr.mxu0 0.0
        %1436 = vmatpush1.xpose.msra.mxu0 0.0
        %1437 = vmatprep.subr.mxu0 0.0
        %1438 = vmatpush1.xpose.msra.mxu0 0.0
        %1439 = vmatprep.subr.mxu0 0.0
        %1440 = vmatpush1.xpose.msra.mxu0 0.0
        %1441 = vmatprep.subr.mxu0 0.0
        %1442 = vmatpush1.xpose.msra.mxu0 0.0
        %1443 = vmatprep.subr.mxu0 0.0
        %1444 = vmatpush1.xpose.msra.mxu0 0.0
        %1445 = vmatprep.subr.mxu0 0.0
        %1446 = vmatpush1.xpose.msra.mxu0 0.0
        %1447 = vmatprep.subr.mxu0 0.0
        %1448 = vmatpush1.xpose.msra.mxu0 0.0
        %1449 = vmatprep.subr.mxu0 0.0
        %1450 = vmatpush1.xpose.msra.mxu0 0.0
        %1451 = vmatprep.subr.mxu0 0.0
        %1452 = vmatpush1.xpose.msra.mxu0 0.0
        %1453 = vmatprep.subr.mxu0 0.0
        %1454 = vmatpush1.xpose.msra.mxu0 0.0
        %1455 = vmatprep.subr.mxu0 0.0
        %1456 = vmatpush1.xpose.msra.mxu0 0.0
        %1457 = vmatprep.subr.mxu0 0.0
        %1458 = vmatpush1.xpose.msra.mxu0 0.0
        %1459 = vmatprep.subr.mxu0 0.0
        %1460 = vmatpush1.xpose.msra.mxu0 0.0
        %1461 = vmatprep.subr.mxu0 0.0
        %1462 = vmatpush1.xpose.msra.mxu0 0.0
        %1463 = vmatprep.subr.mxu0 0.0
        %1464 = vmatpush1.xpose.msra.mxu0 0.0
        %1465 = vmatprep.subr.mxu0 0.0
        %1466 = vmatpush1.xpose.msra.mxu0 0.0
        %1467 = vmatprep.subr.mxu0 0.0
        %1468 = vmatpush1.xpose.msra.mxu0 0.0
        %1469 = vmatprep.subr.mxu0 0.0
        %1470 = vmatpush1.xpose.msra.mxu0 0.0
        %1471 = vmatprep.subr.mxu0 0.0
        %1472 = vmatpush1.xpose.msra.mxu0 0.0
        %1473 = vmatprep.subr.mxu0 0.0
        %1474 = vmatpush1.xpose.msra.mxu0 0.0
        %1475 = vmatprep.subr.mxu0 0.0
        %1476 = vmatpush1.xpose.msra.mxu0 0.0
        %1477 = vmatprep.subr.mxu0 0.0
        %1478 = vmatpush1.xpose.msra.mxu0 0.0
        %1479 = vmatprep.subr.mxu0 0.0
        %1480 = vmatpush1.xpose.msra.mxu0 0.0
        %1481 = vmatprep.subr.mxu0 0.0
        %1482 = vmatpush1.xpose.msra.mxu0 0.0
        %1483 = vmatprep.subr.mxu0 0.0
        %1484 = vmatpush1.xpose.msra.mxu0 0.0
        %1485 = vmatprep.subr.mxu0 0.0
        %1486 = vmatpush1.xpose.msra.mxu0 0.0
        %1487 = vmatprep.subr.mxu0 0.0
        %1488 = vmatpush1.xpose.msra.mxu0 0.0
        %1489 = vmatprep.subr.mxu0 0.0
        %1490 = vmatpush1.xpose.msra.mxu0 0.0
        %1491 = vmatprep.subr.mxu0 0.0
        %1492 = vmatpush1.xpose.msra.mxu0 0.0
        %1493 = vmatprep.subr.mxu0 0.0
        %1494 = vmatpush1.xpose.msra.mxu0 0.0
        %1495 = vmatprep.subr.mxu0 0.0
        %1496 = vmatpush1.xpose.msra.mxu0 0.0
        %1497 = vmatprep.mubr.f32.mxu0 0.0
        %1498 = vmatmul.mubr.f32.gmra.mrb[0].mxu0 %v1429
        %v1499 = vpop.f32.mrb[0].mxu0
        %v1500 = vadd.f32 0.0, %v1499
        %v1501 = vpop.f32.mrb[0].mxu0
        %1502 = vdwg.mxu0
        %1504 = vrot.lane.b32.xlu0 %v1264, 120
        %v1505 = vpop.permute.xlu0 %1504
        %1506 = vrot.lane.b32.xlu0 %v1264, 88
        %v1507 = vpop.permute.xlu0 %1506
        %v1508 = vsel %vm332, %v1505, 0
        %v1510 = vsel %vm332, %v1507, 0
        %1512 = vmatprep.subr.mxu0 0.0
        %1513 = vmatpush1.xpose.msra.mxu0 %v1510
        %1514 = vmatprep.subr.mxu0 0.0
        %1515 = vmatpush1.xpose.msra.mxu0 0.0
        %1516 = vmatprep.subr.mxu0 0.0
        %1517 = vmatpush1.xpose.msra.mxu0 0.0
        %1518 = vmatprep.subr.mxu0 0.0
        %1519 = vmatpush1.xpose.msra.mxu0 0.0
        %1520 = vmatprep.subr.mxu0 0.0
        %1521 = vmatpush1.xpose.msra.mxu0 0.0
        %1522 = vmatprep.subr.mxu0 0.0
        %1523 = vmatpush1.xpose.msra.mxu0 0.0
        %1524 = vmatprep.subr.mxu0 0.0
        %1525 = vmatpush1.xpose.msra.mxu0 0.0
        %1526 = vmatprep.subr.mxu0 0.0
        %1527 = vmatpush1.xpose.msra.mxu0 0.0
        %1528 = vmatprep.subr.mxu0 0.0
        %1529 = vmatpush1.xpose.msra.mxu0 0.0
        %1530 = vmatprep.subr.mxu0 0.0
        %1531 = vmatpush1.xpose.msra.mxu0 0.0
        %1532 = vmatprep.subr.mxu0 0.0
        %1533 = vmatpush1.xpose.msra.mxu0 0.0
        %1534 = vmatprep.subr.mxu0 0.0
        %1535 = vmatpush1.xpose.msra.mxu0 0.0
        %1536 = vmatprep.subr.mxu0 0.0
        %1537 = vmatpush1.xpose.msra.mxu0 0.0
        %1538 = vmatprep.subr.mxu0 0.0
        %1539 = vmatpush1.xpose.msra.mxu0 0.0
        %1540 = vmatprep.subr.mxu0 0.0
        %1541 = vmatpush1.xpose.msra.mxu0 0.0
        %1542 = vmatprep.subr.mxu0 0.0
        %1543 = vmatpush1.xpose.msra.mxu0 0.0
        %1544 = vmatprep.subr.mxu0 0.0
        %1545 = vmatpush1.xpose.msra.mxu0 0.0
        %1546 = vmatprep.subr.mxu0 0.0
        %1547 = vmatpush1.xpose.msra.mxu0 0.0
        %1548 = vmatprep.subr.mxu0 0.0
        %1549 = vmatpush1.xpose.msra.mxu0 0.0
        %1550 = vmatprep.subr.mxu0 0.0
        %1551 = vmatpush1.xpose.msra.mxu0 0.0
        %1552 = vmatprep.subr.mxu0 0.0
        %1553 = vmatpush1.xpose.msra.mxu0 0.0
        %1554 = vmatprep.subr.mxu0 0.0
        %1555 = vmatpush1.xpose.msra.mxu0 0.0
        %1556 = vmatprep.subr.mxu0 0.0
        %1557 = vmatpush1.xpose.msra.mxu0 0.0
        %1558 = vmatprep.subr.mxu0 0.0
        %1559 = vmatpush1.xpose.msra.mxu0 0.0
        %1560 = vmatprep.subr.mxu0 0.0
        %1561 = vmatpush1.xpose.msra.mxu0 0.0
        %1562 = vmatprep.subr.mxu0 0.0
        %1563 = vmatpush1.xpose.msra.mxu0 0.0
        %1564 = vmatprep.subr.mxu0 0.0
        %1565 = vmatpush1.xpose.msra.mxu0 0.0
        %1566 = vmatprep.subr.mxu0 0.0
        %1567 = vmatpush1.xpose.msra.mxu0 0.0
        %1568 = vmatprep.subr.mxu0 0.0
        %1569 = vmatpush1.xpose.msra.mxu0 0.0
        %1570 = vmatprep.subr.mxu0 0.0
        %1571 = vmatpush1.xpose.msra.mxu0 0.0
        %1572 = vmatprep.subr.mxu0 0.0
        %1573 = vmatpush1.xpose.msra.mxu0 0.0
        %1574 = vmatprep.subr.mxu0 0.0
        %1575 = vmatpush1.xpose.msra.mxu0 0.0
        %1576 = vmatprep.mubr.f32.mxu0 0.0
        %1577 = vmatmul.mubr.f32.gmra.mrb[0].mxu0 %v1508
        %v1578 = vpop.f32.mrb[0].mxu0
        %v1579 = vadd.f32 0.0, %v1578
        %v1580 = vpop.f32.mrb[0].mxu0
        %1581 = vdwg.mxu0
        %1583 = vrot.lane.b32.xlu0 %v1265, 120
        %v1584 = vpop.permute.xlu0 %1583
        %1585 = vrot.lane.b32.xlu0 %v1265, 88
        %v1586 = vpop.permute.xlu0 %1585
        %v1587 = vsel %vm332, %v1584, 0
        %v1589 = vsel %vm332, %v1586, 0
        %1591 = vmatprep.subr.mxu0 0.0
        %1592 = vmatpush1.xpose.msra.mxu0 %v1589
        %1593 = vmatprep.subr.mxu0 0.0
        %1594 = vmatpush1.xpose.msra.mxu0 0.0
        %1595 = vmatprep.subr.mxu0 0.0
        %1596 = vmatpush1.xpose.msra.mxu0 0.0
        %1597 = vmatprep.subr.mxu0 0.0
        %1598 = vmatpush1.xpose.msra.mxu0 0.0
        %1599 = vmatprep.subr.mxu0 0.0
        %1600 = vmatpush1.xpose.msra.mxu0 0.0
        %1601 = vmatprep.subr.mxu0 0.0
        %1602 = vmatpush1.xpose.msra.mxu0 0.0
        %1603 = vmatprep.subr.mxu0 0.0
        %1604 = vmatpush1.xpose.msra.mxu0 0.0
        %1605 = vmatprep.subr.mxu0 0.0
        %1606 = vmatpush1.xpose.msra.mxu0 0.0
        %1607 = vmatprep.subr.mxu0 0.0
        %1608 = vmatpush1.xpose.msra.mxu0 0.0
        %1609 = vmatprep.subr.mxu0 0.0
        %1610 = vmatpush1.xpose.msra.mxu0 0.0
        %1611 = vmatprep.subr.mxu0 0.0
        %1612 = vmatpush1.xpose.msra.mxu0 0.0
        %1613 = vmatprep.subr.mxu0 0.0
        %1614 = vmatpush1.xpose.msra.mxu0 0.0
        %1615 = vmatprep.subr.mxu0 0.0
        %1616 = vmatpush1.xpose.msra.mxu0 0.0
        %1617 = vmatprep.subr.mxu0 0.0
        %1618 = vmatpush1.xpose.msra.mxu0 0.0
        %1619 = vmatprep.subr.mxu0 0.0
        %1620 = vmatpush1.xpose.msra.mxu0 0.0
        %1621 = vmatprep.subr.mxu0 0.0
        %1622 = vmatpush1.xpose.msra.mxu0 0.0
        %1623 = vmatprep.subr.mxu0 0.0
        %1624 = vmatpush1.xpose.msra.mxu0 0.0
        %1625 = vmatprep.subr.mxu0 0.0
        %1626 = vmatpush1.xpose.msra.mxu0 0.0
        %1627 = vmatprep.subr.mxu0 0.0
        %1628 = vmatpush1.xpose.msra.mxu0 0.0
        %1629 = vmatprep.subr.mxu0 0.0
        %1630 = vmatpush1.xpose.msra.mxu0 0.0
        %1631 = vmatprep.subr.mxu0 0.0
        %1632 = vmatpush1.xpose.msra.mxu0 0.0
        %1633 = vmatprep.subr.mxu0 0.0
        %1634 = vmatpush1.xpose.msra.mxu0 0.0
        %1635 = vmatprep.subr.mxu0 0.0
        %1636 = vmatpush1.xpose.msra.mxu0 0.0
        %1637 = vmatprep.subr.mxu0 0.0
        %1638 = vmatpush1.xpose.msra.mxu0 0.0
        %1639 = vmatprep.subr.mxu0 0.0
        %1640 = vmatpush1.xpose.msra.mxu0 0.0
        %1641 = vmatprep.subr.mxu0 0.0
        %1642 = vmatpush1.xpose.msra.mxu0 0.0
        %1643 = vmatprep.subr.mxu0 0.0
        %1644 = vmatpush1.xpose.msra.mxu0 0.0
        %1645 = vmatprep.subr.mxu0 0.0
        %1646 = vmatpush1.xpose.msra.mxu0 0.0
        %1647 = vmatprep.subr.mxu0 0.0
        %1648 = vmatpush1.xpose.msra.mxu0 0.0
        %1649 = vmatprep.subr.mxu0 0.0
        %1650 = vmatpush1.xpose.msra.mxu0 0.0
        %1651 = vmatprep.subr.mxu0 0.0
        %1652 = vmatpush1.xpose.msra.mxu0 0.0
        %1653 = vmatprep.subr.mxu0 0.0
        %1654 = vmatpush1.xpose.msra.mxu0 0.0
        %1655 = vmatprep.mubr.f32.mxu0 0.0
        %1656 = vmatmul.mubr.f32.gmra.mrb[0].mxu0 %v1587
        %v1657 = vpop.f32.mrb[0].mxu0
        %v1658 = vadd.f32 0.0, %v1657
        %v1659 = vpop.f32.mrb[0].mxu0
        %1660 = vdwg.mxu0
        %v1661 = vsel %vm332, %v1342, -inf
        %1662 = vmax.xlane.f32.xlu0 %v1661
        %v1663 = vpop.xlane.xlu0 %1662
        %v1664 = vsel %vm332, %v1421, -inf
        %1665 = vmax.xlane.f32.xlu0 %v1664
        %v1666 = vpop.xlane.xlu0 %1665
        %v1667 = vsel %vm332, %v1500, -inf
        %1668 = vmax.xlane.f32.xlu0 %v1667
        %v1669 = vpop.xlane.xlu0 %1668
        %v1670 = vsel %vm332, %v1579, -inf
        %1671 = vmax.xlane.f32.xlu0 %v1670
        %v1672 = vpop.xlane.xlu0 %1671
        %v1673 = vsel %vm332, %v1658, -inf
        %1674 = vmax.xlane.f32.xlu0 %v1673
        %v1675 = vpop.xlane.xlu0 %1674
        %v1676 = vsub.f32 %v1342, %v1663
        %v1677 = vsub.f32 %v1421, %v1666
        %v1678 = vsub.f32 %v1500, %v1669
        %v1679 = vsub.f32 %v1579, %v1672
        %v1680 = vsub.f32 %v1658, %v1675
        %v1681 = vmul.f32 %v1676, 1.442695
        %v1682 = vpow.pop %v1681
        %v1683 = vmul.f32 %v1677, 1.442695
        %v1684 = vpow.pop %v1683
        %v1685 = vmul.f32 %v1678, 1.442695
        %v1686 = vpow.pop %v1685
        %v1687 = vmul.f32 %v1679, 1.442695
        %v1688 = vpow.pop %v1687
        %v1689 = vmul.f32 %v1680, 1.442695
        %v1690 = vpow.pop %v1689
        %v1691 = vsel %vm332, %v1682, 0.0
        %1692 = vadd.xlane.f32.xlu0 %v1691
        %v1693 = vpop.xlane.xlu0 %1692
        %v1694 = vsel %vm332, %v1684, 0.0
        %1695 = vadd.xlane.f32.xlu0 %v1694
        %v1696 = vpop.xlane.xlu0 %1695
        %v1697 = vsel %vm332, %v1686, 0.0
        %1698 = vadd.xlane.f32.xlu0 %v1697
        %v1699 = vpop.xlane.xlu0 %1698
        %v1700 = vsel %vm332, %v1688, 0.0
        %1701 = vadd.xlane.f32.xlu0 %v1700
        %v1702 = vpop.xlane.xlu0 %1701
        %v1703 = vsel %vm332, %v1690, 0.0
        %1704 = vadd.xlane.f32.xlu0 %v1703
        %v1705 = vpop.xlane.xlu0 %1704
        %v1706 = vrcp.pop %v1693
        %v1707 = vrcp.pop %v1696
        %v1708 = vrcp.pop %v1699
        %v1709 = vrcp.pop %v1702
        %v1710 = vrcp.pop %v1705
        %v1711 = vmul.f32 %v1682, %v1706
        %v1712 = vmul.f32 %v1684, %v1707
        %v1713 = vmul.f32 %v1686, %v1708
        %v1714 = vmul.f32 %v1688, %v1709
        %v1715 = vmul.f32 %v1690, %v1710
        %1716 = vrot.lane.b32.xlu0 %v1261, 56
        %v1717 = vpop.permute.xlu0 %1716
        %v1720 = vsel %vm332, %v1711, 0
        %1722 = vmatprep.subr.mxu0 0.0
        %1723 = vmatpush1.msra.mxu0 %v1717
        %1724 = vmatprep.subr.mxu0 0.0
        %1725 = vmatpush1.msra.mxu0 0.0
        %1726 = vmatprep.subr.mxu0 0.0
        %1727 = vmatpush1.msra.mxu0 0.0
        %1728 = vmatprep.subr.mxu0 0.0
        %1729 = vmatpush1.msra.mxu0 0.0
        %1730 = vmatprep.subr.mxu0 0.0
        %1731 = vmatpush1.msra.mxu0 0.0
        %1732 = vmatprep.subr.mxu0 0.0
        %1733 = vmatpush1.msra.mxu0 0.0
        %1734 = vmatprep.subr.mxu0 0.0
        %1735 = vmatpush1.msra.mxu0 0.0
        %1736 = vmatprep.subr.mxu0 0.0
        %1737 = vmatpush1.msra.mxu0 0.0
        %1738 = vmatprep.subr.mxu0 0.0
        %1739 = vmatpush1.msra.mxu0 0.0
        %1740 = vmatprep.subr.mxu0 0.0
        %1741 = vmatpush1.msra.mxu0 0.0
        %1742 = vmatprep.subr.mxu0 0.0
        %1743 = vmatpush1.msra.mxu0 0.0
        %1744 = vmatprep.subr.mxu0 0.0
        %1745 = vmatpush1.msra.mxu0 0.0
        %1746 = vmatprep.subr.mxu0 0.0
        %1747 = vmatpush1.msra.mxu0 0.0
        %1748 = vmatprep.subr.mxu0 0.0
        %1749 = vmatpush1.msra.mxu0 0.0
        %1750 = vmatprep.subr.mxu0 0.0
        %1751 = vmatpush1.msra.mxu0 0.0
        %1752 = vmatprep.subr.mxu0 0.0
        %1753 = vmatpush1.msra.mxu0 0.0
        %1754 = vmatprep.subr.mxu0 0.0
        %1755 = vmatpush1.msra.mxu0 0.0
        %1756 = vmatprep.subr.mxu0 0.0
        %1757 = vmatpush1.msra.mxu0 0.0
        %1758 = vmatprep.subr.mxu0 0.0
        %1759 = vmatpush1.msra.mxu0 0.0
        %1760 = vmatprep.subr.mxu0 0.0
        %1761 = vmatpush1.msra.mxu0 0.0
        %1762 = vmatprep.subr.mxu0 0.0
        %1763 = vmatpush1.msra.mxu0 0.0
        %1764 = vmatprep.subr.mxu0 0.0
        %1765 = vmatpush1.msra.mxu0 0.0
        %1766 = vmatprep.subr.mxu0 0.0
        %1767 = vmatpush1.msra.mxu0 0.0
        %1768 = vmatprep.subr.mxu0 0.0
        %1769 = vmatpush1.msra.mxu0 0.0
        %1770 = vmatprep.subr.mxu0 0.0
        %1771 = vmatpush1.msra.mxu0 0.0
        %1772 = vmatprep.subr.mxu0 0.0
        %1773 = vmatpush1.msra.mxu0 0.0
        %1774 = vmatprep.subr.mxu0 0.0
        %1775 = vmatpush1.msra.mxu0 0.0
        %1776 = vmatprep.subr.mxu0 0.0
        %1777 = vmatpush1.msra.mxu0 0.0
        %1778 = vmatprep.subr.mxu0 0.0
        %1779 = vmatpush1.msra.mxu0 0.0
        %1780 = vmatprep.subr.mxu0 0.0
        %1781 = vmatpush1.msra.mxu0 0.0
        %1782 = vmatprep.subr.mxu0 0.0
        %1783 = vmatpush1.msra.mxu0 0.0
        %1784 = vmatprep.subr.mxu0 0.0
        %1785 = vmatpush1.msra.mxu0 0.0
        %1786 = vmatprep.mubr.f32.mxu0 0.0
        %1787 = vmatmul.mubr.f32.gmra.mrb[0].mxu0 %v1720
        %v1788 = vpop.f32.mrb[0].mxu0
        %v1789 = vadd.f32 0.0, %v1788
        %v1790 = vpop.f32.mrb[0].mxu0
        %1791 = vdwg.mxu0
        %1792 = vrot.lane.b32.xlu0 %v1262, 56
        %v1793 = vpop.permute.xlu0 %1792
        %v1796 = vsel %vm332, %v1712, 0
        %1798 = vmatprep.subr.mxu0 0.0
        %1799 = vmatpush1.msra.mxu0 %v1793
        %1800 = vmatprep.subr.mxu0 0.0
        %1801 = vmatpush1.msra.mxu0 0.0
        %1802 = vmatprep.subr.mxu0 0.0
        %1803 = vmatpush1.msra.mxu0 0.0
        %1804 = vmatprep.subr.mxu0 0.0
        %1805 = vmatpush1.msra.mxu0 0.0
        %1806 = vmatprep.subr.mxu0 0.0
        %1807 = vmatpush1.msra.mxu0 0.0
        %1808 = vmatprep.subr.mxu0 0.0
        %1809 = vmatpush1.msra.mxu0 0.0
        %1810 = vmatprep.subr.mxu0 0.0
        %1811 = vmatpush1.msra.mxu0 0.0
        %1812 = vmatprep.subr.mxu0 0.0
        %1813 = vmatpush1.msra.mxu0 0.0
        %1814 = vmatprep.subr.mxu0 0.0
        %1815 = vmatpush1.msra.mxu0 0.0
        %1816 = vmatprep.subr.mxu0 0.0
        %1817 = vmatpush1.msra.mxu0 0.0
        %1818 = vmatprep.subr.mxu0 0.0
        %1819 = vmatpush1.msra.mxu0 0.0
        %1820 = vmatprep.subr.mxu0 0.0
        %1821 = vmatpush1.msra.mxu0 0.0
        %1822 = vmatprep.subr.mxu0 0.0
        %1823 = vmatpush1.msra.mxu0 0.0
        %1824 = vmatprep.subr.mxu0 0.0
        %1825 = vmatpush1.msra.mxu0 0.0
        %1826 = vmatprep.subr.mxu0 0.0
        %1827 = vmatpush1.msra.mxu0 0.0
        %1828 = vmatprep.subr.mxu0 0.0
        %1829 = vmatpush1.msra.mxu0 0.0
        %1830 = vmatprep.subr.mxu0 0.0
        %1831 = vmatpush1.msra.mxu0 0.0
        %1832 = vmatprep.subr.mxu0 0.0
        %1833 = vmatpush1.msra.mxu0 0.0
        %1834 = vmatprep.subr.mxu0 0.0
        %1835 = vmatpush1.msra.mxu0 0.0
        %1836 = vmatprep.subr.mxu0 0.0
        %1837 = vmatpush1.msra.mxu0 0.0
        %1838 = vmatprep.subr.mxu0 0.0
        %1839 = vmatpush1.msra.mxu0 0.0
        %1840 = vmatprep.subr.mxu0 0.0
        %1841 = vmatpush1.msra.mxu0 0.0
        %1842 = vmatprep.subr.mxu0 0.0
        %1843 = vmatpush1.msra.mxu0 0.0
        %1844 = vmatprep.subr.mxu0 0.0
        %1845 = vmatpush1.msra.mxu0 0.0
        %1846 = vmatprep.subr.mxu0 0.0
        %1847 = vmatpush1.msra.mxu0 0.0
        %1848 = vmatprep.subr.mxu0 0.0
        %1849 = vmatpush1.msra.mxu0 0.0
        %1850 = vmatprep.subr.mxu0 0.0
        %1851 = vmatpush1.msra.mxu0 0.0
        %1852 = vmatprep.subr.mxu0 0.0
        %1853 = vmatpush1.msra.mxu0 0.0
        %1854 = vmatprep.subr.mxu0 0.0
        %1855 = vmatpush1.msra.mxu0 0.0
        %1856 = vmatprep.subr.mxu0 0.0
        %1857 = vmatpush1.msra.mxu0 0.0
        %1858 = vmatprep.subr.mxu0 0.0
        %1859 = vmatpush1.msra.mxu0 0.0
        %1860 = vmatprep.subr.mxu0 0.0
        %1861 = vmatpush1.msra.mxu0 0.0
        %1862 = vmatprep.mubr.f32.mxu0 0.0
        %1863 = vmatmul.mubr.f32.gmra.mrb[0].mxu0 %v1796
        %v1864 = vpop.f32.mrb[0].mxu0
        %v1865 = vadd.f32 0.0, %v1864
        %v1866 = vpop.f32.mrb[0].mxu0
        %1867 = vdwg.mxu0
        %1868 = vrot.lane.b32.xlu0 %v1263, 56
        %v1869 = vpop.permute.xlu0 %1868
        %v1872 = vsel %vm332, %v1713, 0
        %1874 = vmatprep.subr.mxu0 0.0
        %1875 = vmatpush1.msra.mxu0 %v1869
        %1876 = vmatprep.subr.mxu0 0.0
        %1877 = vmatpush1.msra.mxu0 0.0
        %1878 = vmatprep.subr.mxu0 0.0
        %1879 = vmatpush1.msra.mxu0 0.0
        %1880 = vmatprep.subr.mxu0 0.0
        %1881 = vmatpush1.msra.mxu0 0.0
        %1882 = vmatprep.subr.mxu0 0.0
        %1883 = vmatpush1.msra.mxu0 0.0
        %1884 = vmatprep.subr.mxu0 0.0
        %1885 = vmatpush1.msra.mxu0 0.0
        %1886 = vmatprep.subr.mxu0 0.0
        %1887 = vmatpush1.msra.mxu0 0.0
        %1888 = vmatprep.subr.mxu0 0.0
        %1889 = vmatpush1.msra.mxu0 0.0
        %1890 = vmatprep.subr.mxu0 0.0
        %1891 = vmatpush1.msra.mxu0 0.0
        %1892 = vmatprep.subr.mxu0 0.0
        %1893 = vmatpush1.msra.mxu0 0.0
        %1894 = vmatprep.subr.mxu0 0.0
        %1895 = vmatpush1.msra.mxu0 0.0
        %1896 = vmatprep.subr.mxu0 0.0
        %1897 = vmatpush1.msra.mxu0 0.0
        %1898 = vmatprep.subr.mxu0 0.0
        %1899 = vmatpush1.msra.mxu0 0.0
        %1900 = vmatprep.subr.mxu0 0.0
        %1901 = vmatpush1.msra.mxu0 0.0
        %1902 = vmatprep.subr.mxu0 0.0
        %1903 = vmatpush1.msra.mxu0 0.0
        %1904 = vmatprep.subr.mxu0 0.0
        %1905 = vmatpush1.msra.mxu0 0.0
        %1906 = vmatprep.subr.mxu0 0.0
        %1907 = vmatpush1.msra.mxu0 0.0
        %1908 = vmatprep.subr.mxu0 0.0
        %1909 = vmatpush1.msra.mxu0 0.0
        %1910 = vmatprep.subr.mxu0 0.0
        %1911 = vmatpush1.msra.mxu0 0.0
        %1912 = vmatprep.subr.mxu0 0.0
        %1913 = vmatpush1.msra.mxu0 0.0
        %1914 = vmatprep.subr.mxu0 0.0
        %1915 = vmatpush1.msra.mxu0 0.0
        %1916 = vmatprep.subr.mxu0 0.0
        %1917 = vmatpush1.msra.mxu0 0.0
        %1918 = vmatprep.subr.mxu0 0.0
        %1919 = vmatpush1.msra.mxu0 0.0
        %1920 = vmatprep.subr.mxu0 0.0
        %1921 = vmatpush1.msra.mxu0 0.0
        %1922 = vmatprep.subr.mxu0 0.0
        %1923 = vmatpush1.msra.mxu0 0.0
        %1924 = vmatprep.subr.mxu0 0.0
        %1925 = vmatpush1.msra.mxu0 0.0
        %1926 = vmatprep.subr.mxu0 0.0
        %1927 = vmatpush1.msra.mxu0 0.0
        %1928 = vmatprep.subr.mxu0 0.0
        %1929 = vmatpush1.msra.mxu0 0.0
        %1930 = vmatprep.subr.mxu0 0.0
        %1931 = vmatpush1.msra.mxu0 0.0
        %1932 = vmatprep.subr.mxu0 0.0
        %1933 = vmatpush1.msra.mxu0 0.0
        %1934 = vmatprep.subr.mxu0 0.0
        %1935 = vmatpush1.msra.mxu0 0.0
        %1936 = vmatprep.subr.mxu0 0.0
        %1937 = vmatpush1.msra.mxu0 0.0
        %1938 = vmatprep.mubr.f32.mxu0 0.0
        %1939 = vmatmul.mubr.f32.gmra.mrb[0].mxu0 %v1872
        %v1940 = vpop.f32.mrb[0].mxu0
        %v1941 = vadd.f32 0.0, %v1940
        %v1942 = vpop.f32.mrb[0].mxu0
        %1943 = vdwg.mxu0
        %1944 = vrot.lane.b32.xlu0 %v1264, 56
        %v1945 = vpop.permute.xlu0 %1944
        %v1948 = vsel %vm332, %v1714, 0
        %1950 = vmatprep.subr.mxu0 0.0
        %1951 = vmatpush1.msra.mxu0 %v1945
        %1952 = vmatprep.subr.mxu0 0.0
        %1953 = vmatpush1.msra.mxu0 0.0
        %1954 = vmatprep.subr.mxu0 0.0
        %1955 = vmatpush1.msra.mxu0 0.0
        %1956 = vmatprep.subr.mxu0 0.0
        %1957 = vmatpush1.msra.mxu0 0.0
        %1958 = vmatprep.subr.mxu0 0.0
        %1959 = vmatpush1.msra.mxu0 0.0
        %1960 = vmatprep.subr.mxu0 0.0
        %1961 = vmatpush1.msra.mxu0 0.0
        %1962 = vmatprep.subr.mxu0 0.0
        %1963 = vmatpush1.msra.mxu0 0.0
        %1964 = vmatprep.subr.mxu0 0.0
        %1965 = vmatpush1.msra.mxu0 0.0
        %1966 = vmatprep.subr.mxu0 0.0
        %1967 = vmatpush1.msra.mxu0 0.0
        %1968 = vmatprep.subr.mxu0 0.0
        %1969 = vmatpush1.msra.mxu0 0.0
        %1970 = vmatprep.subr.mxu0 0.0
        %1971 = vmatpush1.msra.mxu0 0.0
        %1972 = vmatprep.subr.mxu0 0.0
        %1973 = vmatpush1.msra.mxu0 0.0
        %1974 = vmatprep.subr.mxu0 0.0
        %1975 = vmatpush1.msra.mxu0 0.0
        %1976 = vmatprep.subr.mxu0 0.0
        %1977 = vmatpush1.msra.mxu0 0.0
        %1978 = vmatprep.subr.mxu0 0.0
        %1979 = vmatpush1.msra.mxu0 0.0
        %1980 = vmatprep.subr.mxu0 0.0
        %1981 = vmatpush1.msra.mxu0 0.0
        %1982 = vmatprep.subr.mxu0 0.0
        %1983 = vmatpush1.msra.mxu0 0.0
        %1984 = vmatprep.subr.mxu0 0.0
        %1985 = vmatpush1.msra.mxu0 0.0
        %1986 = vmatprep.subr.mxu0 0.0
        %1987 = vmatpush1.msra.mxu0 0.0
        %1988 = vmatprep.subr.mxu0 0.0
        %1989 = vmatpush1.msra.mxu0 0.0
        %1990 = vmatprep.subr.mxu0 0.0
        %1991 = vmatpush1.msra.mxu0 0.0
        %1992 = vmatprep.subr.mxu0 0.0
        %1993 = vmatpush1.msra.mxu0 0.0
        %1994 = vmatprep.subr.mxu0 0.0
        %1995 = vmatpush1.msra.mxu0 0.0
        %1996 = vmatprep.subr.mxu0 0.0
        %1997 = vmatpush1.msra.mxu0 0.0
        %1998 = vmatprep.subr.mxu0 0.0
        %1999 = vmatpush1.msra.mxu0 0.0
        %2000 = vmatprep.subr.mxu0 0.0
        %2001 = vmatpush1.msra.mxu0 0.0
        %2002 = vmatprep.subr.mxu0 0.0
        %2003 = vmatpush1.msra.mxu0 0.0
        %2004 = vmatprep.subr.mxu0 0.0
        %2005 = vmatpush1.msra.mxu0 0.0
        %2006 = vmatprep.subr.mxu0 0.0
        %2007 = vmatpush1.msra.mxu0 0.0
        %2008 = vmatprep.subr.mxu0 0.0
        %2009 = vmatpush1.msra.mxu0 0.0
        %2010 = vmatprep.subr.mxu0 0.0
        %2011 = vmatpush1.msra.mxu0 0.0
        %2012 = vmatprep.subr.mxu0 0.0
        %2013 = vmatpush1.msra.mxu0 0.0
        %2014 = vmatprep.mubr.f32.mxu0 0.0
        %2015 = vmatmul.mubr.f32.gmra.mrb[0].mxu0 %v1948
        %v2016 = vpop.f32.mrb[0].mxu0
        %v2017 = vadd.f32 0.0, %v2016
        %v2018 = vpop.f32.mrb[0].mxu0
        %2019 = vdwg.mxu0
        %2020 = vrot.lane.b32.xlu0 %v1265, 56
        %v2021 = vpop.permute.xlu0 %2020
        %v2024 = vsel %vm332, %v1715, 0
        %2026 = vmatprep.subr.mxu0 0.0
        %2027 = vmatpush1.msra.mxu0 %v2021
        %2028 = vmatprep.subr.mxu0 0.0
        %2029 = vmatpush1.msra.mxu0 0.0
        %2030 = vmatprep.subr.mxu0 0.0
        %2031 = vmatpush1.msra.mxu0 0.0
        %2032 = vmatprep.subr.mxu0 0.0
        %2033 = vmatpush1.msra.mxu0 0.0
        %2034 = vmatprep.subr.mxu0 0.0
        %2035 = vmatpush1.msra.mxu0 0.0
        %2036 = vmatprep.subr.mxu0 0.0
        %2037 = vmatpush1.msra.mxu0 0.0
        %2038 = vmatprep.subr.mxu0 0.0
        %2039 = vmatpush1.msra.mxu0 0.0
        %2040 = vmatprep.subr.mxu0 0.0
        %2041 = vmatpush1.msra.mxu0 0.0
        %2042 = vmatprep.subr.mxu0 0.0
        %2043 = vmatpush1.msra.mxu0 0.0
        %2044 = vmatprep.subr.mxu0 0.0
        %2045 = vmatpush1.msra.mxu0 0.0
        %2046 = vmatprep.subr.mxu0 0.0
        %2047 = vmatpush1.msra.mxu0 0.0
        %2048 = vmatprep.subr.mxu0 0.0
        %2049 = vmatpush1.msra.mxu0 0.0
        %2050 = vmatprep.subr.mxu0 0.0
        %2051 = vmatpush1.msra.mxu0 0.0
        %2052 = vmatprep.subr.mxu0 0.0
        %2053 = vmatpush1.msra.mxu0 0.0
        %2054 = vmatprep.subr.mxu0 0.0
        %2055 = vmatpush1.msra.mxu0 0.0
        %2056 = vmatprep.subr.mxu0 0.0
        %2057 = vmatpush1.msra.mxu0 0.0
        %2058 = vmatprep.subr.mxu0 0.0
        %2059 = vmatpush1.msra.mxu0 0.0
        %2060 = vmatprep.subr.mxu0 0.0
        %2061 = vmatpush1.msra.mxu0 0.0
        %2062 = vmatprep.subr.mxu0 0.0
        %2063 = vmatpush1.msra.mxu0 0.0
        %2064 = vmatprep.subr.mxu0 0.0
        %2065 = vmatpush1.msra.mxu0 0.0
        %2066 = vmatprep.subr.mxu0 0.0
        %2067 = vmatpush1.msra.mxu0 0.0
        %2068 = vmatprep.subr.mxu0 0.0
        %2069 = vmatpush1.msra.mxu0 0.0
        %2070 = vmatprep.subr.mxu0 0.0
        %2071 = vmatpush1.msra.mxu0 0.0
        %2072 = vmatprep.subr.mxu0 0.0
        %2073 = vmatpush1.msra.mxu0 0.0
        %2074 = vmatprep.subr.mxu0 0.0
        %2075 = vmatpush1.msra.mxu0 0.0
        %2076 = vmatprep.subr.mxu0 0.0
        %2077 = vmatpush1.msra.mxu0 0.0
        %2078 = vmatprep.subr.mxu0 0.0
        %2079 = vmatpush1.msra.mxu0 0.0
        %2080 = vmatprep.subr.mxu0 0.0
        %2081 = vmatpush1.msra.mxu0 0.0
        %2082 = vmatprep.subr.mxu0 0.0
        %2083 = vmatpush1.msra.mxu0 0.0
        %2084 = vmatprep.subr.mxu0 0.0
        %2085 = vmatpush1.msra.mxu0 0.0
        %2086 = vmatprep.subr.mxu0 0.0
        %2087 = vmatpush1.msra.mxu0 0.0
        %2088 = vmatprep.subr.mxu0 0.0
        %2089 = vmatpush1.msra.mxu0 0.0
        %2090 = vmatprep.mubr.f32.mxu0 0.0
        %2091 = vmatmul.mubr.f32.gmra.mrb[0].mxu0 %v2024
        %v2092 = vpop.f32.mrb[0].mxu0
        %v2093 = vadd.f32 0.0, %v2092
        %v2094 = vpop.f32.mrb[0].mxu0
        %2095 = vdwg.mxu0
        %s2096 = scalar_lea.vmem %s2, 8
        %v2097 = vld [vmem:[%s2096] sm:$0xff]
        %v2099 = vsel %vm332, %v1789, 0
        %v2102 = vsel %vm332, %v1865, 0
        %v2105 = vsel %vm332, %v1941, 0
        %v2108 = vsel %vm332, %v2017, 0
        %v2111 = vsel %vm332, %v2093, 0
        %2113 = vmatprep.subr.mxu0 0.0
        %2114 = vmatpush1.msra.mxu0 %v2097
        %2115 = vmatprep.subr.mxu0 0.0
        %2116 = vmatpush1.msra.mxu0 0.0
        %2117 = vmatprep.subr.mxu0 0.0
        %2118 = vmatpush1.msra.mxu0 0.0
        %2119 = vmatprep.subr.mxu0 0.0
        %2120 = vmatpush1.msra.mxu0 0.0
        %2121 = vmatprep.subr.mxu0 0.0
        %2122 = vmatpush1.msra.mxu0 0.0
        %2123 = vmatprep.subr.mxu0 0.0
        %2124 = vmatpush1.msra.mxu0 0.0
        %2125 = vmatprep.subr.mxu0 0.0
        %2126 = vmatpush1.msra.mxu0 0.0
        %2127 = vmatprep.subr.mxu0 0.0
        %2128 = vmatpush1.msra.mxu0 0.0
        %2129 = vmatprep.subr.mxu0 0.0
        %2130 = vmatpush1.msra.mxu0 0.0
        %2131 = vmatprep.subr.mxu0 0.0
        %2132 = vmatpush1.msra.mxu0 0.0
        %2133 = vmatprep.subr.mxu0 0.0
        %2134 = vmatpush1.msra.mxu0 0.0
        %2135 = vmatprep.subr.mxu0 0.0
        %2136 = vmatpush1.msra.mxu0 0.0
        %2137 = vmatprep.subr.mxu0 0.0
        %2138 = vmatpush1.msra.mxu0 0.0
        %2139 = vmatprep.subr.mxu0 0.0
        %2140 = vmatpush1.msra.mxu0 0.0
        %2141 = vmatprep.subr.mxu0 0.0
        %2142 = vmatpush1.msra.mxu0 0.0
        %2143 = vmatprep.subr.mxu0 0.0
        %2144 = vmatpush1.msra.mxu0 0.0
        %2145 = vmatprep.subr.mxu0 0.0
        %2146 = vmatpush1.msra.mxu0 0.0
        %2147 = vmatprep.subr.mxu0 0.0
        %2148 = vmatpush1.msra.mxu0 0.0
        %2149 = vmatprep.subr.mxu0 0.0
        %2150 = vmatpush1.msra.mxu0 0.0
        %2151 = vmatprep.subr.mxu0 0.0
        %2152 = vmatpush1.msra.mxu0 0.0
        %2153 = vmatprep.subr.mxu0 0.0
        %2154 = vmatpush1.msra.mxu0 0.0
        %2155 = vmatprep.subr.mxu0 0.0
        %2156 = vmatpush1.msra.mxu0 0.0
        %2157 = vmatprep.subr.mxu0 0.0
        %2158 = vmatpush1.msra.mxu0 0.0
        %2159 = vmatprep.subr.mxu0 0.0
        %2160 = vmatpush1.msra.mxu0 0.0
        %2161 = vmatprep.subr.mxu0 0.0
        %2162 = vmatpush1.msra.mxu0 0.0
        %2163 = vmatprep.subr.mxu0 0.0
        %2164 = vmatpush1.msra.mxu0 0.0
        %2165 = vmatprep.subr.mxu0 0.0
        %2166 = vmatpush1.msra.mxu0 0.0
        %2167 = vmatprep.subr.mxu0 0.0
        %2168 = vmatpush1.msra.mxu0 0.0
        %2169 = vmatprep.subr.mxu0 0.0
        %2170 = vmatpush1.msra.mxu0 0.0
        %2171 = vmatprep.subr.mxu0 0.0
        %2172 = vmatpush1.msra.mxu0 0.0
        %2173 = vmatprep.subr.mxu0 0.0
        %2174 = vmatpush1.msra.mxu0 0.0
        %2175 = vmatprep.subr.mxu0 0.0
        %2176 = vmatpush1.msra.mxu0 0.0
        %2177 = vmatprep.mubr.f32.mxu0 0.0
        %2178 = vmatmul.mubr.f32.gmra.mrb[0].mxu0 %v2099
        %v2179 = vpop.f32.mrb[0].mxu0
        %v2180 = vadd.f32 0.0, %v2179
        %v2181 = vpop.f32.mrb[0].mxu0
        %2182 = vmatprep.mubr.f32.mxu0 0.0
        %2183 = vmatmul.mubr.f32.gmra.mrb[0].mxu0 %v2102
        %v2184 = vpop.f32.mrb[0].mxu0
        %v2185 = vadd.f32 0.0, %v2184
        %v2186 = vpop.f32.mrb[0].mxu0
        %2187 = vmatprep.mubr.f32.mxu0 0.0
        %2188 = vmatmul.mubr.f32.gmra.mrb[0].mxu0 %v2105
        %v2189 = vpop.f32.mrb[0].mxu0
        %v2190 = vadd.f32 0.0, %v2189
        %v2191 = vpop.f32.mrb[0].mxu0
        %2192 = vmatprep.mubr.f32.mxu0 0.0
        %2193 = vmatmul.mubr.f32.gmra.mrb[0].mxu0 %v2108
        %v2194 = vpop.f32.mrb[0].mxu0
        %v2195 = vadd.f32 0.0, %v2194
        %v2196 = vpop.f32.mrb[0].mxu0
        %2197 = vmatprep.mubr.f32.mxu0 0.0
        %2198 = vmatmul.mubr.f32.gmra.mrb[0].mxu0 %v2111
        %v2199 = vpop.f32.mrb[0].mxu0
        %v2200 = vadd.f32 0.0, %v2199
        %v2201 = vpop.f32.mrb[0].mxu0
        %2202 = vdwg.mxu0
        %v2203 = vadd.f32 %v1256, %v2180
        %v2204 = vadd.f32 %v1257, %v2185
        %v2205 = vadd.f32 %v1258, %v2190
        %v2206 = vadd.f32 %v1259, %v2195
        %v2207 = vadd.f32 %v1260, %v2200
        %v2208 = vld [vmem:[#allocation2] sm:$0xff]
        %v2209 = vld [vmem:[#allocation2 + $0x8] sm:$0xff]
        %v2210 = vld [vmem:[#allocation2 + $0x10] sm:$0xff]
        %v2211 = vld [vmem:[#allocation2 + $0x18] sm:$0xff]
        %v2212 = vld [vmem:[#allocation2 + $0x20] sm:$0xff]
        %2214 = vrot.lane.b32.xlu0 %v2208, 112
        %v2215 = vpop.permute.xlu0 %2214
        %2216 = vrot.lane.b32.xlu0 %v2208, 80
        %v2217 = vpop.permute.xlu0 %2216
        %v2218 = vsel %vm332, %v2215, 0
        %v2220 = vsel %vm332, %v2217, 0
        %2222 = vmatprep.subr.mxu0 0.0
        %2223 = vmatpush1.xpose.msra.mxu0 %v2220
        %2224 = vmatprep.subr.mxu0 0.0
        %2225 = vmatpush1.xpose.msra.mxu0 0.0
        %2226 = vmatprep.subr.mxu0 0.0
        %2227 = vmatpush1.xpose.msra.mxu0 0.0
        %2228 = vmatprep.subr.mxu0 0.0
        %2229 = vmatpush1.xpose.msra.mxu0 0.0
        %2230 = vmatprep.subr.mxu0 0.0
        %2231 = vmatpush1.xpose.msra.mxu0 0.0
        %2232 = vmatprep.subr.mxu0 0.0
        %2233 = vmatpush1.xpose.msra.mxu0 0.0
        %2234 = vmatprep.subr.mxu0 0.0
        %2235 = vmatpush1.xpose.msra.mxu0 0.0
        %2236 = vmatprep.subr.mxu0 0.0
        %2237 = vmatpush1.xpose.msra.mxu0 0.0
        %2238 = vmatprep.subr.mxu0 0.0
        %2239 = vmatpush1.xpose.msra.mxu0 0.0
        %2240 = vmatprep.subr.mxu0 0.0
        %2241 = vmatpush1.xpose.msra.mxu0 0.0
        %2242 = vmatprep.subr.mxu0 0.0
        %2243 = vmatpush1.xpose.msra.mxu0 0.0
        %2244 = vmatprep.subr.mxu0 0.0
        %2245 = vmatpush1.xpose.msra.mxu0 0.0
        %2246 = vmatprep.subr.mxu0 0.0
        %2247 = vmatpush1.xpose.msra.mxu0 0.0
        %2248 = vmatprep.subr.mxu0 0.0
        %2249 = vmatpush1.xpose.msra.mxu0 0.0
        %2250 = vmatprep.subr.mxu0 0.0
        %2251 = vmatpush1.xpose.msra.mxu0 0.0
        %2252 = vmatprep.subr.mxu0 0.0
        %2253 = vmatpush1.xpose.msra.mxu0 0.0
        %2254 = vmatprep.subr.mxu0 0.0
        %2255 = vmatpush1.xpose.msra.mxu0 0.0
        %2256 = vmatprep.subr.mxu0 0.0
        %2257 = vmatpush1.xpose.msra.mxu0 0.0
        %2258 = vmatprep.subr.mxu0 0.0
        %2259 = vmatpush1.xpose.msra.mxu0 0.0
        %2260 = vmatprep.subr.mxu0 0.0
        %2261 = vmatpush1.xpose.msra.mxu0 0.0
        %2262 = vmatprep.subr.mxu0 0.0
        %2263 = vmatpush1.xpose.msra.mxu0 0.0
        %2264 = vmatprep.subr.mxu0 0.0
        %2265 = vmatpush1.xpose.msra.mxu0 0.0
        %2266 = vmatprep.subr.mxu0 0.0
        %2267 = vmatpush1.xpose.msra.mxu0 0.0
        %2268 = vmatprep.subr.mxu0 0.0
        %2269 = vmatpush1.xpose.msra.mxu0 0.0
        %2270 = vmatprep.subr.mxu0 0.0
        %2271 = vmatpush1.xpose.msra.mxu0 0.0
        %2272 = vmatprep.subr.mxu0 0.0
        %2273 = vmatpush1.xpose.msra.mxu0 0.0
        %2274 = vmatprep.subr.mxu0 0.0
        %2275 = vmatpush1.xpose.msra.mxu0 0.0
        %2276 = vmatprep.subr.mxu0 0.0
        %2277 = vmatpush1.xpose.msra.mxu0 0.0
        %2278 = vmatprep.subr.mxu0 0.0
        %2279 = vmatpush1.xpose.msra.mxu0 0.0
        %2280 = vmatprep.subr.mxu0 0.0
        %2281 = vmatpush1.xpose.msra.mxu0 0.0
        %2282 = vmatprep.subr.mxu0 0.0
        %2283 = vmatpush1.xpose.msra.mxu0 0.0
        %2284 = vmatprep.subr.mxu0 0.0
        %2285 = vmatpush1.xpose.msra.mxu0 0.0
        %2286 = vmatprep.mubr.f32.mxu0 0.0
        %2287 = vmatmul.mubr.f32.gmra.mrb[0].mxu0 %v2218
        %v2288 = vpop.f32.mrb[0].mxu0
        %v2289 = vadd.f32 0.0, %v2288
        %v2290 = vpop.f32.mrb[0].mxu0
        %2291 = vdwg.mxu0
        %2293 = vrot.lane.b32.xlu0 %v2209, 112
        %v2294 = vpop.permute.xlu0 %2293
        %2295 = vrot.lane.b32.xlu0 %v2209, 80
        %v2296 = vpop.permute.xlu0 %2295
        %v2297 = vsel %vm332, %v2294, 0
        %v2299 = vsel %vm332, %v2296, 0
        %2301 = vmatprep.subr.mxu0 0.0
        %2302 = vmatpush1.xpose.msra.mxu0 %v2299
        %2303 = vmatprep.subr.mxu0 0.0
        %2304 = vmatpush1.xpose.msra.mxu0 0.0
        %2305 = vmatprep.subr.mxu0 0.0
        %2306 = vmatpush1.xpose.msra.mxu0 0.0
        %2307 = vmatprep.subr.mxu0 0.0
        %2308 = vmatpush1.xpose.msra.mxu0 0.0
        %2309 = vmatprep.subr.mxu0 0.0
        %2310 = vmatpush1.xpose.msra.mxu0 0.0
        %2311 = vmatprep.subr.mxu0 0.0
        %2312 = vmatpush1.xpose.msra.mxu0 0.0
        %2313 = vmatprep.subr.mxu0 0.0
        %2314 = vmatpush1.xpose.msra.mxu0 0.0
        %2315 = vmatprep.subr.mxu0 0.0
        %2316 = vmatpush1.xpose.msra.mxu0 0.0
        %2317 = vmatprep.subr.mxu0 0.0
        %2318 = vmatpush1.xpose.msra.mxu0 0.0
        %2319 = vmatprep.subr.mxu0 0.0
        %2320 = vmatpush1.xpose.msra.mxu0 0.0
        %2321 = vmatprep.subr.mxu0 0.0
        %2322 = vmatpush1.xpose.msra.mxu0 0.0
        %2323 = vmatprep.subr.mxu0 0.0
        %2324 = vmatpush1.xpose.msra.mxu0 0.0
        %2325 = vmatprep.subr.mxu0 0.0
        %2326 = vmatpush1.xpose.msra.mxu0 0.0
        %2327 = vmatprep.subr.mxu0 0.0
        %2328 = vmatpush1.xpose.msra.mxu0 0.0
        %2329 = vmatprep.subr.mxu0 0.0
        %2330 = vmatpush1.xpose.msra.mxu0 0.0
        %2331 = vmatprep.subr.mxu0 0.0
        %2332 = vmatpush1.xpose.msra.mxu0 0.0
        %2333 = vmatprep.subr.mxu0 0.0
        %2334 = vmatpush1.xpose.msra.mxu0 0.0
        %2335 = vmatprep.subr.mxu0 0.0
        %2336 = vmatpush1.xpose.msra.mxu0 0.0
        %2337 = vmatprep.subr.mxu0 0.0
        %2338 = vmatpush1.xpose.msra.mxu0 0.0
        %2339 = vmatprep.subr.mxu0 0.0
        %2340 = vmatpush1.xpose.msra.mxu0 0.0
        %2341 = vmatprep.subr.mxu0 0.0
        %2342 = vmatpush1.xpose.msra.mxu0 0.0
        %2343 = vmatprep.subr.mxu0 0.0
        %2344 = vmatpush1.xpose.msra.mxu0 0.0
        %2345 = vmatprep.subr.mxu0 0.0
        %2346 = vmatpush1.xpose.msra.mxu0 0.0
        %2347 = vmatprep.subr.mxu0 0.0
        %2348 = vmatpush1.xpose.msra.mxu0 0.0
        %2349 = vmatprep.subr.mxu0 0.0
        %2350 = vmatpush1.xpose.msra.mxu0 0.0
        %2351 = vmatprep.subr.mxu0 0.0
        %2352 = vmatpush1.xpose.msra.mxu0 0.0
        %2353 = vmatprep.subr.mxu0 0.0
        %2354 = vmatpush1.xpose.msra.mxu0 0.0
        %2355 = vmatprep.subr.mxu0 0.0
        %2356 = vmatpush1.xpose.msra.mxu0 0.0
        %2357 = vmatprep.subr.mxu0 0.0
        %2358 = vmatpush1.xpose.msra.mxu0 0.0
        %2359 = vmatprep.subr.mxu0 0.0
        %2360 = vmatpush1.xpose.msra.mxu0 0.0
        %2361 = vmatprep.subr.mxu0 0.0
        %2362 = vmatpush1.xpose.msra.mxu0 0.0
        %2363 = vmatprep.subr.mxu0 0.0
        %2364 = vmatpush1.xpose.msra.mxu0 0.0
        %2365 = vmatprep.mubr.f32.mxu0 0.0
        %2366 = vmatmul.mubr.f32.gmra.mrb[0].mxu0 %v2297
        %v2367 = vpop.f32.mrb[0].mxu0
        %v2368 = vadd.f32 0.0, %v2367
        %v2369 = vpop.f32.mrb[0].mxu0
        %2370 = vdwg.mxu0
        %2372 = vrot.lane.b32.xlu0 %v2210, 112
        %v2373 = vpop.permute.xlu0 %2372
        %2374 = vrot.lane.b32.xlu0 %v2210, 80
        %v2375 = vpop.permute.xlu0 %2374
        %v2376 = vsel %vm332, %v2373, 0
        %v2378 = vsel %vm332, %v2375, 0
        %2380 = vmatprep.subr.mxu0 0.0
        %2381 = vmatpush1.xpose.msra.mxu0 %v2378
        %2382 = vmatprep.subr.mxu0 0.0
        %2383 = vmatpush1.xpose.msra.mxu0 0.0
        %2384 = vmatprep.subr.mxu0 0.0
        %2385 = vmatpush1.xpose.msra.mxu0 0.0
        %2386 = vmatprep.subr.mxu0 0.0
        %2387 = vmatpush1.xpose.msra.mxu0 0.0
        %2388 = vmatprep.subr.mxu0 0.0
        %2389 = vmatpush1.xpose.msra.mxu0 0.0
        %2390 = vmatprep.subr.mxu0 0.0
        %2391 = vmatpush1.xpose.msra.mxu0 0.0
        %2392 = vmatprep.subr.mxu0 0.0
        %2393 = vmatpush1.xpose.msra.mxu0 0.0
        %2394 = vmatprep.subr.mxu0 0.0
        %2395 = vmatpush1.xpose.msra.mxu0 0.0
        %2396 = vmatprep.subr.mxu0 0.0
        %2397 = vmatpush1.xpose.msra.mxu0 0.0
        %2398 = vmatprep.subr.mxu0 0.0
        %2399 = vmatpush1.xpose.msra.mxu0 0.0
        %2400 = vmatprep.subr.mxu0 0.0
        %2401 = vmatpush1.xpose.msra.mxu0 0.0
        %2402 = vmatprep.subr.mxu0 0.0
        %2403 = vmatpush1.xpose.msra.mxu0 0.0
        %2404 = vmatprep.subr.mxu0 0.0
        %2405 = vmatpush1.xpose.msra.mxu0 0.0
        %2406 = vmatprep.subr.mxu0 0.0
        %2407 = vmatpush1.xpose.msra.mxu0 0.0
        %2408 = vmatprep.subr.mxu0 0.0
        %2409 = vmatpush1.xpose.msra.mxu0 0.0
        %2410 = vmatprep.subr.mxu0 0.0
        %2411 = vmatpush1.xpose.msra.mxu0 0.0
        %2412 = vmatprep.subr.mxu0 0.0
        %2413 = vmatpush1.xpose.msra.mxu0 0.0
        %2414 = vmatprep.subr.mxu0 0.0
        %2415 = vmatpush1.xpose.msra.mxu0 0.0
        %2416 = vmatprep.subr.mxu0 0.0
        %2417 = vmatpush1.xpose.msra.mxu0 0.0
        %2418 = vmatprep.subr.mxu0 0.0
        %2419 = vmatpush1.xpose.msra.mxu0 0.0
        %2420 = vmatprep.subr.mxu0 0.0
        %2421 = vmatpush1.xpose.msra.mxu0 0.0
        %2422 = vmatprep.subr.mxu0 0.0
        %2423 = vmatpush1.xpose.msra.mxu0 0.0
        %2424 = vmatprep.subr.mxu0 0.0
        %2425 = vmatpush1.xpose.msra.mxu0 0.0
        %2426 = vmatprep.subr.mxu0 0.0
        %2427 = vmatpush1.xpose.msra.mxu0 0.0
        %2428 = vmatprep.subr.mxu0 0.0
        %2429 = vmatpush1.xpose.msra.mxu0 0.0
        %2430 = vmatprep.subr.mxu0 0.0
        %2431 = vmatpush1.xpose.msra.mxu0 0.0
        %2432 = vmatprep.subr.mxu0 0.0
        %2433 = vmatpush1.xpose.msra.mxu0 0.0
        %2434 = vmatprep.subr.mxu0 0.0
        %2435 = vmatpush1.xpose.msra.mxu0 0.0
        %2436 = vmatprep.subr.mxu0 0.0
        %2437 = vmatpush1.xpose.msra.mxu0 0.0
        %2438 = vmatprep.subr.mxu0 0.0
        %2439 = vmatpush1.xpose.msra.mxu0 0.0
        %2440 = vmatprep.subr.mxu0 0.0
        %2441 = vmatpush1.xpose.msra.mxu0 0.0
        %2442 = vmatprep.subr.mxu0 0.0
        %2443 = vmatpush1.xpose.msra.mxu0 0.0
        %2444 = vmatprep.mubr.f32.mxu0 0.0
        %2445 = vmatmul.mubr.f32.gmra.mrb[0].mxu0 %v2376
        %v2446 = vpop.f32.mrb[0].mxu0
        %v2447 = vadd.f32 0.0, %v2446
        %v2448 = vpop.f32.mrb[0].mxu0
        %2449 = vdwg.mxu0
        %2451 = vrot.lane.b32.xlu0 %v2211, 112
        %v2452 = vpop.permute.xlu0 %2451
        %2453 = vrot.lane.b32.xlu0 %v2211, 80
        %v2454 = vpop.permute.xlu0 %2453
        %v2455 = vsel %vm332, %v2452, 0
        %v2457 = vsel %vm332, %v2454, 0
        %2459 = vmatprep.subr.mxu0 0.0
        %2460 = vmatpush1.xpose.msra.mxu0 %v2457
        %2461 = vmatprep.subr.mxu0 0.0
        %2462 = vmatpush1.xpose.msra.mxu0 0.0
        %2463 = vmatprep.subr.mxu0 0.0
        %2464 = vmatpush1.xpose.msra.mxu0 0.0
        %2465 = vmatprep.subr.mxu0 0.0
        %2466 = vmatpush1.xpose.msra.mxu0 0.0
        %2467 = vmatprep.subr.mxu0 0.0
        %2468 = vmatpush1.xpose.msra.mxu0 0.0
        %2469 = vmatprep.subr.mxu0 0.0
        %2470 = vmatpush1.xpose.msra.mxu0 0.0
        %2471 = vmatprep.subr.mxu0 0.0
        %2472 = vmatpush1.xpose.msra.mxu0 0.0
        %2473 = vmatprep.subr.mxu0 0.0
        %2474 = vmatpush1.xpose.msra.mxu0 0.0
        %2475 = vmatprep.subr.mxu0 0.0
        %2476 = vmatpush1.xpose.msra.mxu0 0.0
        %2477 = vmatprep.subr.mxu0 0.0
        %2478 = vmatpush1.xpose.msra.mxu0 0.0
        %2479 = vmatprep.subr.mxu0 0.0
        %2480 = vmatpush1.xpose.msra.mxu0 0.0
        %2481 = vmatprep.subr.mxu0 0.0
        %2482 = vmatpush1.xpose.msra.mxu0 0.0
        %2483 = vmatprep.subr.mxu0 0.0
        %2484 = vmatpush1.xpose.msra.mxu0 0.0
        %2485 = vmatprep.subr.mxu0 0.0
        %2486 = vmatpush1.xpose.msra.mxu0 0.0
        %2487 = vmatprep.subr.mxu0 0.0
        %2488 = vmatpush1.xpose.msra.mxu0 0.0
        %2489 = vmatprep.subr.mxu0 0.0
        %2490 = vmatpush1.xpose.msra.mxu0 0.0
        %2491 = vmatprep.subr.mxu0 0.0
        %2492 = vmatpush1.xpose.msra.mxu0 0.0
        %2493 = vmatprep.subr.mxu0 0.0
        %2494 = vmatpush1.xpose.msra.mxu0 0.0
        %2495 = vmatprep.subr.mxu0 0.0
        %2496 = vmatpush1.xpose.msra.mxu0 0.0
        %2497 = vmatprep.subr.mxu0 0.0
        %2498 = vmatpush1.xpose.msra.mxu0 0.0
        %2499 = vmatprep.subr.mxu0 0.0
        %2500 = vmatpush1.xpose.msra.mxu0 0.0
        %2501 = vmatprep.subr.mxu0 0.0
        %2502 = vmatpush1.xpose.msra.mxu0 0.0
        %2503 = vmatprep.subr.mxu0 0.0
        %2504 = vmatpush1.xpose.msra.mxu0 0.0
        %2505 = vmatprep.subr.mxu0 0.0
        %2506 = vmatpush1.xpose.msra.mxu0 0.0
        %2507 = vmatprep.subr.mxu0 0.0
        %2508 = vmatpush1.xpose.msra.mxu0 0.0
        %2509 = vmatprep.subr.mxu0 0.0
        %2510 = vmatpush1.xpose.msra.mxu0 0.0
        %2511 = vmatprep.subr.mxu0 0.0
        %2512 = vmatpush1.xpose.msra.mxu0 0.0
        %2513 = vmatprep.subr.mxu0 0.0
        %2514 = vmatpush1.xpose.msra.mxu0 0.0
        %2515 = vmatprep.subr.mxu0 0.0
        %2516 = vmatpush1.xpose.msra.mxu0 0.0
        %2517 = vmatprep.subr.mxu0 0.0
        %2518 = vmatpush1.xpose.msra.mxu0 0.0
        %2519 = vmatprep.subr.mxu0 0.0
        %2520 = vmatpush1.xpose.msra.mxu0 0.0
        %2521 = vmatprep.subr.mxu0 0.0
        %2522 = vmatpush1.xpose.msra.mxu0 0.0
        %2523 = vmatprep.mubr.f32.mxu0 0.0
        %2524 = vmatmul.mubr.f32.gmra.mrb[0].mxu0 %v2455
        %v2525 = vpop.f32.mrb[0].mxu0
        %v2526 = vadd.f32 0.0, %v2525
        %v2527 = vpop.f32.mrb[0].mxu0
        %2528 = vdwg.mxu0
        %2530 = vrot.lane.b32.xlu0 %v2212, 112
        %v2531 = vpop.permute.xlu0 %2530
        %2532 = vrot.lane.b32.xlu0 %v2212, 80
        %v2533 = vpop.permute.xlu0 %2532
        %v2534 = vsel %vm332, %v2531, 0
        %v2536 = vsel %vm332, %v2533, 0
        %2538 = vmatprep.subr.mxu0 0.0
        %2539 = vmatpush1.xpose.msra.mxu0 %v2536
        %2540 = vmatprep.subr.mxu0 0.0
        %2541 = vmatpush1.xpose.msra.mxu0 0.0
        %2542 = vmatprep.subr.mxu0 0.0
        %2543 = vmatpush1.xpose.msra.mxu0 0.0
        %2544 = vmatprep.subr.mxu0 0.0
        %2545 = vmatpush1.xpose.msra.mxu0 0.0
        %2546 = vmatprep.subr.mxu0 0.0
        %2547 = vmatpush1.xpose.msra.mxu0 0.0
        %2548 = vmatprep.subr.mxu0 0.0
        %2549 = vmatpush1.xpose.msra.mxu0 0.0
        %2550 = vmatprep.subr.mxu0 0.0
        %2551 = vmatpush1.xpose.msra.mxu0 0.0
        %2552 = vmatprep.subr.mxu0 0.0
        %2553 = vmatpush1.xpose.msra.mxu0 0.0
        %2554 = vmatprep.subr.mxu0 0.0
        %2555 = vmatpush1.xpose.msra.mxu0 0.0
        %2556 = vmatprep.subr.mxu0 0.0
        %2557 = vmatpush1.xpose.msra.mxu0 0.0
        %2558 = vmatprep.subr.mxu0 0.0
        %2559 = vmatpush1.xpose.msra.mxu0 0.0
        %2560 = vmatprep.subr.mxu0 0.0
        %2561 = vmatpush1.xpose.msra.mxu0 0.0
        %2562 = vmatprep.subr.mxu0 0.0
        %2563 = vmatpush1.xpose.msra.mxu0 0.0
        %2564 = vmatprep.subr.mxu0 0.0
        %2565 = vmatpush1.xpose.msra.mxu0 0.0
        %2566 = vmatprep.subr.mxu0 0.0
        %2567 = vmatpush1.xpose.msra.mxu0 0.0
        %2568 = vmatprep.subr.mxu0 0.0
        %2569 = vmatpush1.xpose.msra.mxu0 0.0
        %2570 = vmatprep.subr.mxu0 0.0
        %2571 = vmatpush1.xpose.msra.mxu0 0.0
        %2572 = vmatprep.subr.mxu0 0.0
        %2573 = vmatpush1.xpose.msra.mxu0 0.0
        %2574 = vmatprep.subr.mxu0 0.0
        %2575 = vmatpush1.xpose.msra.mxu0 0.0
        %2576 = vmatprep.subr.mxu0 0.0
        %2577 = vmatpush1.xpose.msra.mxu0 0.0
        %2578 = vmatprep.subr.mxu0 0.0
        %2579 = vmatpush1.xpose.msra.mxu0 0.0
        %2580 = vmatprep.subr.mxu0 0.0
        %2581 = vmatpush1.xpose.msra.mxu0 0.0
        %2582 = vmatprep.subr.mxu0 0.0
        %2583 = vmatpush1.xpose.msra.mxu0 0.0
        %2584 = vmatprep.subr.mxu0 0.0
        %2585 = vmatpush1.xpose.msra.mxu0 0.0
        %2586 = vmatprep.subr.mxu0 0.0
        %2587 = vmatpush1.xpose.msra.mxu0 0.0
        %2588 = vmatprep.subr.mxu0 0.0
        %2589 = vmatpush1.xpose.msra.mxu0 0.0
        %2590 = vmatprep.subr.mxu0 0.0
        %2591 = vmatpush1.xpose.msra.mxu0 0.0
        %2592 = vmatprep.subr.mxu0 0.0
        %2593 = vmatpush1.xpose.msra.mxu0 0.0
        %2594 = vmatprep.subr.mxu0 0.0
        %2595 = vmatpush1.xpose.msra.mxu0 0.0
        %2596 = vmatprep.subr.mxu0 0.0
        %2597 = vmatpush1.xpose.msra.mxu0 0.0
        %2598 = vmatprep.subr.mxu0 0.0
        %2599 = vmatpush1.xpose.msra.mxu0 0.0
        %2600 = vmatprep.subr.mxu0 0.0
        %2601 = vmatpush1.xpose.msra.mxu0 0.0
        %2602 = vmatprep.mubr.f32.mxu0 0.0
        %2603 = vmatmul.mubr.f32.gmra.mrb[0].mxu0 %v2534
        %v2604 = vpop.f32.mrb[0].mxu0
        %v2605 = vadd.f32 0.0, %v2604
        %v2606 = vpop.f32.mrb[0].mxu0
        %2607 = vdwg.mxu0
        %v2608 = vsel %vm332, %v2289, -inf
        %2609 = vmax.xlane.f32.xlu0 %v2608
        %v2610 = vpop.xlane.xlu0 %2609
        %v2611 = vsel %vm332, %v2368, -inf
        %2612 = vmax.xlane.f32.xlu0 %v2611
        %v2613 = vpop.xlane.xlu0 %2612
        %v2614 = vsel %vm332, %v2447, -inf
        %2615 = vmax.xlane.f32.xlu0 %v2614
        %v2616 = vpop.xlane.xlu0 %2615
        %v2617 = vsel %vm332, %v2526, -inf
        %2618 = vmax.xlane.f32.xlu0 %v2617
        %v2619 = vpop.xlane.xlu0 %2618
        %v2620 = vsel %vm332, %v2605, -inf
        %2621 = vmax.xlane.f32.xlu0 %v2620
        %v2622 = vpop.xlane.xlu0 %2621
        %v2623 = vsub.f32 %v2289, %v2610
        %v2624 = vsub.f32 %v2368, %v2613
        %v2625 = vsub.f32 %v2447, %v2616
        %v2626 = vsub.f32 %v2526, %v2619
        %v2627 = vsub.f32 %v2605, %v2622
        %v2628 = vmul.f32 %v2623, 1.442695
        %v2629 = vpow.pop %v2628
        %v2630 = vmul.f32 %v2624, 1.442695
        %v2631 = vpow.pop %v2630
        %v2632 = vmul.f32 %v2625, 1.442695
        %v2633 = vpow.pop %v2632
        %v2634 = vmul.f32 %v2626, 1.442695
        %v2635 = vpow.pop %v2634
        %v2636 = vmul.f32 %v2627, 1.442695
        %v2637 = vpow.pop %v2636
        %v2638 = vsel %vm332, %v2629, 0.0
        %2639 = vadd.xlane.f32.xlu0 %v2638
        %v2640 = vpop.xlane.xlu0 %2639
        %v2641 = vsel %vm332, %v2631, 0.0
        %2642 = vadd.xlane.f32.xlu0 %v2641
        %v2643 = vpop.xlane.xlu0 %2642
        %v2644 = vsel %vm332, %v2633, 0.0
        %2645 = vadd.xlane.f32.xlu0 %v2644
        %v2646 = vpop.xlane.xlu0 %2645
        %v2647 = vsel %vm332, %v2635, 0.0
        %2648 = vadd.xlane.f32.xlu0 %v2647
        %v2649 = vpop.xlane.xlu0 %2648
        %v2650 = vsel %vm332, %v2637, 0.0
        %2651 = vadd.xlane.f32.xlu0 %v2650
        %v2652 = vpop.xlane.xlu0 %2651
        %v2653 = vrcp.pop %v2640
        %v2654 = vrcp.pop %v2643
        %v2655 = vrcp.pop %v2646
        %v2656 = vrcp.pop %v2649
        %v2657 = vrcp.pop %v2652
        %v2658 = vmul.f32 %v2629, %v2653
        %v2659 = vmul.f32 %v2631, %v2654
        %v2660 = vmul.f32 %v2633, %v2655
        %v2661 = vmul.f32 %v2635, %v2656
        %v2662 = vmul.f32 %v2637, %v2657
        %2663 = vrot.lane.b32.xlu0 %v2208, 48
        %v2664 = vpop.permute.xlu0 %2663
        %v2667 = vsel %vm332, %v2658, 0
        %2669 = vmatprep.subr.mxu0 0.0
        %2670 = vmatpush1.msra.mxu0 %v2664
        %2671 = vmatprep.subr.mxu0 0.0
        %2672 = vmatpush1.msra.mxu0 0.0
        %2673 = vmatprep.subr.mxu0 0.0
        %2674 = vmatpush1.msra.mxu0 0.0
        %2675 = vmatprep.subr.mxu0 0.0
        %2676 = vmatpush1.msra.mxu0 0.0
        %2677 = vmatprep.subr.mxu0 0.0
        %2678 = vmatpush1.msra.mxu0 0.0
        %2679 = vmatprep.subr.mxu0 0.0
        %2680 = vmatpush1.msra.mxu0 0.0
        %2681 = vmatprep.subr.mxu0 0.0
        %2682 = vmatpush1.msra.mxu0 0.0
        %2683 = vmatprep.subr.mxu0 0.0
        %2684 = vmatpush1.msra.mxu0 0.0
        %2685 = vmatprep.subr.mxu0 0.0
        %2686 = vmatpush1.msra.mxu0 0.0
        %2687 = vmatprep.subr.mxu0 0.0
        %2688 = vmatpush1.msra.mxu0 0.0
        %2689 = vmatprep.subr.mxu0 0.0
        %2690 = vmatpush1.msra.mxu0 0.0
        %2691 = vmatprep.subr.mxu0 0.0
        %2692 = vmatpush1.msra.mxu0 0.0
        %2693 = vmatprep.subr.mxu0 0.0
        %2694 = vmatpush1.msra.mxu0 0.0
        %2695 = vmatprep.subr.mxu0 0.0
        %2696 = vmatpush1.msra.mxu0 0.0
        %2697 = vmatprep.subr.mxu0 0.0
        %2698 = vmatpush1.msra.mxu0 0.0
        %2699 = vmatprep.subr.mxu0 0.0
        %2700 = vmatpush1.msra.mxu0 0.0
        %2701 = vmatprep.subr.mxu0 0.0
        %2702 = vmatpush1.msra.mxu0 0.0
        %2703 = vmatprep.subr.mxu0 0.0
        %2704 = vmatpush1.msra.mxu0 0.0
        %2705 = vmatprep.subr.mxu0 0.0
        %2706 = vmatpush1.msra.mxu0 0.0
        %2707 = vmatprep.subr.mxu0 0.0
        %2708 = vmatpush1.msra.mxu0 0.0
        %2709 = vmatprep.subr.mxu0 0.0
        %2710 = vmatpush1.msra.mxu0 0.0
        %2711 = vmatprep.subr.mxu0 0.0
        %2712 = vmatpush1.msra.mxu0 0.0
        %2713 = vmatprep.subr.mxu0 0.0
        %2714 = vmatpush1.msra.mxu0 0.0
        %2715 = vmatprep.subr.mxu0 0.0
        %2716 = vmatpush1.msra.mxu0 0.0
        %2717 = vmatprep.subr.mxu0 0.0
        %2718 = vmatpush1.msra.mxu0 0.0
        %2719 = vmatprep.subr.mxu0 0.0
        %2720 = vmatpush1.msra.mxu0 0.0
        %2721 = vmatprep.subr.mxu0 0.0
        %2722 = vmatpush1.msra.mxu0 0.0
        %2723 = vmatprep.subr.mxu0 0.0
        %2724 = vmatpush1.msra.mxu0 0.0
        %2725 = vmatprep.subr.mxu0 0.0
        %2726 = vmatpush1.msra.mxu0 0.0
        %2727 = vmatprep.subr.mxu0 0.0
        %2728 = vmatpush1.msra.mxu0 0.0
        %2729 = vmatprep.subr.mxu0 0.0
        %2730 = vmatpush1.msra.mxu0 0.0
        %2731 = vmatprep.subr.mxu0 0.0
        %2732 = vmatpush1.msra.mxu0 0.0
        %2733 = vmatprep.mubr.f32.mxu0 0.0
        %2734 = vmatmul.mubr.f32.gmra.mrb[0].mxu0 %v2667
        %v2735 = vpop.f32.mrb[0].mxu0
        %v2736 = vadd.f32 0.0, %v2735
        %v2737 = vpop.f32.mrb[0].mxu0
        %2738 = vdwg.mxu0
        %2739 = vrot.lane.b32.xlu0 %v2209, 48
        %v2740 = vpop.permute.xlu0 %2739
        %v2743 = vsel %vm332, %v2659, 0
        %2745 = vmatprep.subr.mxu0 0.0
        %2746 = vmatpush1.msra.mxu0 %v2740
        %2747 = vmatprep.subr.mxu0 0.0
        %2748 = vmatpush1.msra.mxu0 0.0
        %2749 = vmatprep.subr.mxu0 0.0
        %2750 = vmatpush1.msra.mxu0 0.0
        %2751 = vmatprep.subr.mxu0 0.0
        %2752 = vmatpush1.msra.mxu0 0.0
        %2753 = vmatprep.subr.mxu0 0.0
        %2754 = vmatpush1.msra.mxu0 0.0
        %2755 = vmatprep.subr.mxu0 0.0
        %2756 = vmatpush1.msra.mxu0 0.0
        %2757 = vmatprep.subr.mxu0 0.0
        %2758 = vmatpush1.msra.mxu0 0.0
        %2759 = vmatprep.subr.mxu0 0.0
        %2760 = vmatpush1.msra.mxu0 0.0
        %2761 = vmatprep.subr.mxu0 0.0
        %2762 = vmatpush1.msra.mxu0 0.0
        %2763 = vmatprep.subr.mxu0 0.0
        %2764 = vmatpush1.msra.mxu0 0.0
        %2765 = vmatprep.subr.mxu0 0.0
        %2766 = vmatpush1.msra.mxu0 0.0
        %2767 = vmatprep.subr.mxu0 0.0
        %2768 = vmatpush1.msra.mxu0 0.0
        %2769 = vmatprep.subr.mxu0 0.0
        %2770 = vmatpush1.msra.mxu0 0.0
        %2771 = vmatprep.subr.mxu0 0.0
        %2772 = vmatpush1.msra.mxu0 0.0
        %2773 = vmatprep.subr.mxu0 0.0
        %2774 = vmatpush1.msra.mxu0 0.0
        %2775 = vmatprep.subr.mxu0 0.0
        %2776 = vmatpush1.msra.mxu0 0.0
        %2777 = vmatprep.subr.mxu0 0.0
        %2778 = vmatpush1.msra.mxu0 0.0
        %2779 = vmatprep.subr.mxu0 0.0
        %2780 = vmatpush1.msra.mxu0 0.0
        %2781 = vmatprep.subr.mxu0 0.0
        %2782 = vmatpush1.msra.mxu0 0.0
        %2783 = vmatprep.subr.mxu0 0.0
        %2784 = vmatpush1.msra.mxu0 0.0
        %2785 = vmatprep.subr.mxu0 0.0
        %2786 = vmatpush1.msra.mxu0 0.0
        %2787 = vmatprep.subr.mxu0 0.0
        %2788 = vmatpush1.msra.mxu0 0.0
        %2789 = vmatprep.subr.mxu0 0.0
        %2790 = vmatpush1.msra.mxu0 0.0
        %2791 = vmatprep.subr.mxu0 0.0
        %2792 = vmatpush1.msra.mxu0 0.0
        %2793 = vmatprep.subr.mxu0 0.0
        %2794 = vmatpush1.msra.mxu0 0.0
        %2795 = vmatprep.subr.mxu0 0.0
        %2796 = vmatpush1.msra.mxu0 0.0
        %2797 = vmatprep.subr.mxu0 0.0
        %2798 = vmatpush1.msra.mxu0 0.0
        %2799 = vmatprep.subr.mxu0 0.0
        %2800 = vmatpush1.msra.mxu0 0.0
        %2801 = vmatprep.subr.mxu0 0.0
        %2802 = vmatpush1.msra.mxu0 0.0
        %2803 = vmatprep.subr.mxu0 0.0
        %2804 = vmatpush1.msra.mxu0 0.0
        %2805 = vmatprep.subr.mxu0 0.0
        %2806 = vmatpush1.msra.mxu0 0.0
        %2807 = vmatprep.subr.mxu0 0.0
        %2808 = vmatpush1.msra.mxu0 0.0
        %2809 = vmatprep.mubr.f32.mxu0 0.0
        %2810 = vmatmul.mubr.f32.gmra.mrb[0].mxu0 %v2743
        %v2811 = vpop.f32.mrb[0].mxu0
        %v2812 = vadd.f32 0.0, %v2811
        %v2813 = vpop.f32.mrb[0].mxu0
        %2814 = vdwg.mxu0
        %2815 = vrot.lane.b32.xlu0 %v2210, 48
        %v2816 = vpop.permute.xlu0 %2815
        %v2819 = vsel %vm332, %v2660, 0
        %2821 = vmatprep.subr.mxu0 0.0
        %2822 = vmatpush1.msra.mxu0 %v2816
        %2823 = vmatprep.subr.mxu0 0.0
        %2824 = vmatpush1.msra.mxu0 0.0
        %2825 = vmatprep.subr.mxu0 0.0
        %2826 = vmatpush1.msra.mxu0 0.0
        %2827 = vmatprep.subr.mxu0 0.0
        %2828 = vmatpush1.msra.mxu0 0.0
        %2829 = vmatprep.subr.mxu0 0.0
        %2830 = vmatpush1.msra.mxu0 0.0
        %2831 = vmatprep.subr.mxu0 0.0
        %2832 = vmatpush1.msra.mxu0 0.0
        %2833 = vmatprep.subr.mxu0 0.0
        %2834 = vmatpush1.msra.mxu0 0.0
        %2835 = vmatprep.subr.mxu0 0.0
        %2836 = vmatpush1.msra.mxu0 0.0
        %2837 = vmatprep.subr.mxu0 0.0
        %2838 = vmatpush1.msra.mxu0 0.0
        %2839 = vmatprep.subr.mxu0 0.0
        %2840 = vmatpush1.msra.mxu0 0.0
        %2841 = vmatprep.subr.mxu0 0.0
        %2842 = vmatpush1.msra.mxu0 0.0
        %2843 = vmatprep.subr.mxu0 0.0
        %2844 = vmatpush1.msra.mxu0 0.0
        %2845 = vmatprep.subr.mxu0 0.0
        %2846 = vmatpush1.msra.mxu0 0.0
        %2847 = vmatprep.subr.mxu0 0.0
        %2848 = vmatpush1.msra.mxu0 0.0
        %2849 = vmatprep.subr.mxu0 0.0
        %2850 = vmatpush1.msra.mxu0 0.0
        %2851 = vmatprep.subr.mxu0 0.0
        %2852 = vmatpush1.msra.mxu0 0.0
        %2853 = vmatprep.subr.mxu0 0.0
        %2854 = vmatpush1.msra.mxu0 0.0
        %2855 = vmatprep.subr.mxu0 0.0
        %2856 = vmatpush1.msra.mxu0 0.0
        %2857 = vmatprep.subr.mxu0 0.0
        %2858 = vmatpush1.msra.mxu0 0.0
        %2859 = vmatprep.subr.mxu0 0.0
        %2860 = vmatpush1.msra.mxu0 0.0
        %2861 = vmatprep.subr.mxu0 0.0
        %2862 = vmatpush1.msra.mxu0 0.0
        %2863 = vmatprep.subr.mxu0 0.0
        %2864 = vmatpush1.msra.mxu0 0.0
        %2865 = vmatprep.subr.mxu0 0.0
        %2866 = vmatpush1.msra.mxu0 0.0
        %2867 = vmatprep.subr.mxu0 0.0
        %2868 = vmatpush1.msra.mxu0 0.0
        %2869 = vmatprep.subr.mxu0 0.0
        %2870 = vmatpush1.msra.mxu0 0.0
        %2871 = vmatprep.subr.mxu0 0.0
        %2872 = vmatpush1.msra.mxu0 0.0
        %2873 = vmatprep.subr.mxu0 0.0
        %2874 = vmatpush1.msra.mxu0 0.0
        %2875 = vmatprep.subr.mxu0 0.0
        %2876 = vmatpush1.msra.mxu0 0.0
        %2877 = vmatprep.subr.mxu0 0.0
        %2878 = vmatpush1.msra.mxu0 0.0
        %2879 = vmatprep.subr.mxu0 0.0
        %2880 = vmatpush1.msra.mxu0 0.0
        %2881 = vmatprep.subr.mxu0 0.0
        %2882 = vmatpush1.msra.mxu0 0.0
        %2883 = vmatprep.subr.mxu0 0.0
        %2884 = vmatpush1.msra.mxu0 0.0
        %2885 = vmatprep.mubr.f32.mxu0 0.0
        %2886 = vmatmul.mubr.f32.gmra.mrb[0].mxu0 %v2819
        %v2887 = vpop.f32.mrb[0].mxu0
        %v2888 = vadd.f32 0.0, %v2887
        %v2889 = vpop.f32.mrb[0].mxu0
        %2890 = vdwg.mxu0
        %2891 = vrot.lane.b32.xlu0 %v2211, 48
        %v2892 = vpop.permute.xlu0 %2891
        %v2895 = vsel %vm332, %v2661, 0
        %2897 = vmatprep.subr.mxu0 0.0
        %2898 = vmatpush1.msra.mxu0 %v2892
        %2899 = vmatprep.subr.mxu0 0.0
        %2900 = vmatpush1.msra.mxu0 0.0
        %2901 = vmatprep.subr.mxu0 0.0
        %2902 = vmatpush1.msra.mxu0 0.0
        %2903 = vmatprep.subr.mxu0 0.0
        %2904 = vmatpush1.msra.mxu0 0.0
        %2905 = vmatprep.subr.mxu0 0.0
        %2906 = vmatpush1.msra.mxu0 0.0
        %2907 = vmatprep.subr.mxu0 0.0
        %2908 = vmatpush1.msra.mxu0 0.0
        %2909 = vmatprep.subr.mxu0 0.0
        %2910 = vmatpush1.msra.mxu0 0.0
        %2911 = vmatprep.subr.mxu0 0.0
        %2912 = vmatpush1.msra.mxu0 0.0
        %2913 = vmatprep.subr.mxu0 0.0
        %2914 = vmatpush1.msra.mxu0 0.0
        %2915 = vmatprep.subr.mxu0 0.0
        %2916 = vmatpush1.msra.mxu0 0.0
        %2917 = vmatprep.subr.mxu0 0.0
        %2918 = vmatpush1.msra.mxu0 0.0
        %2919 = vmatprep.subr.mxu0 0.0
        %2920 = vmatpush1.msra.mxu0 0.0
        %2921 = vmatprep.subr.mxu0 0.0
        %2922 = vmatpush1.msra.mxu0 0.0
        %2923 = vmatprep.subr.mxu0 0.0
        %2924 = vmatpush1.msra.mxu0 0.0
        %2925 = vmatprep.subr.mxu0 0.0
        %2926 = vmatpush1.msra.mxu0 0.0
        %2927 = vmatprep.subr.mxu0 0.0
        %2928 = vmatpush1.msra.mxu0 0.0
        %2929 = vmatprep.subr.mxu0 0.0
        %2930 = vmatpush1.msra.mxu0 0.0
        %2931 = vmatprep.subr.mxu0 0.0
        %2932 = vmatpush1.msra.mxu0 0.0
        %2933 = vmatprep.subr.mxu0 0.0
        %2934 = vmatpush1.msra.mxu0 0.0
        %2935 = vmatprep.subr.mxu0 0.0
        %2936 = vmatpush1.msra.mxu0 0.0
        %2937 = vmatprep.subr.mxu0 0.0
        %2938 = vmatpush1.msra.mxu0 0.0
        %2939 = vmatprep.subr.mxu0 0.0
        %2940 = vmatpush1.msra.mxu0 0.0
        %2941 = vmatprep.subr.mxu0 0.0
        %2942 = vmatpush1.msra.mxu0 0.0
        %2943 = vmatprep.subr.mxu0 0.0
        %2944 = vmatpush1.msra.mxu0 0.0
        %2945 = vmatprep.subr.mxu0 0.0
        %2946 = vmatpush1.msra.mxu0 0.0
        %2947 = vmatprep.subr.mxu0 0.0
        %2948 = vmatpush1.msra.mxu0 0.0
        %2949 = vmatprep.subr.mxu0 0.0
        %2950 = vmatpush1.msra.mxu0 0.0
        %2951 = vmatprep.subr.mxu0 0.0
        %2952 = vmatpush1.msra.mxu0 0.0
        %2953 = vmatprep.subr.mxu0 0.0
        %2954 = vmatpush1.msra.mxu0 0.0
        %2955 = vmatprep.subr.mxu0 0.0
        %2956 = vmatpush1.msra.mxu0 0.0
        %2957 = vmatprep.subr.mxu0 0.0
        %2958 = vmatpush1.msra.mxu0 0.0
        %2959 = vmatprep.subr.mxu0 0.0
        %2960 = vmatpush1.msra.mxu0 0.0
        %2961 = vmatprep.mubr.f32.mxu0 0.0
        %2962 = vmatmul.mubr.f32.gmra.mrb[0].mxu0 %v2895
        %v2963 = vpop.f32.mrb[0].mxu0
        %v2964 = vadd.f32 0.0, %v2963
        %v2965 = vpop.f32.mrb[0].mxu0
        %2966 = vdwg.mxu0
        %2967 = vrot.lane.b32.xlu0 %v2212, 48
        %v2968 = vpop.permute.xlu0 %2967
        %v2971 = vsel %vm332, %v2662, 0
        %2973 = vmatprep.subr.mxu0 0.0
        %2974 = vmatpush1.msra.mxu0 %v2968
        %2975 = vmatprep.subr.mxu0 0.0
        %2976 = vmatpush1.msra.mxu0 0.0
        %2977 = vmatprep.subr.mxu0 0.0
        %2978 = vmatpush1.msra.mxu0 0.0
        %2979 = vmatprep.subr.mxu0 0.0
        %2980 = vmatpush1.msra.mxu0 0.0
        %2981 = vmatprep.subr.mxu0 0.0
        %2982 = vmatpush1.msra.mxu0 0.0
        %2983 = vmatprep.subr.mxu0 0.0
        %2984 = vmatpush1.msra.mxu0 0.0
        %2985 = vmatprep.subr.mxu0 0.0
        %2986 = vmatpush1.msra.mxu0 0.0
        %2987 = vmatprep.subr.mxu0 0.0
        %2988 = vmatpush1.msra.mxu0 0.0
        %2989 = vmatprep.subr.mxu0 0.0
        %2990 = vmatpush1.msra.mxu0 0.0
        %2991 = vmatprep.subr.mxu0 0.0
        %2992 = vmatpush1.msra.mxu0 0.0
        %2993 = vmatprep.subr.mxu0 0.0
        %2994 = vmatpush1.msra.mxu0 0.0
        %2995 = vmatprep.subr.mxu0 0.0
        %2996 = vmatpush1.msra.mxu0 0.0
        %2997 = vmatprep.subr.mxu0 0.0
        %2998 = vmatpush1.msra.mxu0 0.0
        %2999 = vmatprep.subr.mxu0 0.0
        %3000 = vmatpush1.msra.mxu0 0.0
        %3001 = vmatprep.subr.mxu0 0.0
        %3002 = vmatpush1.msra.mxu0 0.0
        %3003 = vmatprep.subr.mxu0 0.0
        %3004 = vmatpush1.msra.mxu0 0.0
        %3005 = vmatprep.subr.mxu0 0.0
        %3006 = vmatpush1.msra.mxu0 0.0
        %3007 = vmatprep.subr.mxu0 0.0
        %3008 = vmatpush1.msra.mxu0 0.0
        %3009 = vmatprep.subr.mxu0 0.0
        %3010 = vmatpush1.msra.mxu0 0.0
        %3011 = vmatprep.subr.mxu0 0.0
        %3012 = vmatpush1.msra.mxu0 0.0
        %3013 = vmatprep.subr.mxu0 0.0
        %3014 = vmatpush1.msra.mxu0 0.0
        %3015 = vmatprep.subr.mxu0 0.0
        %3016 = vmatpush1.msra.mxu0 0.0
        %3017 = vmatprep.subr.mxu0 0.0
        %3018 = vmatpush1.msra.mxu0 0.0
        %3019 = vmatprep.subr.mxu0 0.0
        %3020 = vmatpush1.msra.mxu0 0.0
        %3021 = vmatprep.subr.mxu0 0.0
        %3022 = vmatpush1.msra.mxu0 0.0
        %3023 = vmatprep.subr.mxu0 0.0
        %3024 = vmatpush1.msra.mxu0 0.0
        %3025 = vmatprep.subr.mxu0 0.0
        %3026 = vmatpush1.msra.mxu0 0.0
        %3027 = vmatprep.subr.mxu0 0.0
        %3028 = vmatpush1.msra.mxu0 0.0
        %3029 = vmatprep.subr.mxu0 0.0
        %3030 = vmatpush1.msra.mxu0 0.0
        %3031 = vmatprep.subr.mxu0 0.0
        %3032 = vmatpush1.msra.mxu0 0.0
        %3033 = vmatprep.subr.mxu0 0.0
        %3034 = vmatpush1.msra.mxu0 0.0
        %3035 = vmatprep.subr.mxu0 0.0
        %3036 = vmatpush1.msra.mxu0 0.0
        %3037 = vmatprep.mubr.f32.mxu0 0.0
        %3038 = vmatmul.mubr.f32.gmra.mrb[0].mxu0 %v2971
        %v3039 = vpop.f32.mrb[0].mxu0
        %v3040 = vadd.f32 0.0, %v3039
        %v3041 = vpop.f32.mrb[0].mxu0
        %3042 = vdwg.mxu0
        %s3043 = scalar_lea.vmem %s2, 16
        %v3044 = vld [vmem:[%s3043] sm:$0xff]
        %v3046 = vsel %vm332, %v2736, 0
        %v3049 = vsel %vm332, %v2812, 0
        %v3052 = vsel %vm332, %v2888, 0
        %v3055 = vsel %vm332, %v2964, 0
        %v3058 = vsel %vm332, %v3040, 0
        %3060 = vmatprep.subr.mxu0 0.0
        %3061 = vmatpush1.msra.mxu0 %v3044
        %3062 = vmatprep.subr.mxu0 0.0
        %3063 = vmatpush1.msra.mxu0 0.0
        %3064 = vmatprep.subr.mxu0 0.0
        %3065 = vmatpush1.msra.mxu0 0.0
        %3066 = vmatprep.subr.mxu0 0.0
        %3067 = vmatpush1.msra.mxu0 0.0
        %3068 = vmatprep.subr.mxu0 0.0
        %3069 = vmatpush1.msra.mxu0 0.0
        %3070 = vmatprep.subr.mxu0 0.0
        %3071 = vmatpush1.msra.mxu0 0.0
        %3072 = vmatprep.subr.mxu0 0.0
        %3073 = vmatpush1.msra.mxu0 0.0
        %3074 = vmatprep.subr.mxu0 0.0
        %3075 = vmatpush1.msra.mxu0 0.0
        %3076 = vmatprep.subr.mxu0 0.0
        %3077 = vmatpush1.msra.mxu0 0.0
        %3078 = vmatprep.subr.mxu0 0.0
        %3079 = vmatpush1.msra.mxu0 0.0
        %3080 = vmatprep.subr.mxu0 0.0
        %3081 = vmatpush1.msra.mxu0 0.0
        %3082 = vmatprep.subr.mxu0 0.0
        %3083 = vmatpush1.msra.mxu0 0.0
        %3084 = vmatprep.subr.mxu0 0.0
        %3085 = vmatpush1.msra.mxu0 0.0
        %3086 = vmatprep.subr.mxu0 0.0
        %3087 = vmatpush1.msra.mxu0 0.0
        %3088 = vmatprep.subr.mxu0 0.0
        %3089 = vmatpush1.msra.mxu0 0.0
        %3090 = vmatprep.subr.mxu0 0.0
        %3091 = vmatpush1.msra.mxu0 0.0
        %3092 = vmatprep.subr.mxu0 0.0
        %3093 = vmatpush1.msra.mxu0 0.0
        %3094 = vmatprep.subr.mxu0 0.0
        %3095 = vmatpush1.msra.mxu0 0.0
        %3096 = vmatprep.subr.mxu0 0.0
        %3097 = vmatpush1.msra.mxu0 0.0
        %3098 = vmatprep.subr.mxu0 0.0
        %3099 = vmatpush1.msra.mxu0 0.0
        %3100 = vmatprep.subr.mxu0 0.0
        %3101 = vmatpush1.msra.mxu0 0.0
        %3102 = vmatprep.subr.mxu0 0.0
        %3103 = vmatpush1.msra.mxu0 0.0
        %3104 = vmatprep.subr.mxu0 0.0
        %3105 = vmatpush1.msra.mxu0 0.0
        %3106 = vmatprep.subr.mxu0 0.0
        %3107 = vmatpush1.msra.mxu0 0.0
        %3108 = vmatprep.subr.mxu0 0.0
        %3109 = vmatpush1.msra.mxu0 0.0
        %3110 = vmatprep.subr.mxu0 0.0
        %3111 = vmatpush1.msra.mxu0 0.0
        %3112 = vmatprep.subr.mxu0 0.0
        %3113 = vmatpush1.msra.mxu0 0.0
        %3114 = vmatprep.subr.mxu0 0.0
        %3115 = vmatpush1.msra.mxu0 0.0
        %3116 = vmatprep.subr.mxu0 0.0
        %3117 = vmatpush1.msra.mxu0 0.0
        %3118 = vmatprep.subr.mxu0 0.0
        %3119 = vmatpush1.msra.mxu0 0.0
        %3120 = vmatprep.subr.mxu0 0.0
        %3121 = vmatpush1.msra.mxu0 0.0
        %3122 = vmatprep.subr.mxu0 0.0
        %3123 = vmatpush1.msra.mxu0 0.0
        %3124 = vmatprep.mubr.f32.mxu0 0.0
        %3125 = vmatmul.mubr.f32.gmra.mrb[0].mxu0 %v3046
        %v3126 = vpop.f32.mrb[0].mxu0
        %v3127 = vadd.f32 0.0, %v3126
        %v3128 = vpop.f32.mrb[0].mxu0
        %3129 = vmatprep.mubr.f32.mxu0 0.0
        %3130 = vmatmul.mubr.f32.gmra.mrb[0].mxu0 %v3049
        %v3131 = vpop.f32.mrb[0].mxu0
        %v3132 = vadd.f32 0.0, %v3131
        %v3133 = vpop.f32.mrb[0].mxu0
        %3134 = vmatprep.mubr.f32.mxu0 0.0
        %3135 = vmatmul.mubr.f32.gmra.mrb[0].mxu0 %v3052
        %v3136 = vpop.f32.mrb[0].mxu0
        %v3137 = vadd.f32 0.0, %v3136
        %v3138 = vpop.f32.mrb[0].mxu0
        %3139 = vmatprep.mubr.f32.mxu0 0.0
        %3140 = vmatmul.mubr.f32.gmra.mrb[0].mxu0 %v3055
        %v3141 = vpop.f32.mrb[0].mxu0
        %v3142 = vadd.f32 0.0, %v3141
        %v3143 = vpop.f32.mrb[0].mxu0
        %3144 = vmatprep.mubr.f32.mxu0 0.0
        %3145 = vmatmul.mubr.f32.gmra.mrb[0].mxu0 %v3058
        %v3146 = vpop.f32.mrb[0].mxu0
        %v3147 = vadd.f32 0.0, %v3146
        %v3148 = vpop.f32.mrb[0].mxu0
        %3149 = vdwg.mxu0
        %v3150 = vadd.f32 %v2203, %v3127
        %v3151 = vadd.f32 %v2204, %v3132
        %v3152 = vadd.f32 %v2205, %v3137
        %v3153 = vadd.f32 %v2206, %v3142
        %v3154 = vadd.f32 %v2207, %v3147
        %v3155 = vld [vmem:[#allocation2] sm:$0xff]
        %v3156 = vld [vmem:[#allocation2 + $0x8] sm:$0xff]
        %v3157 = vld [vmem:[#allocation2 + $0x10] sm:$0xff]
        %v3158 = vld [vmem:[#allocation2 + $0x18] sm:$0xff]
        %v3159 = vld [vmem:[#allocation2 + $0x20] sm:$0xff]
        %3161 = vrot.lane.b32.xlu0 %v3155, 104
        %v3162 = vpop.permute.xlu0 %3161
        %3163 = vrot.lane.b32.xlu0 %v3155, 72
        %v3164 = vpop.permute.xlu0 %3163
        %v3165 = vsel %vm332, %v3162, 0
        %v3167 = vsel %vm332, %v3164, 0
        %3169 = vmatprep.subr.mxu0 0.0
        %3170 = vmatpush1.xpose.msra.mxu0 %v3167
        %3171 = vmatprep.subr.mxu0 0.0
        %3172 = vmatpush1.xpose.msra.mxu0 0.0
        %3173 = vmatprep.subr.mxu0 0.0
        %3174 = vmatpush1.xpose.msra.mxu0 0.0
        %3175 = vmatprep.subr.mxu0 0.0
        %3176 = vmatpush1.xpose.msra.mxu0 0.0
        %3177 = vmatprep.subr.mxu0 0.0
        %3178 = vmatpush1.xpose.msra.mxu0 0.0
        %3179 = vmatprep.subr.mxu0 0.0
        %3180 = vmatpush1.xpose.msra.mxu0 0.0
        %3181 = vmatprep.subr.mxu0 0.0
        %3182 = vmatpush1.xpose.msra.mxu0 0.0
        %3183 = vmatprep.subr.mxu0 0.0
        %3184 = vmatpush1.xpose.msra.mxu0 0.0
        %3185 = vmatprep.subr.mxu0 0.0
        %3186 = vmatpush1.xpose.msra.mxu0 0.0
        %3187 = vmatprep.subr.mxu0 0.0
        %3188 = vmatpush1.xpose.msra.mxu0 0.0
        %3189 = vmatprep.subr.mxu0 0.0
        %3190 = vmatpush1.xpose.msra.mxu0 0.0
        %3191 = vmatprep.subr.mxu0 0.0
        %3192 = vmatpush1.xpose.msra.mxu0 0.0
        %3193 = vmatprep.subr.mxu0 0.0
        %3194 = vmatpush1.xpose.msra.mxu0 0.0
        %3195 = vmatprep.subr.mxu0 0.0
        %3196 = vmatpush1.xpose.msra.mxu0 0.0
        %3197 = vmatprep.subr.mxu0 0.0
        %3198 = vmatpush1.xpose.msra.mxu0 0.0
        %3199 = vmatprep.subr.mxu0 0.0
        %3200 = vmatpush1.xpose.msra.mxu0 0.0
        %3201 = vmatprep.subr.mxu0 0.0
        %3202 = vmatpush1.xpose.msra.mxu0 0.0
        %3203 = vmatprep.subr.mxu0 0.0
        %3204 = vmatpush1.xpose.msra.mxu0 0.0
        %3205 = vmatprep.subr.mxu0 0.0
        %3206 = vmatpush1.xpose.msra.mxu0 0.0
        %3207 = vmatprep.subr.mxu0 0.0
        %3208 = vmatpush1.xpose.msra.mxu0 0.0
        %3209 = vmatprep.subr.mxu0 0.0
        %3210 = vmatpush1.xpose.msra.mxu0 0.0
        %3211 = vmatprep.subr.mxu0 0.0
        %3212 = vmatpush1.xpose.msra.mxu0 0.0
        %3213 = vmatprep.subr.mxu0 0.0
        %3214 = vmatpush1.xpose.msra.mxu0 0.0
        %3215 = vmatprep.subr.mxu0 0.0
        %3216 = vmatpush1.xpose.msra.mxu0 0.0
        %3217 = vmatprep.subr.mxu0 0.0
        %3218 = vmatpush1.xpose.msra.mxu0 0.0
        %3219 = vmatprep.subr.mxu0 0.0
        %3220 = vmatpush1.xpose.msra.mxu0 0.0
        %3221 = vmatprep.subr.mxu0 0.0
        %3222 = vmatpush1.xpose.msra.mxu0 0.0
        %3223 = vmatprep.subr.mxu0 0.0
        %3224 = vmatpush1.xpose.msra.mxu0 0.0
        %3225 = vmatprep.subr.mxu0 0.0
        %3226 = vmatpush1.xpose.msra.mxu0 0.0
        %3227 = vmatprep.subr.mxu0 0.0
        %3228 = vmatpush1.xpose.msra.mxu0 0.0
        %3229 = vmatprep.subr.mxu0 0.0
        %3230 = vmatpush1.xpose.msra.mxu0 0.0
        %3231 = vmatprep.subr.mxu0 0.0
        %3232 = vmatpush1.xpose.msra.mxu0 0.0
        %3233 = vmatprep.mubr.f32.mxu0 0.0
        %3234 = vmatmul.mubr.f32.gmra.mrb[0].mxu0 %v3165
        %v3235 = vpop.f32.mrb[0].mxu0
        %v3236 = vadd.f32 0.0, %v3235
        %v3237 = vpop.f32.mrb[0].mxu0
        %3238 = vdwg.mxu0
        %3240 = vrot.lane.b32.xlu0 %v3156, 104
        %v3241 = vpop.permute.xlu0 %3240
        %3242 = vrot.lane.b32.xlu0 %v3156, 72
        %v3243 = vpop.permute.xlu0 %3242
        %v3244 = vsel %vm332, %v3241, 0
        %v3246 = vsel %vm332, %v3243, 0
        %3248 = vmatprep.subr.mxu0 0.0
        %3249 = vmatpush1.xpose.msra.mxu0 %v3246
        %3250 = vmatprep.subr.mxu0 0.0
        %3251 = vmatpush1.xpose.msra.mxu0 0.0
        %3252 = vmatprep.subr.mxu0 0.0
        %3253 = vmatpush1.xpose.msra.mxu0 0.0
        %3254 = vmatprep.subr.mxu0 0.0
        %3255 = vmatpush1.xpose.msra.mxu0 0.0
        %3256 = vmatprep.subr.mxu0 0.0
        %3257 = vmatpush1.xpose.msra.mxu0 0.0
        %3258 = vmatprep.subr.mxu0 0.0
        %3259 = vmatpush1.xpose.msra.mxu0 0.0
        %3260 = vmatprep.subr.mxu0 0.0
        %3261 = vmatpush1.xpose.msra.mxu0 0.0
        %3262 = vmatprep.subr.mxu0 0.0
        %3263 = vmatpush1.xpose.msra.mxu0 0.0
        %3264 = vmatprep.subr.mxu0 0.0
        %3265 = vmatpush1.xpose.msra.mxu0 0.0
        %3266 = vmatprep.subr.mxu0 0.0
        %3267 = vmatpush1.xpose.msra.mxu0 0.0
        %3268 = vmatprep.subr.mxu0 0.0
        %3269 = vmatpush1.xpose.msra.mxu0 0.0
        %3270 = vmatprep.subr.mxu0 0.0
        %3271 = vmatpush1.xpose.msra.mxu0 0.0
        %3272 = vmatprep.subr.mxu0 0.0
        %3273 = vmatpush1.xpose.msra.mxu0 0.0
        %3274 = vmatprep.subr.mxu0 0.0
        %3275 = vmatpush1.xpose.msra.mxu0 0.0
        %3276 = vmatprep.subr.mxu0 0.0
        %3277 = vmatpush1.xpose.msra.mxu0 0.0
        %3278 = vmatprep.subr.mxu0 0.0
        %3279 = vmatpush1.xpose.msra.mxu0 0.0
        %3280 = vmatprep.subr.mxu0 0.0
        %3281 = vmatpush1.xpose.msra.mxu0 0.0
        %3282 = vmatprep.subr.mxu0 0.0
        %3283 = vmatpush1.xpose.msra.mxu0 0.0
        %3284 = vmatprep.subr.mxu0 0.0
        %3285 = vmatpush1.xpose.msra.mxu0 0.0
        %3286 = vmatprep.subr.mxu0 0.0
        %3287 = vmatpush1.xpose.msra.mxu0 0.0
        %3288 = vmatprep.subr.mxu0 0.0
        %3289 = vmatpush1.xpose.msra.mxu0 0.0
        %3290 = vmatprep.subr.mxu0 0.0
        %3291 = vmatpush1.xpose.msra.mxu0 0.0
        %3292 = vmatprep.subr.mxu0 0.0
        %3293 = vmatpush1.xpose.msra.mxu0 0.0
        %3294 = vmatprep.subr.mxu0 0.0
        %3295 = vmatpush1.xpose.msra.mxu0 0.0
        %3296 = vmatprep.subr.mxu0 0.0
        %3297 = vmatpush1.xpose.msra.mxu0 0.0
        %3298 = vmatprep.subr.mxu0 0.0
        %3299 = vmatpush1.xpose.msra.mxu0 0.0
        %3300 = vmatprep.subr.mxu0 0.0
        %3301 = vmatpush1.xpose.msra.mxu0 0.0
        %3302 = vmatprep.subr.mxu0 0.0
        %3303 = vmatpush1.xpose.msra.mxu0 0.0
        %3304 = vmatprep.subr.mxu0 0.0
        %3305 = vmatpush1.xpose.msra.mxu0 0.0
        %3306 = vmatprep.subr.mxu0 0.0
        %3307 = vmatpush1.xpose.msra.mxu0 0.0
        %3308 = vmatprep.subr.mxu0 0.0
        %3309 = vmatpush1.xpose.msra.mxu0 0.0
        %3310 = vmatprep.subr.mxu0 0.0
        %3311 = vmatpush1.xpose.msra.mxu0 0.0
        %3312 = vmatprep.mubr.f32.mxu0 0.0
        %3313 = vmatmul.mubr.f32.gmra.mrb[0].mxu0 %v3244
        %v3314 = vpop.f32.mrb[0].mxu0
        %v3315 = vadd.f32 0.0, %v3314
        %v3316 = vpop.f32.mrb[0].mxu0
        %3317 = vdwg.mxu0
        %3319 = vrot.lane.b32.xlu0 %v3157, 104
        %v3320 = vpop.permute.xlu0 %3319
        %3321 = vrot.lane.b32.xlu0 %v3157, 72
        %v3322 = vpop.permute.xlu0 %3321
        %v3323 = vsel %vm332, %v3320, 0
        %v3325 = vsel %vm332, %v3322, 0
        %3327 = vmatprep.subr.mxu0 0.0
        %3328 = vmatpush1.xpose.msra.mxu0 %v3325
        %3329 = vmatprep.subr.mxu0 0.0
        %3330 = vmatpush1.xpose.msra.mxu0 0.0
        %3331 = vmatprep.subr.mxu0 0.0
        %3332 = vmatpush1.xpose.msra.mxu0 0.0
        %3333 = vmatprep.subr.mxu0 0.0
        %3334 = vmatpush1.xpose.msra.mxu0 0.0
        %3335 = vmatprep.subr.mxu0 0.0
        %3336 = vmatpush1.xpose.msra.mxu0 0.0
        %3337 = vmatprep.subr.mxu0 0.0
        %3338 = vmatpush1.xpose.msra.mxu0 0.0
        %3339 = vmatprep.subr.mxu0 0.0
        %3340 = vmatpush1.xpose.msra.mxu0 0.0
        %3341 = vmatprep.subr.mxu0 0.0
        %3342 = vmatpush1.xpose.msra.mxu0 0.0
        %3343 = vmatprep.subr.mxu0 0.0
        %3344 = vmatpush1.xpose.msra.mxu0 0.0
        %3345 = vmatprep.subr.mxu0 0.0
        %3346 = vmatpush1.xpose.msra.mxu0 0.0
        %3347 = vmatprep.subr.mxu0 0.0
        %3348 = vmatpush1.xpose.msra.mxu0 0.0
        %3349 = vmatprep.subr.mxu0 0.0
        %3350 = vmatpush1.xpose.msra.mxu0 0.0
        %3351 = vmatprep.subr.mxu0 0.0
        %3352 = vmatpush1.xpose.msra.mxu0 0.0
        %3353 = vmatprep.subr.mxu0 0.0
        %3354 = vmatpush1.xpose.msra.mxu0 0.0
        %3355 = vmatprep.subr.mxu0 0.0
        %3356 = vmatpush1.xpose.msra.mxu0 0.0
        %3357 = vmatprep.subr.mxu0 0.0
        %3358 = vmatpush1.xpose.msra.mxu0 0.0
        %3359 = vmatprep.subr.mxu0 0.0
        %3360 = vmatpush1.xpose.msra.mxu0 0.0
        %3361 = vmatprep.subr.mxu0 0.0
        %3362 = vmatpush1.xpose.msra.mxu0 0.0
        %3363 = vmatprep.subr.mxu0 0.0
        %3364 = vmatpush1.xpose.msra.mxu0 0.0
        %3365 = vmatprep.subr.mxu0 0.0
        %3366 = vmatpush1.xpose.msra.mxu0 0.0
        %3367 = vmatprep.subr.mxu0 0.0
        %3368 = vmatpush1.xpose.msra.mxu0 0.0
        %3369 = vmatprep.subr.mxu0 0.0
        %3370 = vmatpush1.xpose.msra.mxu0 0.0
        %3371 = vmatprep.subr.mxu0 0.0
        %3372 = vmatpush1.xpose.msra.mxu0 0.0
        %3373 = vmatprep.subr.mxu0 0.0
        %3374 = vmatpush1.xpose.msra.mxu0 0.0
        %3375 = vmatprep.subr.mxu0 0.0
        %3376 = vmatpush1.xpose.msra.mxu0 0.0
        %3377 = vmatprep.subr.mxu0 0.0
        %3378 = vmatpush1.xpose.msra.mxu0 0.0
        %3379 = vmatprep.subr.mxu0 0.0
        %3380 = vmatpush1.xpose.msra.mxu0 0.0
        %3381 = vmatprep.subr.mxu0 0.0
        %3382 = vmatpush1.xpose.msra.mxu0 0.0
        %3383 = vmatprep.subr.mxu0 0.0
        %3384 = vmatpush1.xpose.msra.mxu0 0.0
        %3385 = vmatprep.subr.mxu0 0.0
        %3386 = vmatpush1.xpose.msra.mxu0 0.0
        %3387 = vmatprep.subr.mxu0 0.0
        %3388 = vmatpush1.xpose.msra.mxu0 0.0
        %3389 = vmatprep.subr.mxu0 0.0
        %3390 = vmatpush1.xpose.msra.mxu0 0.0
        %3391 = vmatprep.mubr.f32.mxu0 0.0
        %3392 = vmatmul.mubr.f32.gmra.mrb[0].mxu0 %v3323
        %v3393 = vpop.f32.mrb[0].mxu0
        %v3394 = vadd.f32 0.0, %v3393
        %v3395 = vpop.f32.mrb[0].mxu0
        %3396 = vdwg.mxu0
        %3398 = vrot.lane.b32.xlu0 %v3158, 104
        %v3399 = vpop.permute.xlu0 %3398
        %3400 = vrot.lane.b32.xlu0 %v3158, 72
        %v3401 = vpop.permute.xlu0 %3400
        %v3402 = vsel %vm332, %v3399, 0
        %v3404 = vsel %vm332, %v3401, 0
        %3406 = vmatprep.subr.mxu0 0.0
        %3407 = vmatpush1.xpose.msra.mxu0 %v3404
        %3408 = vmatprep.subr.mxu0 0.0
        %3409 = vmatpush1.xpose.msra.mxu0 0.0
        %3410 = vmatprep.subr.mxu0 0.0
        %3411 = vmatpush1.xpose.msra.mxu0 0.0
        %3412 = vmatprep.subr.mxu0 0.0
        %3413 = vmatpush1.xpose.msra.mxu0 0.0
        %3414 = vmatprep.subr.mxu0 0.0
        %3415 = vmatpush1.xpose.msra.mxu0 0.0
        %3416 = vmatprep.subr.mxu0 0.0
        %3417 = vmatpush1.xpose.msra.mxu0 0.0
        %3418 = vmatprep.subr.mxu0 0.0
        %3419 = vmatpush1.xpose.msra.mxu0 0.0
        %3420 = vmatprep.subr.mxu0 0.0
        %3421 = vmatpush1.xpose.msra.mxu0 0.0
        %3422 = vmatprep.subr.mxu0 0.0
        %3423 = vmatpush1.xpose.msra.mxu0 0.0
        %3424 = vmatprep.subr.mxu0 0.0
        %3425 = vmatpush1.xpose.msra.mxu0 0.0
        %3426 = vmatprep.subr.mxu0 0.0
        %3427 = vmatpush1.xpose.msra.mxu0 0.0
        %3428 = vmatprep.subr.mxu0 0.0
        %3429 = vmatpush1.xpose.msra.mxu0 0.0
        %3430 = vmatprep.subr.mxu0 0.0
        %3431 = vmatpush1.xpose.msra.mxu0 0.0
        %3432 = vmatprep.subr.mxu0 0.0
        %3433 = vmatpush1.xpose.msra.mxu0 0.0
        %3434 = vmatprep.subr.mxu0 0.0
        %3435 = vmatpush1.xpose.msra.mxu0 0.0
        %3436 = vmatprep.subr.mxu0 0.0
        %3437 = vmatpush1.xpose.msra.mxu0 0.0
        %3438 = vmatprep.subr.mxu0 0.0
        %3439 = vmatpush1.xpose.msra.mxu0 0.0
        %3440 = vmatprep.subr.mxu0 0.0
        %3441 = vmatpush1.xpose.msra.mxu0 0.0
        %3442 = vmatprep.subr.mxu0 0.0
        %3443 = vmatpush1.xpose.msra.mxu0 0.0
        %3444 = vmatprep.subr.mxu0 0.0
        %3445 = vmatpush1.xpose.msra.mxu0 0.0
        %3446 = vmatprep.subr.mxu0 0.0
        %3447 = vmatpush1.xpose.msra.mxu0 0.0
        %3448 = vmatprep.subr.mxu0 0.0
        %3449 = vmatpush1.xpose.msra.mxu0 0.0
        %3450 = vmatprep.subr.mxu0 0.0
        %3451 = vmatpush1.xpose.msra.mxu0 0.0
        %3452 = vmatprep.subr.mxu0 0.0
        %3453 = vmatpush1.xpose.msra.mxu0 0.0
        %3454 = vmatprep.subr.mxu0 0.0
        %3455 = vmatpush1.xpose.msra.mxu0 0.0
        %3456 = vmatprep.subr.mxu0 0.0
        %3457 = vmatpush1.xpose.msra.mxu0 0.0
        %3458 = vmatprep.subr.mxu0 0.0
        %3459 = vmatpush1.xpose.msra.mxu0 0.0
        %3460 = vmatprep.subr.mxu0 0.0
        %3461 = vmatpush1.xpose.msra.mxu0 0.0
        %3462 = vmatprep.subr.mxu0 0.0
        %3463 = vmatpush1.xpose.msra.mxu0 0.0
        %3464 = vmatprep.subr.mxu0 0.0
        %3465 = vmatpush1.xpose.msra.mxu0 0.0
        %3466 = vmatprep.subr.mxu0 0.0
        %3467 = vmatpush1.xpose.msra.mxu0 0.0
        %3468 = vmatprep.subr.mxu0 0.0
        %3469 = vmatpush1.xpose.msra.mxu0 0.0
        %3470 = vmatprep.mubr.f32.mxu0 0.0
        %3471 = vmatmul.mubr.f32.gmra.mrb[0].mxu0 %v3402
        %v3472 = vpop.f32.mrb[0].mxu0
        %v3473 = vadd.f32 0.0, %v3472
        %v3474 = vpop.f32.mrb[0].mxu0
        %3475 = vdwg.mxu0
        %3477 = vrot.lane.b32.xlu0 %v3159, 104
        %v3478 = vpop.permute.xlu0 %3477
        %3479 = vrot.lane.b32.xlu0 %v3159, 72
        %v3480 = vpop.permute.xlu0 %3479
        %v3481 = vsel %vm332, %v3478, 0
        %v3483 = vsel %vm332, %v3480, 0
        %3485 = vmatprep.subr.mxu0 0.0
        %3486 = vmatpush1.xpose.msra.mxu0 %v3483
        %3487 = vmatprep.subr.mxu0 0.0
        %3488 = vmatpush1.xpose.msra.mxu0 0.0
        %3489 = vmatprep.subr.mxu0 0.0
        %3490 = vmatpush1.xpose.msra.mxu0 0.0
        %3491 = vmatprep.subr.mxu0 0.0
        %3492 = vmatpush1.xpose.msra.mxu0 0.0
        %3493 = vmatprep.subr.mxu0 0.0
        %3494 = vmatpush1.xpose.msra.mxu0 0.0
        %3495 = vmatprep.subr.mxu0 0.0
        %3496 = vmatpush1.xpose.msra.mxu0 0.0
        %3497 = vmatprep.subr.mxu0 0.0
        %3498 = vmatpush1.xpose.msra.mxu0 0.0
        %3499 = vmatprep.subr.mxu0 0.0
        %3500 = vmatpush1.xpose.msra.mxu0 0.0
        %3501 = vmatprep.subr.mxu0 0.0
        %3502 = vmatpush1.xpose.msra.mxu0 0.0
        %3503 = vmatprep.subr.mxu0 0.0
        %3504 = vmatpush1.xpose.msra.mxu0 0.0
        %3505 = vmatprep.subr.mxu0 0.0
        %3506 = vmatpush1.xpose.msra.mxu0 0.0
        %3507 = vmatprep.subr.mxu0 0.0
        %3508 = vmatpush1.xpose.msra.mxu0 0.0
        %3509 = vmatprep.subr.mxu0 0.0
        %3510 = vmatpush1.xpose.msra.mxu0 0.0
        %3511 = vmatprep.subr.mxu0 0.0
        %3512 = vmatpush1.xpose.msra.mxu0 0.0
        %3513 = vmatprep.subr.mxu0 0.0
        %3514 = vmatpush1.xpose.msra.mxu0 0.0
        %3515 = vmatprep.subr.mxu0 0.0
        %3516 = vmatpush1.xpose.msra.mxu0 0.0
        %3517 = vmatprep.subr.mxu0 0.0
        %3518 = vmatpush1.xpose.msra.mxu0 0.0
        %3519 = vmatprep.subr.mxu0 0.0
        %3520 = vmatpush1.xpose.msra.mxu0 0.0
        %3521 = vmatprep.subr.mxu0 0.0
        %3522 = vmatpush1.xpose.msra.mxu0 0.0
        %3523 = vmatprep.subr.mxu0 0.0
        %3524 = vmatpush1.xpose.msra.mxu0 0.0
        %3525 = vmatprep.subr.mxu0 0.0
        %3526 = vmatpush1.xpose.msra.mxu0 0.0
        %3527 = vmatprep.subr.mxu0 0.0
        %3528 = vmatpush1.xpose.msra.mxu0 0.0
        %3529 = vmatprep.subr.mxu0 0.0
        %3530 = vmatpush1.xpose.msra.mxu0 0.0
        %3531 = vmatprep.subr.mxu0 0.0
        %3532 = vmatpush1.xpose.msra.mxu0 0.0
        %3533 = vmatprep.subr.mxu0 0.0
        %3534 = vmatpush1.xpose.msra.mxu0 0.0
        %3535 = vmatprep.subr.mxu0 0.0
        %3536 = vmatpush1.xpose.msra.mxu0 0.0
        %3537 = vmatprep.subr.mxu0 0.0
        %3538 = vmatpush1.xpose.msra.mxu0 0.0
        %3539 = vmatprep.subr.mxu0 0.0
        %3540 = vmatpush1.xpose.msra.mxu0 0.0
        %3541 = vmatprep.subr.mxu0 0.0
        %3542 = vmatpush1.xpose.msra.mxu0 0.0
        %3543 = vmatprep.subr.mxu0 0.0
        %3544 = vmatpush1.xpose.msra.mxu0 0.0
        %3545 = vmatprep.subr.mxu0 0.0
        %3546 = vmatpush1.xpose.msra.mxu0 0.0
        %3547 = vmatprep.subr.mxu0 0.0
        %3548 = vmatpush1.xpose.msra.mxu0 0.0
        %3549 = vmatprep.mubr.f32.mxu0 0.0
        %3550 = vmatmul.mubr.f32.gmra.mrb[0].mxu0 %v3481
        %v3551 = vpop.f32.mrb[0].mxu0
        %v3552 = vadd.f32 0.0, %v3551
        %v3553 = vpop.f32.mrb[0].mxu0
        %3554 = vdwg.mxu0
        %v3555 = vsel %vm332, %v3236, -inf
        %3556 = vmax.xlane.f32.xlu0 %v3555
        %v3557 = vpop.xlane.xlu0 %3556
        %v3558 = vsel %vm332, %v3315, -inf
        %3559 = vmax.xlane.f32.xlu0 %v3558
        %v3560 = vpop.xlane.xlu0 %3559
        %v3561 = vsel %vm332, %v3394, -inf
        %3562 = vmax.xlane.f32.xlu0 %v3561
        %v3563 = vpop.xlane.xlu0 %3562
        %v3564 = vsel %vm332, %v3473, -inf
        %3565 = vmax.xlane.f32.xlu0 %v3564
        %v3566 = vpop.xlane.xlu0 %3565
        %v3567 = vsel %vm332, %v3552, -inf
        %3568 = vmax.xlane.f32.xlu0 %v3567
        %v3569 = vpop.xlane.xlu0 %3568
        %v3570 = vsub.f32 %v3236, %v3557
        %v3571 = vsub.f32 %v3315, %v3560
        %v3572 = vsub.f32 %v3394, %v3563
        %v3573 = vsub.f32 %v3473, %v3566
        %v3574 = vsub.f32 %v3552, %v3569
        %v3575 = vmul.f32 %v3570, 1.442695
        %v3576 = vpow.pop %v3575
        %v3577 = vmul.f32 %v3571, 1.442695
        %v3578 = vpow.pop %v3577
        %v3579 = vmul.f32 %v3572, 1.442695
        %v3580 = vpow.pop %v3579
        %v3581 = vmul.f32 %v3573, 1.442695
        %v3582 = vpow.pop %v3581
        %v3583 = vmul.f32 %v3574, 1.442695
        %v3584 = vpow.pop %v3583
        %v3585 = vsel %vm332, %v3576, 0.0
        %3586 = vadd.xlane.f32.xlu0 %v3585
        %v3587 = vpop.xlane.xlu0 %3586
        %v3588 = vsel %vm332, %v3578, 0.0
        %3589 = vadd.xlane.f32.xlu0 %v3588
        %v3590 = vpop.xlane.xlu0 %3589
        %v3591 = vsel %vm332, %v3580, 0.0
        %3592 = vadd.xlane.f32.xlu0 %v3591
        %v3593 = vpop.xlane.xlu0 %3592
        %v3594 = vsel %vm332, %v3582, 0.0
        %3595 = vadd.xlane.f32.xlu0 %v3594
        %v3596 = vpop.xlane.xlu0 %3595
        %v3597 = vsel %vm332, %v3584, 0.0
        %3598 = vadd.xlane.f32.xlu0 %v3597
        %v3599 = vpop.xlane.xlu0 %3598
        %v3600 = vrcp.pop %v3587
        %v3601 = vrcp.pop %v3590
        %v3602 = vrcp.pop %v3593
        %v3603 = vrcp.pop %v3596
        %v3604 = vrcp.pop %v3599
        %v3605 = vmul.f32 %v3576, %v3600
        %v3606 = vmul.f32 %v3578, %v3601
        %v3607 = vmul.f32 %v3580, %v3602
        %v3608 = vmul.f32 %v3582, %v3603
        %v3609 = vmul.f32 %v3584, %v3604
        %3610 = vrot.lane.b32.xlu0 %v3155, 40
        %v3611 = vpop.permute.xlu0 %3610
        %v3614 = vsel %vm332, %v3605, 0
        %3616 = vmatprep.subr.mxu0 0.0
        %3617 = vmatpush1.msra.mxu0 %v3611
        %3618 = vmatprep.subr.mxu0 0.0
        %3619 = vmatpush1.msra.mxu0 0.0
        %3620 = vmatprep.subr.mxu0 0.0
        %3621 = vmatpush1.msra.mxu0 0.0
        %3622 = vmatprep.subr.mxu0 0.0
        %3623 = vmatpush1.msra.mxu0 0.0
        %3624 = vmatprep.subr.mxu0 0.0
        %3625 = vmatpush1.msra.mxu0 0.0
        %3626 = vmatprep.subr.mxu0 0.0
        %3627 = vmatpush1.msra.mxu0 0.0
        %3628 = vmatprep.subr.mxu0 0.0
        %3629 = vmatpush1.msra.mxu0 0.0
        %3630 = vmatprep.subr.mxu0 0.0
        %3631 = vmatpush1.msra.mxu0 0.0
        %3632 = vmatprep.subr.mxu0 0.0
        %3633 = vmatpush1.msra.mxu0 0.0
        %3634 = vmatprep.subr.mxu0 0.0
        %3635 = vmatpush1.msra.mxu0 0.0
        %3636 = vmatprep.subr.mxu0 0.0
        %3637 = vmatpush1.msra.mxu0 0.0
        %3638 = vmatprep.subr.mxu0 0.0
        %3639 = vmatpush1.msra.mxu0 0.0
        %3640 = vmatprep.subr.mxu0 0.0
        %3641 = vmatpush1.msra.mxu0 0.0
        %3642 = vmatprep.subr.mxu0 0.0
        %3643 = vmatpush1.msra.mxu0 0.0
        %3644 = vmatprep.subr.mxu0 0.0
        %3645 = vmatpush1.msra.mxu0 0.0
        %3646 = vmatprep.subr.mxu0 0.0
        %3647 = vmatpush1.msra.mxu0 0.0
        %3648 = vmatprep.subr.mxu0 0.0
        %3649 = vmatpush1.msra.mxu0 0.0
        %3650 = vmatprep.subr.mxu0 0.0
        %3651 = vmatpush1.msra.mxu0 0.0
        %3652 = vmatprep.subr.mxu0 0.0
        %3653 = vmatpush1.msra.mxu0 0.0
        %3654 = vmatprep.subr.mxu0 0.0
        %3655 = vmatpush1.msra.mxu0 0.0
        %3656 = vmatprep.subr.mxu0 0.0
        %3657 = vmatpush1.msra.mxu0 0.0
        %3658 = vmatprep.subr.mxu0 0.0
        %3659 = vmatpush1.msra.mxu0 0.0
        %3660 = vmatprep.subr.mxu0 0.0
        %3661 = vmatpush1.msra.mxu0 0.0
        %3662 = vmatprep.subr.mxu0 0.0
        %3663 = vmatpush1.msra.mxu0 0.0
        %3664 = vmatprep.subr.mxu0 0.0
        %3665 = vmatpush1.msra.mxu0 0.0
        %3666 = vmatprep.subr.mxu0 0.0
        %3667 = vmatpush1.msra.mxu0 0.0
        %3668 = vmatprep.subr.mxu0 0.0
        %3669 = vmatpush1.msra.mxu0 0.0
        %3670 = vmatprep.subr.mxu0 0.0
        %3671 = vmatpush1.msra.mxu0 0.0
        %3672 = vmatprep.subr.mxu0 0.0
        %3673 = vmatpush1.msra.mxu0 0.0
        %3674 = vmatprep.subr.mxu0 0.0
        %3675 = vmatpush1.msra.mxu0 0.0
        %3676 = vmatprep.subr.mxu0 0.0
        %3677 = vmatpush1.msra.mxu0 0.0
        %3678 = vmatprep.subr.mxu0 0.0
        %3679 = vmatpush1.msra.mxu0 0.0
        %3680 = vmatprep.mubr.f32.mxu0 0.0
        %3681 = vmatmul.mubr.f32.gmra.mrb[0].mxu0 %v3614
        %v3682 = vpop.f32.mrb[0].mxu0
        %v3683 = vadd.f32 0.0, %v3682
        %v3684 = vpop.f32.mrb[0].mxu0
        %3685 = vdwg.mxu0
        %3686 = vrot.lane.b32.xlu0 %v3156, 40
        %v3687 = vpop.permute.xlu0 %3686
        %v3690 = vsel %vm332, %v3606, 0
        %3692 = vmatprep.subr.mxu0 0.0
        %3693 = vmatpush1.msra.mxu0 %v3687
        %3694 = vmatprep.subr.mxu0 0.0
        %3695 = vmatpush1.msra.mxu0 0.0
        %3696 = vmatprep.subr.mxu0 0.0
        %3697 = vmatpush1.msra.mxu0 0.0
        %3698 = vmatprep.subr.mxu0 0.0
        %3699 = vmatpush1.msra.mxu0 0.0
        %3700 = vmatprep.subr.mxu0 0.0
        %3701 = vmatpush1.msra.mxu0 0.0
        %3702 = vmatprep.subr.mxu0 0.0
        %3703 = vmatpush1.msra.mxu0 0.0
        %3704 = vmatprep.subr.mxu0 0.0
        %3705 = vmatpush1.msra.mxu0 0.0
        %3706 = vmatprep.subr.mxu0 0.0
        %3707 = vmatpush1.msra.mxu0 0.0
        %3708 = vmatprep.subr.mxu0 0.0
        %3709 = vmatpush1.msra.mxu0 0.0
        %3710 = vmatprep.subr.mxu0 0.0
        %3711 = vmatpush1.msra.mxu0 0.0
        %3712 = vmatprep.subr.mxu0 0.0
        %3713 = vmatpush1.msra.mxu0 0.0
        %3714 = vmatprep.subr.mxu0 0.0
        %3715 = vmatpush1.msra.mxu0 0.0
        %3716 = vmatprep.subr.mxu0 0.0
        %3717 = vmatpush1.msra.mxu0 0.0
        %3718 = vmatprep.subr.mxu0 0.0
        %3719 = vmatpush1.msra.mxu0 0.0
        %3720 = vmatprep.subr.mxu0 0.0
        %3721 = vmatpush1.msra.mxu0 0.0
        %3722 = vmatprep.subr.mxu0 0.0
        %3723 = vmatpush1.msra.mxu0 0.0
        %3724 = vmatprep.subr.mxu0 0.0
        %3725 = vmatpush1.msra.mxu0 0.0
        %3726 = vmatprep.subr.mxu0 0.0
        %3727 = vmatpush1.msra.mxu0 0.0
        %3728 = vmatprep.subr.mxu0 0.0
        %3729 = vmatpush1.msra.mxu0 0.0
        %3730 = vmatprep.subr.mxu0 0.0
        %3731 = vmatpush1.msra.mxu0 0.0
        %3732 = vmatprep.subr.mxu0 0.0
        %3733 = vmatpush1.msra.mxu0 0.0
        %3734 = vmatprep.subr.mxu0 0.0
        %3735 = vmatpush1.msra.mxu0 0.0
        %3736 = vmatprep.subr.mxu0 0.0
        %3737 = vmatpush1.msra.mxu0 0.0
        %3738 = vmatprep.subr.mxu0 0.0
        %3739 = vmatpush1.msra.mxu0 0.0
        %3740 = vmatprep.subr.mxu0 0.0
        %3741 = vmatpush1.msra.mxu0 0.0
        %3742 = vmatprep.subr.mxu0 0.0
        %3743 = vmatpush1.msra.mxu0 0.0
        %3744 = vmatprep.subr.mxu0 0.0
        %3745 = vmatpush1.msra.mxu0 0.0
        %3746 = vmatprep.subr.mxu0 0.0
        %3747 = vmatpush1.msra.mxu0 0.0
        %3748 = vmatprep.subr.mxu0 0.0
        %3749 = vmatpush1.msra.mxu0 0.0
        %3750 = vmatprep.subr.mxu0 0.0
        %3751 = vmatpush1.msra.mxu0 0.0
        %3752 = vmatprep.subr.mxu0 0.0
        %3753 = vmatpush1.msra.mxu0 0.0
        %3754 = vmatprep.subr.mxu0 0.0
        %3755 = vmatpush1.msra.mxu0 0.0
        %3756 = vmatprep.mubr.f32.mxu0 0.0
        %3757 = vmatmul.mubr.f32.gmra.mrb[0].mxu0 %v3690
        %v3758 = vpop.f32.mrb[0].mxu0
        %v3759 = vadd.f32 0.0, %v3758
        %v3760 = vpop.f32.mrb[0].mxu0
        %3761 = vdwg.mxu0
        %3762 = vrot.lane.b32.xlu0 %v3157, 40
        %v3763 = vpop.permute.xlu0 %3762
        %v3766 = vsel %vm332, %v3607, 0
        %3768 = vmatprep.subr.mxu0 0.0
        %3769 = vmatpush1.msra.mxu0 %v3763
        %3770 = vmatprep.subr.mxu0 0.0
        %3771 = vmatpush1.msra.mxu0 0.0
        %3772 = vmatprep.subr.mxu0 0.0
        %3773 = vmatpush1.msra.mxu0 0.0
        %3774 = vmatprep.subr.mxu0 0.0
        %3775 = vmatpush1.msra.mxu0 0.0
        %3776 = vmatprep.subr.mxu0 0.0
        %3777 = vmatpush1.msra.mxu0 0.0
        %3778 = vmatprep.subr.mxu0 0.0
        %3779 = vmatpush1.msra.mxu0 0.0
        %3780 = vmatprep.subr.mxu0 0.0
        %3781 = vmatpush1.msra.mxu0 0.0
        %3782 = vmatprep.subr.mxu0 0.0
        %3783 = vmatpush1.msra.mxu0 0.0
        %3784 = vmatprep.subr.mxu0 0.0
        %3785 = vmatpush1.msra.mxu0 0.0
        %3786 = vmatprep.subr.mxu0 0.0
        %3787 = vmatpush1.msra.mxu0 0.0
        %3788 = vmatprep.subr.mxu0 0.0
        %3789 = vmatpush1.msra.mxu0 0.0
        %3790 = vmatprep.subr.mxu0 0.0
        %3791 = vmatpush1.msra.mxu0 0.0
        %3792 = vmatprep.subr.mxu0 0.0
        %3793 = vmatpush1.msra.mxu0 0.0
        %3794 = vmatprep.subr.mxu0 0.0
        %3795 = vmatpush1.msra.mxu0 0.0
        %3796 = vmatprep.subr.mxu0 0.0
        %3797 = vmatpush1.msra.mxu0 0.0
        %3798 = vmatprep.subr.mxu0 0.0
        %3799 = vmatpush1.msra.mxu0 0.0
        %3800 = vmatprep.subr.mxu0 0.0
        %3801 = vmatpush1.msra.mxu0 0.0
        %3802 = vmatprep.subr.mxu0 0.0
        %3803 = vmatpush1.msra.mxu0 0.0
        %3804 = vmatprep.subr.mxu0 0.0
        %3805 = vmatpush1.msra.mxu0 0.0
        %3806 = vmatprep.subr.mxu0 0.0
        %3807 = vmatpush1.msra.mxu0 0.0
        %3808 = vmatprep.subr.mxu0 0.0
        %3809 = vmatpush1.msra.mxu0 0.0
        %3810 = vmatprep.subr.mxu0 0.0
        %3811 = vmatpush1.msra.mxu0 0.0
        %3812 = vmatprep.subr.mxu0 0.0
        %3813 = vmatpush1.msra.mxu0 0.0
        %3814 = vmatprep.subr.mxu0 0.0
        %3815 = vmatpush1.msra.mxu0 0.0
        %3816 = vmatprep.subr.mxu0 0.0
        %3817 = vmatpush1.msra.mxu0 0.0
        %3818 = vmatprep.subr.mxu0 0.0
        %3819 = vmatpush1.msra.mxu0 0.0
        %3820 = vmatprep.subr.mxu0 0.0
        %3821 = vmatpush1.msra.mxu0 0.0
        %3822 = vmatprep.subr.mxu0 0.0
        %3823 = vmatpush1.msra.mxu0 0.0
        %3824 = vmatprep.subr.mxu0 0.0
        %3825 = vmatpush1.msra.mxu0 0.0
        %3826 = vmatprep.subr.mxu0 0.0
        %3827 = vmatpush1.msra.mxu0 0.0
        %3828 = vmatprep.subr.mxu0 0.0
        %3829 = vmatpush1.msra.mxu0 0.0
        %3830 = vmatprep.subr.mxu0 0.0
        %3831 = vmatpush1.msra.mxu0 0.0
        %3832 = vmatprep.mubr.f32.mxu0 0.0
        %3833 = vmatmul.mubr.f32.gmra.mrb[0].mxu0 %v3766
        %v3834 = vpop.f32.mrb[0].mxu0
        %v3835 = vadd.f32 0.0, %v3834
        %v3836 = vpop.f32.mrb[0].mxu0
        %3837 = vdwg.mxu0
        %3838 = vrot.lane.b32.xlu0 %v3158, 40
        %v3839 = vpop.permute.xlu0 %3838
        %v3842 = vsel %vm332, %v3608, 0
        %3844 = vmatprep.subr.mxu0 0.0
        %3845 = vmatpush1.msra.mxu0 %v3839
        %3846 = vmatprep.subr.mxu0 0.0
        %3847 = vmatpush1.msra.mxu0 0.0
        %3848 = vmatprep.subr.mxu0 0.0
        %3849 = vmatpush1.msra.mxu0 0.0
        %3850 = vmatprep.subr.mxu0 0.0
        %3851 = vmatpush1.msra.mxu0 0.0
        %3852 = vmatprep.subr.mxu0 0.0
        %3853 = vmatpush1.msra.mxu0 0.0
        %3854 = vmatprep.subr.mxu0 0.0
        %3855 = vmatpush1.msra.mxu0 0.0
        %3856 = vmatprep.subr.mxu0 0.0
        %3857 = vmatpush1.msra.mxu0 0.0
        %3858 = vmatprep.subr.mxu0 0.0
        %3859 = vmatpush1.msra.mxu0 0.0
        %3860 = vmatprep.subr.mxu0 0.0
        %3861 = vmatpush1.msra.mxu0 0.0
        %3862 = vmatprep.subr.mxu0 0.0
        %3863 = vmatpush1.msra.mxu0 0.0
        %3864 = vmatprep.subr.mxu0 0.0
        %3865 = vmatpush1.msra.mxu0 0.0
        %3866 = vmatprep.subr.mxu0 0.0
        %3867 = vmatpush1.msra.mxu0 0.0
        %3868 = vmatprep.subr.mxu0 0.0
        %3869 = vmatpush1.msra.mxu0 0.0
        %3870 = vmatprep.subr.mxu0 0.0
        %3871 = vmatpush1.msra.mxu0 0.0
        %3872 = vmatprep.subr.mxu0 0.0
        %3873 = vmatpush1.msra.mxu0 0.0
        %3874 = vmatprep.subr.mxu0 0.0
        %3875 = vmatpush1.msra.mxu0 0.0
        %3876 = vmatprep.subr.mxu0 0.0
        %3877 = vmatpush1.msra.mxu0 0.0
        %3878 = vmatprep.subr.mxu0 0.0
        %3879 = vmatpush1.msra.mxu0 0.0
        %3880 = vmatprep.subr.mxu0 0.0
        %3881 = vmatpush1.msra.mxu0 0.0
        %3882 = vmatprep.subr.mxu0 0.0
        %3883 = vmatpush1.msra.mxu0 0.0
        %3884 = vmatprep.subr.mxu0 0.0
        %3885 = vmatpush1.msra.mxu0 0.0
        %3886 = vmatprep.subr.mxu0 0.0
        %3887 = vmatpush1.msra.mxu0 0.0
        %3888 = vmatprep.subr.mxu0 0.0
        %3889 = vmatpush1.msra.mxu0 0.0
        %3890 = vmatprep.subr.mxu0 0.0
        %3891 = vmatpush1.msra.mxu0 0.0
        %3892 = vmatprep.subr.mxu0 0.0
        %3893 = vmatpush1.msra.mxu0 0.0
        %3894 = vmatprep.subr.mxu0 0.0
        %3895 = vmatpush1.msra.mxu0 0.0
        %3896 = vmatprep.subr.mxu0 0.0
        %3897 = vmatpush1.msra.mxu0 0.0
        %3898 = vmatprep.subr.mxu0 0.0
        %3899 = vmatpush1.msra.mxu0 0.0
        %3900 = vmatprep.subr.mxu0 0.0
        %3901 = vmatpush1.msra.mxu0 0.0
        %3902 = vmatprep.subr.mxu0 0.0
        %3903 = vmatpush1.msra.mxu0 0.0
        %3904 = vmatprep.subr.mxu0 0.0
        %3905 = vmatpush1.msra.mxu0 0.0
        %3906 = vmatprep.subr.mxu0 0.0
        %3907 = vmatpush1.msra.mxu0 0.0
        %3908 = vmatprep.mubr.f32.mxu0 0.0
        %3909 = vmatmul.mubr.f32.gmra.mrb[0].mxu0 %v3842
        %v3910 = vpop.f32.mrb[0].mxu0
        %v3911 = vadd.f32 0.0, %v3910
        %v3912 = vpop.f32.mrb[0].mxu0
        %3913 = vdwg.mxu0
        %3914 = vrot.lane.b32.xlu0 %v3159, 40
        %v3915 = vpop.permute.xlu0 %3914
        %v3918 = vsel %vm332, %v3609, 0
        %3920 = vmatprep.subr.mxu0 0.0
        %3921 = vmatpush1.msra.mxu0 %v3915
        %3922 = vmatprep.subr.mxu0 0.0
        %3923 = vmatpush1.msra.mxu0 0.0
        %3924 = vmatprep.subr.mxu0 0.0
        %3925 = vmatpush1.msra.mxu0 0.0
        %3926 = vmatprep.subr.mxu0 0.0
        %3927 = vmatpush1.msra.mxu0 0.0
        %3928 = vmatprep.subr.mxu0 0.0
        %3929 = vmatpush1.msra.mxu0 0.0
        %3930 = vmatprep.subr.mxu0 0.0
        %3931 = vmatpush1.msra.mxu0 0.0
        %3932 = vmatprep.subr.mxu0 0.0
        %3933 = vmatpush1.msra.mxu0 0.0
        %3934 = vmatprep.subr.mxu0 0.0
        %3935 = vmatpush1.msra.mxu0 0.0
        %3936 = vmatprep.subr.mxu0 0.0
        %3937 = vmatpush1.msra.mxu0 0.0
        %3938 = vmatprep.subr.mxu0 0.0
        %3939 = vmatpush1.msra.mxu0 0.0
        %3940 = vmatprep.subr.mxu0 0.0
        %3941 = vmatpush1.msra.mxu0 0.0
        %3942 = vmatprep.subr.mxu0 0.0
        %3943 = vmatpush1.msra.mxu0 0.0
        %3944 = vmatprep.subr.mxu0 0.0
        %3945 = vmatpush1.msra.mxu0 0.0
        %3946 = vmatprep.subr.mxu0 0.0
        %3947 = vmatpush1.msra.mxu0 0.0
        %3948 = vmatprep.subr.mxu0 0.0
        %3949 = vmatpush1.msra.mxu0 0.0
        %3950 = vmatprep.subr.mxu0 0.0
        %3951 = vmatpush1.msra.mxu0 0.0
        %3952 = vmatprep.subr.mxu0 0.0
        %3953 = vmatpush1.msra.mxu0 0.0
        %3954 = vmatprep.subr.mxu0 0.0
        %3955 = vmatpush1.msra.mxu0 0.0
        %3956 = vmatprep.subr.mxu0 0.0
        %3957 = vmatpush1.msra.mxu0 0.0
        %3958 = vmatprep.subr.mxu0 0.0
        %3959 = vmatpush1.msra.mxu0 0.0
        %3960 = vmatprep.subr.mxu0 0.0
        %3961 = vmatpush1.msra.mxu0 0.0
        %3962 = vmatprep.subr.mxu0 0.0
        %3963 = vmatpush1.msra.mxu0 0.0
        %3964 = vmatprep.subr.mxu0 0.0
        %3965 = vmatpush1.msra.mxu0 0.0
        %3966 = vmatprep.subr.mxu0 0.0
        %3967 = vmatpush1.msra.mxu0 0.0
        %3968 = vmatprep.subr.mxu0 0.0
        %3969 = vmatpush1.msra.mxu0 0.0
        %3970 = vmatprep.subr.mxu0 0.0
        %3971 = vmatpush1.msra.mxu0 0.0
        %3972 = vmatprep.subr.mxu0 0.0
        %3973 = vmatpush1.msra.mxu0 0.0
        %3974 = vmatprep.subr.mxu0 0.0
        %3975 = vmatpush1.msra.mxu0 0.0
        %3976 = vmatprep.subr.mxu0 0.0
        %3977 = vmatpush1.msra.mxu0 0.0
        %3978 = vmatprep.subr.mxu0 0.0
        %3979 = vmatpush1.msra.mxu0 0.0
        %3980 = vmatprep.subr.mxu0 0.0
        %3981 = vmatpush1.msra.mxu0 0.0
        %3982 = vmatprep.subr.mxu0 0.0
        %3983 = vmatpush1.msra.mxu0 0.0
        %3984 = vmatprep.mubr.f32.mxu0 0.0
        %3985 = vmatmul.mubr.f32.gmra.mrb[0].mxu0 %v3918
        %v3986 = vpop.f32.mrb[0].mxu0
        %v3987 = vadd.f32 0.0, %v3986
        %v3988 = vpop.f32.mrb[0].mxu0
        %3989 = vdwg.mxu0
        %s3990 = scalar_lea.vmem %s2, 24
        %v3991 = vld [vmem:[%s3990] sm:$0xff]
        %v3993 = vsel %vm332, %v3683, 0
        %v3996 = vsel %vm332, %v3759, 0
        %v3999 = vsel %vm332, %v3835, 0
        %v4002 = vsel %vm332, %v3911, 0
        %v4005 = vsel %vm332, %v3987, 0
        %4007 = vmatprep.subr.mxu0 0.0
        %4008 = vmatpush1.msra.mxu0 %v3991
        %4009 = vmatprep.subr.mxu0 0.0
        %4010 = vmatpush1.msra.mxu0 0.0
        %4011 = vmatprep.subr.mxu0 0.0
        %4012 = vmatpush1.msra.mxu0 0.0
        %4013 = vmatprep.subr.mxu0 0.0
        %4014 = vmatpush1.msra.mxu0 0.0
        %4015 = vmatprep.subr.mxu0 0.0
        %4016 = vmatpush1.msra.mxu0 0.0
        %4017 = vmatprep.subr.mxu0 0.0
        %4018 = vmatpush1.msra.mxu0 0.0
        %4019 = vmatprep.subr.mxu0 0.0
        %4020 = vmatpush1.msra.mxu0 0.0
        %4021 = vmatprep.subr.mxu0 0.0
        %4022 = vmatpush1.msra.mxu0 0.0
        %4023 = vmatprep.subr.mxu0 0.0
        %4024 = vmatpush1.msra.mxu0 0.0
        %4025 = vmatprep.subr.mxu0 0.0
        %4026 = vmatpush1.msra.mxu0 0.0
        %4027 = vmatprep.subr.mxu0 0.0
        %4028 = vmatpush1.msra.mxu0 0.0
        %4029 = vmatprep.subr.mxu0 0.0
        %4030 = vmatpush1.msra.mxu0 0.0
        %4031 = vmatprep.subr.mxu0 0.0
        %4032 = vmatpush1.msra.mxu0 0.0
        %4033 = vmatprep.subr.mxu0 0.0
        %4034 = vmatpush1.msra.mxu0 0.0
        %4035 = vmatprep.subr.mxu0 0.0
        %4036 = vmatpush1.msra.mxu0 0.0
        %4037 = vmatprep.subr.mxu0 0.0
        %4038 = vmatpush1.msra.mxu0 0.0
        %4039 = vmatprep.subr.mxu0 0.0
        %4040 = vmatpush1.msra.mxu0 0.0
        %4041 = vmatprep.subr.mxu0 0.0
        %4042 = vmatpush1.msra.mxu0 0.0
        %4043 = vmatprep.subr.mxu0 0.0
        %4044 = vmatpush1.msra.mxu0 0.0
        %4045 = vmatprep.subr.mxu0 0.0
        %4046 = vmatpush1.msra.mxu0 0.0
        %4047 = vmatprep.subr.mxu0 0.0
        %4048 = vmatpush1.msra.mxu0 0.0
        %4049 = vmatprep.subr.mxu0 0.0
        %4050 = vmatpush1.msra.mxu0 0.0
        %4051 = vmatprep.subr.mxu0 0.0
        %4052 = vmatpush1.msra.mxu0 0.0
        %4053 = vmatprep.subr.mxu0 0.0
        %4054 = vmatpush1.msra.mxu0 0.0
        %4055 = vmatprep.subr.mxu0 0.0
        %4056 = vmatpush1.msra.mxu0 0.0
        %4057 = vmatprep.subr.mxu0 0.0
        %4058 = vmatpush1.msra.mxu0 0.0
        %4059 = vmatprep.subr.mxu0 0.0
        %4060 = vmatpush1.msra.mxu0 0.0
        %4061 = vmatprep.subr.mxu0 0.0
        %4062 = vmatpush1.msra.mxu0 0.0
        %4063 = vmatprep.subr.mxu0 0.0
        %4064 = vmatpush1.msra.mxu0 0.0
        %4065 = vmatprep.subr.mxu0 0.0
        %4066 = vmatpush1.msra.mxu0 0.0
        %4067 = vmatprep.subr.mxu0 0.0
        %4068 = vmatpush1.msra.mxu0 0.0
        %4069 = vmatprep.subr.mxu0 0.0
        %4070 = vmatpush1.msra.mxu0 0.0
        %4071 = vmatprep.mubr.f32.mxu0 0.0
        %4072 = vmatmul.mubr.f32.gmra.mrb[0].mxu0 %v3993
        %v4073 = vpop.f32.mrb[0].mxu0
        %v4074 = vadd.f32 0.0, %v4073
        %v4075 = vpop.f32.mrb[0].mxu0
        %4076 = vmatprep.mubr.f32.mxu0 0.0
        %4077 = vmatmul.mubr.f32.gmra.mrb[0].mxu0 %v3996
        %v4078 = vpop.f32.mrb[0].mxu0
        %v4079 = vadd.f32 0.0, %v4078
        %v4080 = vpop.f32.mrb[0].mxu0
        %4081 = vmatprep.mubr.f32.mxu0 0.0
        %4082 = vmatmul.mubr.f32.gmra.mrb[0].mxu0 %v3999
        %v4083 = vpop.f32.mrb[0].mxu0
        %v4084 = vadd.f32 0.0, %v4083
        %v4085 = vpop.f32.mrb[0].mxu0
        %4086 = vmatprep.mubr.f32.mxu0 0.0
        %4087 = vmatmul.mubr.f32.gmra.mrb[0].mxu0 %v4002
        %v4088 = vpop.f32.mrb[0].mxu0
        %v4089 = vadd.f32 0.0, %v4088
        %v4090 = vpop.f32.mrb[0].mxu0
        %4091 = vmatprep.mubr.f32.mxu0 0.0
        %4092 = vmatmul.mubr.f32.gmra.mrb[0].mxu0 %v4005
        %v4093 = vpop.f32.mrb[0].mxu0
        %v4094 = vadd.f32 0.0, %v4093
        %v4095 = vpop.f32.mrb[0].mxu0
        %4096 = vdwg.mxu0
        %v4097 = vadd.f32 %v3150, %v4074
        %v4098 = vadd.f32 %v3151, %v4079
        %v4099 = vadd.f32 %v3152, %v4084
        %v4100 = vadd.f32 %v3153, %v4089
        %v4101 = vadd.f32 %v3154, %v4094
        %4102 = vst.msk [vmem:[%s190] sm:$0xff] %vm205, %v4097
        %4103 = vst.msk [vmem:[%s190 + $0x8] sm:$0xff] %vm205, %v4098
        %4104 = vst.msk [vmem:[%s190 + $0x10] sm:$0xff] %vm205, %v4099
        %4105 = vst.msk [vmem:[%s190 + $0x18] sm:$0xff] %vm205, %v4100
        %4106 = vst.msk [vmem:[%s190 + $0x20] sm:$0xff] %vm205, %v4101
        %s4107 = sand.u32 %s115, 1
        %s4108 = scalar_lea.sflag [#allocation4], %s4107
        %s4109 = sand.u32 %s115, 1
        %s4110 = smul.addr %s4109, 40
        %s4111 = scalar_lea.vmem [#allocation3], %s4110
        // Predicated region
        $region37: #{t_multihead_attention.1} parent=35 // pred_check
          %p4112 = pneg %p125
        $region38: #{t_multihead_attention.1} parent=35 // pred_check_branch
          %4114 = sbr.rel (%p4112) target = $region40
        $region39: #{t_multihead_attention.1} parent=35 // pred_region
          %s4116 = ssub.s32 640, 640
          %4117 = vsyncadd %s4108, %s4116
          %s4118 = smul.addr %s18, 5
          %s4119 = smul.addr %s4118, 128
          %s4120 = scalar_lea.hbm %s4, %s4119
          %s4121 = sshll.u32 %s4111, 4
          %s4122 = int_to_ptr.vmem [resolvable:$true] %s4121
          %4127 = dma.vmem_to_hbm [thread:$0]  %s4122, 640, %s4120, %s4108, 128, 128, 8
        $region40: #{t_multihead_attention.1} parent=35 // pred_fallthru
          _
      $region36: #{t_multihead_attention.1} parent=5 // pred_fallthru
        _
      %p4128 = scmp.le.s32.totalorder 2, %s13
      // Predicated region
      $region41: #{t_multihead_attention.1} parent=5 // pred_check
        %p4129 = pneg %p4128
      $region42: #{t_multihead_attention.1} parent=5 // pred_check_branch
        %4131 = sbr.rel (%p4129) target = $region44
      $region43: #{t_multihead_attention.1} parent=5 // pred_region
        %s4132 = ssub.s32 %s13, 2
        // Predicated region
        $region45: #{t_multihead_attention.1} parent=43 // pred_check
          %p4133 = pneg %p131
        $region46: #{t_multihead_attention.1} parent=43 // pred_check_branch
          %4135 = sbr.rel (%p4133) target = $region48
        $region47: #{t_multihead_attention.1} parent=43 // pred_region
          %s4136 = sand.u32 %s116, 1
          %s4137 = scalar_lea.sflag [#allocation4], %s4136
          %s4138 = sand.u32 %s116, 1
          %s4139 = smul.addr %s4138, 40
          %s4140 = scalar_lea.vmem [#allocation3], %s4139
          %4141 = dma.done %s4137, 640
        $region48: #{t_multihead_attention.1} parent=43 // pred_fallthru
          _
      $region44: #{t_multihead_attention.1} parent=5 // pred_fallthru
        _
    $region6: #{t_multihead_attention.1} parent=1 // loop_footer
      %s17 = sadd.s32 1, %s13
    $region7: #{t_multihead_attention.1} parent=1 // loop_footer_branch
      %12 = sbr.rel target = $region3
    $region8: #{t_multihead_attention.1} parent=1 // loop_exit
      _
    %4142 = vsyncpa [#allocation4], 1
    %s4143 = scalar_lea.sflag [#allocation4], 1
    %4144 = vsyncpa %s4143, 1

</llo_original>
